<compile_context>
chip_gen: v7x
topology: tpu7x:2x2x1
jax: 0.10.0
libtpu: 0.0.40
codegen_flags: <defaults>
</compile_context>

<pallas_src>
import functools

import jax
import jax.numpy as jnp
from jax import lax
from jax.experimental import pallas as pl
from jax.experimental.pallas import tpu as pltpu


def _roll_lanes(a, delta):
    """out[..., i] = a[..., (i + delta) mod N] for a static integer delta.

    pltpu.roll follows jnp.roll semantics (positive shift moves elements to
    higher indices), so shifting the *read* index by +delta is a roll by
    -delta; normalise to a non-negative amount.
    """
    n = a.shape[-1]
    shift = (-delta) % n
    if shift == 0:
        return a
    return pltpu.roll(a, shift, axis=a.ndim - 1)


# ----------------------------------------------------------------------------
# Fused kernel: CA_Block + SA_Block + 7x7x7 Conv3d prediction, one batch per
# grid step.  x is the channel-major flattened volume (C, N), N = H*W*L on the
# lane axis.
# ----------------------------------------------------------------------------
def _identify_kernel(scl_ref, x_ref, wqkv_ref, wconv_ref, masks_ref,
                     o_sa_ref, o_pred_ref, *, cq, size_w, size_l, q_chunk):
    g_ca = scl_ref[0]          # CA gamma        (SMEM scalar)
    g_sa = scl_ref[1]          # SA gamma        (SMEM scalar)
    b_conv = scl_ref[2]        # prediction bias (SMEM scalar)

    x = x_ref[0]                                              # (C, N) f32
    C = x.shape[0]
    N = x.shape[1]

    # ---- CA_Block: channel attention, deferred softmax normalisation -------
    e_c = jnp.einsum('cn,dn->cd', x, x,
                     preferred_element_type=jnp.float32)      # (C, C)
    e_c = jnp.exp(e_c - jnp.max(e_c, axis=-1, keepdims=True))
    num_c = jnp.dot(e_c, x, preferred_element_type=jnp.float32)   # (C, N)
    inv_c = pl.reciprocal(jnp.sum(e_c, axis=-1, keepdims=True), approx=True)
    y = g_ca * (num_c * inv_c) + x                            # (C, N)

    # ---- SA_Block 1x1x1 convs: q, k, v from ONE matmul (biases folded) -----
    ones_row = jnp.ones((1, N), jnp.float32)
    y_aug = jnp.concatenate([y, ones_row], axis=0)            # (C+1, N)
    qkv = jnp.dot(wqkv_ref[...], y_aug,
                  preferred_element_type=jnp.float32)         # (2*Cq+C, N)
    q_t = qkv[:cq].T                                          # (N, Cq) tiny slab
    k = qkv[cq:2 * cq]                                        # (Cq, N)
    # ones-row appended to V so the softmax denominator comes out of the same
    # MXU matmul as the PV product.  Transposed ONCE per batch so every chunk
    # PV matmul is MXU-native (no per-chunk (q_chunk, N) transpose).
    v_aug_t = jnp.concatenate([qkv[2 * cq:], ones_row], axis=0).T   # (N, C+1)

    # ---- SA_Block spatial attention, tiled over query chunks ---------------
    # Each chunk is stored straight into the output ref (lane-dense slices);
    # the conv stage re-reads the assembled (C, N) slab from that VMEM buffer.
    lo = 0
    while lo < N:
        sz = min(q_chunk, N - lo)
        s = jnp.dot(q_t[lo:lo + sz], k,
                    preferred_element_type=jnp.float32)       # (sz, N)
        e_s = jnp.exp(s - jnp.max(s, axis=-1, keepdims=True))
        pv = jnp.dot(e_s, v_aug_t,
                     preferred_element_type=jnp.float32)      # (sz, C+1)
        inv_s = pl.reciprocal(pv[:, C:C + 1], approx=True)    # (sz, 1) denominators
        o_sa_ref[0, :, lo:lo + sz] = (
            (g_sa * (pv[:, :C] * inv_s)).T + y[:, lo:lo + sz])
        lo += sz

    sa = o_sa_ref[0]                                          # (C, N) re-read

    # ---- map_prediction: 7x7x7 Conv3d(C -> 1, pad 3), fused ----------------
    # Precomputed separable boundary masks (constant across the batch grid):
    #   rows 0..6  : l-masks (dw = -3..3)
    #   rows 7..13 : w-masks (dh = -3..3)
    #   rows 14..20: h-masks (dd = -3..3)
    lmasks = masks_ref[0:7, :]
    wmasks = masks_ref[7:14, :]
    hmasks = masks_ref[14:21, :]

    # Stage 0: (c, kw) contraction on the MXU over 7 l-shifted/masked copies.
    taps = []
    for t in range(7):                       # dw = t - 3
        taps.append(_roll_lanes(sa, t - 3) * lmasks[t:t + 1])
    tap_stack = jnp.concatenate(taps, axis=0)                 # (7*C, N)
    # wconv rows are ordered r = kh*7 + kd so each dh group is contiguous.
    tap_dot = jnp.dot(wconv_ref[...], tap_stack,
                      preferred_element_type=jnp.float32)     # (49, N)

    # Stage 1 (dh): 7 contiguous (7, N) slab rolls, w-masked, summed.
    # Valid because a shift by a multiple of W*L preserves the w index.
    t_acc = jnp.zeros((7, N), jnp.float32)                    # row i <-> dd=i-3
    for j in range(7):                       # dh = j - 3
        blk = _roll_lanes(tap_dot[7 * j:7 * (j + 1)], (j - 3) * size_l)
        t_acc = t_acc + blk * wmasks[j:j + 1]

    # Stage 2 (dd): 7 row rolls, h-masked, accumulated.
    acc = jnp.zeros((1, N), jnp.float32)
    for i in range(7):                       # dd = i - 3
        row = _roll_lanes(t_acc[i:i + 1], (i - 3) * size_w * size_l)
        acc = acc + row * hmasks[i:i + 1]

    o_pred_ref[0] = acc + b_conv


def run_identify(scalars, x_flat, w_qkv, w_conv, masks, *, cq, size_w, size_l,
                 q_chunk, vmem_limit_bytes):
    B, C, N = x_flat.shape
    kernel = functools.partial(
        _identify_kernel, cq=cq, size_w=size_w, size_l=size_l, q_chunk=q_chunk)
    return pl.pallas_call(
        kernel,
        grid=(B,),
        in_specs=[
            # tiny scalars (gamma_ca, gamma_sa, conv bias) live in SMEM
            pl.BlockSpec(memory_space=pltpu.MemorySpace.SMEM),
            pl.BlockSpec((1, C, N), lambda b: (b, 0, 0)),
            pl.BlockSpec(w_qkv.shape, lambda b: (0, 0)),
            pl.BlockSpec(w_conv.shape, lambda b: (0, 0)),
            pl.BlockSpec(masks.shape, lambda b: (0, 0)),
        ],
        out_specs=[
            pl.BlockSpec((1, C, N), lambda b: (b, 0, 0)),
            pl.BlockSpec((1, 1, N), lambda b: (b, 0, 0)),
        ],
        out_shape=[
            jax.ShapeDtypeStruct((B, C, N), jnp.float32),
            jax.ShapeDtypeStruct((B, 1, N), jnp.float32),
        ],
        compiler_params=pltpu.CompilerParams(
            dimension_semantics=("parallel",),
            vmem_limit_bytes=vmem_limit_bytes),
    )(scalars, x_flat, w_qkv, w_conv, masks)


def _vmem_budget(C, N, cq, q_chunk):
    """Rough f32 working-set estimate; clamp to [32 MiB, 48 MiB] (v7x-safe)."""
    io_blocks = 2 * (2 * C * N + N)                       # double-buffered blocks
    consts = 2 * ((2 * cq + C) * (C + 1) + 49 * 7 * C + 21 * N)
    live = (2 * q_chunk * N + 7 * C * N + 49 * N + 8 * N
            + 4 * C * N + (2 * cq + C + 2) * N)
    est = 4 * (io_blocks + consts + live)
    return int(min(max(4 * est, 32 << 20), 48 << 20))


# ----------------------------------------------------------------------------
# JAX glue
# ----------------------------------------------------------------------------
@jax.jit
def identify_forward(x, params):
    wq, bq = params['wq'], params['bq']
    wk, bk = params['wk'], params['bk']
    wv, bv = params['wv'], params['bv']
    g_ca, g_sa = params['g_ca'], params['g_sa']
    wp, bp = params['wp'], params['bp']

    B, C, H, W, L = x.shape
    N = H * W * L
    Cq = wq.shape[0]

    x_flat = x.reshape(B, C, N).astype(jnp.float32)

    # q/k/v 1x1x1-conv weights stacked, biases folded in as an extra input
    # column (the kernel appends a ones-row to the activation slab).
    w_qkv = jnp.concatenate([
        jnp.concatenate([wq, bq[:, None]], axis=1),
        jnp.concatenate([wk, bk[:, None]], axis=1),
        jnp.concatenate([wv, bv[:, None]], axis=1),
    ], axis=0).astype(jnp.float32)                          # (2*Cq + C, C + 1)

    # 7x7x7 conv weights rearranged to (kh*7+kd, kw*C+c): the in-kernel matmul
    # covers the full (c, kw) contraction; rows are grouped by kh (=dh) so the
    # kernel can roll contiguous (7, N) dd-blocks per dh.
    w_conv = jnp.transpose(wp[0], (2, 1, 3, 0)).reshape(49, 7 * C)
    w_conv = w_conv.astype(jnp.float32)

    scalars = jnp.stack([g_ca[0], g_sa[0], bp[0]]).astype(jnp.float32)

    # Separable zero-padding boundary masks, hoisted out of the kernel and
    # constant across the batch grid: (21, N) = [7 l-masks, 7 w-masks, 7 h-masks].
    idx = jnp.arange(N)
    l_i = idx % L
    w_i = (idx // L) % W
    h_i = idx // (W * L)
    offs = jnp.arange(-3, 4)[:, None]
    lmask = (l_i[None] + offs >= 0) & (l_i[None] + offs < L)
    wmask = (w_i[None] + offs >= 0) & (w_i[None] + offs < W)
    hmask = (h_i[None] + offs >= 0) & (h_i[None] + offs < H)
    masks = jnp.concatenate([lmask, wmask, hmask], axis=0).astype(jnp.float32)

    # Query-chunk size: always capped (never a full (N, N) logits slab) and
    # VMEM-budget-aware (two live (q_chunk, N) f32 slabs <= ~16 MiB).
    rows_budget = max(8, (((16 << 20) // (8 * N)) // 8) * 8)
    q_chunk = int(min(N, 256, rows_budget))

    sa_flat, pred_flat = run_identify(
        scalars, x_flat, w_qkv, w_conv, masks, cq=Cq,
        size_w=W, size_l=L, q_chunk=q_chunk,
        vmem_limit_bytes=_vmem_budget(C, N, Cq, q_chunk))

    return (sa_flat.reshape(B, C, H, W, L),
            pred_flat.reshape(B, 1, H, W, L))


# ----------------------------------------------------------------------------
# Pure-JAX reference (mirrors the PyTorch module exactly)
# ----------------------------------------------------------------------------
def reference_forward(x, params):
    hp = lax.Precision.HIGHEST
    wq, bq, wk, bk = params['wq'], params['bq'], params['wk'], params['bk']
    wv, bv = params['wv'], params['bv']
    g_ca, g_sa = params['g_ca'], params['g_sa']
    wp, bp = params['wp'], params['bp']

    B, C, H, W, L = x.shape
    N = H * W * L
    xf = x.reshape(B, C, N)
    # CA_Block
    energy = jnp.einsum('bcn,bdn->bcd', xf, xf, precision=hp)
    att = jax.nn.softmax(energy, axis=-1)
    y = g_ca[0] * jnp.einsum('bcd,bdn->bcn', att, xf, precision=hp) + xf
    # SA_Block
    q = jnp.einsum('qc,bcn->bqn', wq, y, precision=hp) + bq[None, :, None]
    k = jnp.einsum('qc,bcn->bqn', wk, y, precision=hp) + bk[None, :, None]
    v = jnp.einsum('dc,bcn->bdn', wv, y, precision=hp) + bv[None, :, None]
    e_s = jnp.einsum('bqi,bqj->bij', q, k, precision=hp)
    a_s = jax.nn.softmax(e_s, axis=-1)
    out = jnp.einsum('bcj,bij->bci', v, a_s, precision=hp)
    sa = (g_sa[0] * out + y).reshape(B, C, H, W, L)
    # map_prediction: Conv3d(C, 1, kernel 7, stride 1, padding 3)
    pred = lax.conv_general_dilated(
        sa, wp, window_strides=(1, 1, 1), padding=[(3, 3)] * 3,
        dimension_numbers=('NCDHW', 'OIDHW', 'NCDHW'), precision=hp)
    pred = pred + bp.reshape(1, 1, 1, 1, 1)
    return sa, pred


if __name__ == "__main__":
    B, C, H, W, L = 2, 16, 8, 8, 8           # channel=16 -> C//8 = 2 q/k channels
    Cq = C // 8
    key = jax.random.PRNGKey(0)
    kx, k1, k2, k3, k4, k5, k6, k7, k8 = jax.random.split(key, 9)

    x = jax.random.normal(kx, (B, C, H, W, L), jnp.float32)
    params = dict(
        wq=0.1 * jax.random.normal(k1, (Cq, C), jnp.float32),   # query_conv 1x1x1
        bq=0.1 * jax.random.normal(k2, (Cq,), jnp.float32),
        wk=0.1 * jax.random.normal(k3, (Cq, C), jnp.float32),   # key_conv 1x1x1
        bk=0.1 * jax.random.normal(k4, (Cq,), jnp.float32),
        wv=0.1 * jax.random.normal(k5, (C, C), jnp.float32),    # value_conv 1x1x1
        bv=0.1 * jax.random.normal(k6, (C,), jnp.float32),
        g_ca=jnp.ones((1,), jnp.float32),                       # torch.ones(1)
        g_sa=jnp.ones((1,), jnp.float32),                       # torch.ones(1)
        wp=0.05 * jax.random.normal(k7, (1, C, 7, 7, 7), jnp.float32),  # map_prediction
        bp=0.05 * jax.random.normal(k8, (1,), jnp.float32),
    )

    spatial_attention, prediction = identify_forward(x, params)
    jax.block_until_ready((spatial_attention, prediction))

    sa_ref, pred_ref = reference_forward(x, params)
    assert spatial_attention.shape == (B, C, H, W, L)
    assert prediction.shape == (B, 1, H, W, L)
    err_sa = float(jnp.max(jnp.abs(spatial_attention - sa_ref)))
    err_pred = float(jnp.max(jnp.abs(prediction - pred_ref)))
    # prediction magnitudes are ~5x the attention output -> scaled abs tolerance
    assert err_sa < 2e-2 and err_pred < 5e-2, (err_sa, err_pred)
    print("KERNEL_OK")
</pallas_src>

<mosaic_0001>
module attributes {stable_mosaic.version = 11 : i64} {
  func.func @_identify_kernel(%arg0: i32, %arg1: memref<3xf32, #tpu.memory_space<smem>>, %arg2: memref<1x16x512xf32, #tpu.memory_space<vmem>>, %arg3: memref<20x17xf32, #tpu.memory_space<vmem>>, %arg4: memref<49x112xf32, #tpu.memory_space<vmem>>, %arg5: memref<21x512xf32, #tpu.memory_space<vmem>>, %arg6: memref<1x16x512xf32, #tpu.memory_space<vmem>>, %arg7: memref<1x1x512xf32, #tpu.memory_space<vmem>>) attributes {dimension_semantics = [#tpu.dimension_semantics<parallel>], iteration_bounds = array<i64: 2>, scalar_prefetch = 0 : i64, scratch_operands = 0 : i64, tpu.core_type = #tpu.core_type<tc>, window_params = [{transform_indices = @transform_0, window_bounds = array<i64: 3>}, {transform_indices = @transform_1, window_bounds = array<i64: 1, 16, 512>}, {pipeline_mode = #tpu.pipeline_mode<synchronous>, transform_indices = @transform_2, window_bounds = array<i64: 20, 17>}, {pipeline_mode = #tpu.pipeline_mode<synchronous>, transform_indices = @transform_3, window_bounds = array<i64: 49, 112>}, {pipeline_mode = #tpu.pipeline_mode<synchronous>, transform_indices = @transform_4, window_bounds = array<i64: 21, 512>}, {transform_indices = @transform_5, window_bounds = array<i64: 1, 16, 512>}, {transform_indices = @transform_6, window_bounds = array<i64: 1, 1, 512>}]} {
    %c0 = arith.constant 0 : index
    %0 = memref.load %arg1[%c0] : memref<3xf32, #tpu.memory_space<smem>>
    %c1 = arith.constant 1 : index
    %1 = memref.load %arg1[%c1] : memref<3xf32, #tpu.memory_space<smem>>
    %c2 = arith.constant 2 : index
    %2 = memref.load %arg1[%c2] : memref<3xf32, #tpu.memory_space<smem>>
    %c0_0 = arith.constant 0 : index
    %c0_1 = arith.constant 0 : index
    %c0_2 = arith.constant 0 : index
    %3 = vector.load %arg2[%c0_0, %c0_1, %c0_2] : memref<1x16x512xf32, #tpu.memory_space<vmem>>, vector<1x16x512xf32>
    %4 = vector.shape_cast %3 : vector<1x16x512xf32> to vector<16x512xf32>
    "tpu.trace_start"() <{level = 10 : i32, message = "cn,dn->cd"}> : () -> ()
    %cst = arith.constant dense<0.000000e+00> : vector<16x16xf32>
    %5 = tpu.matmul %4, %4, %cst {dimension_numbers = #tpu.dot_dimension_numbers<[1], [1], [0], [0], [0, 0, 1, 0], [], []>} : vector<16x512xf32>, vector<16x512xf32>, vector<16x16xf32> -> vector<16x16xf32>
    "tpu.trace_stop"() : () -> ()
    %cst_3 = arith.constant dense<0xFF800000> : vector<16xf32>
    %6 = vector.multi_reduction <maximumf>, %5, %cst_3 [1] : vector<16x16xf32> to vector<16xf32>
    %7 = vector.shape_cast %6 : vector<16xf32> to vector<16x1xf32>
    %8 = vector.broadcast %7 : vector<16x1xf32> to vector<16x16xf32>
    %9 = arith.subf %5, %8 : vector<16x16xf32>
    %10 = math.exp %9 : vector<16x16xf32>
    %cst_4 = arith.constant dense<0.000000e+00> : vector<16x512xf32>
    %11 = tpu.matmul %10, %4, %cst_4 {dimension_numbers = #tpu.dot_dimension_numbers<[1], [0], [0], [1], [0, 0, 1, 1], [], []>} : vector<16x16xf32>, vector<16x512xf32>, vector<16x512xf32> -> vector<16x512xf32>
    %cst_5 = arith.constant dense<0.000000e+00> : vector<16xf32>
    %12 = vector.multi_reduction <add>, %10, %cst_5 [1] : vector<16x16xf32> to vector<16xf32>
    %13 = vector.shape_cast %12 : vector<16xf32> to vector<16x1xf32>
    %14 = tpu.reciprocal %13 {approx = true} : vector<16x1xf32> -> vector<16x1xf32>
    %15 = vector.broadcast %14 : vector<16x1xf32> to vector<16x512xf32>
    %16 = arith.mulf %11, %15 : vector<16x512xf32>
    %17 = vector.broadcast %0 : f32 to vector<16x512xf32>
    %18 = arith.mulf %17, %16 : vector<16x512xf32>
    %19 = arith.addf %18, %4 : vector<16x512xf32>
    %cst_6 = arith.constant 1.000000e+00 : f32
    %20 = vector.broadcast %cst_6 : f32 to vector<1x512xf32>
    %21 = tpu.concatenate %19, %20 in 0 : vector<16x512xf32>, vector<1x512xf32> -> vector<17x512xf32>
    %c0_7 = arith.constant 0 : index
    %c0_8 = arith.constant 0 : index
    %22 = vector.load %arg3[%c0_7, %c0_8] : memref<20x17xf32, #tpu.memory_space<vmem>>, vector<20x17xf32>
    %cst_9 = arith.constant dense<0.000000e+00> : vector<20x512xf32>
    %23 = tpu.matmul %22, %21, %cst_9 {dimension_numbers = #tpu.dot_dimension_numbers<[1], [0], [0], [1], [0, 0, 1, 1], [], []>} : vector<20x17xf32>, vector<17x512xf32>, vector<20x512xf32> -> vector<20x512xf32>
    %24 = vector.extract_strided_slice %23 {offsets = [0, 0], sizes = [2, 512], strides = [1, 1]} : vector<20x512xf32> to vector<2x512xf32>
    %25 = tpu.transpose %24, [1, 0] : vector<2x512xf32> -> vector<512x2xf32>
    %26 = vector.extract_strided_slice %23 {offsets = [2, 0], sizes = [2, 512], strides = [1, 1]} : vector<20x512xf32> to vector<2x512xf32>
    %27 = vector.extract_strided_slice %23 {offsets = [4, 0], sizes = [16, 512], strides = [1, 1]} : vector<20x512xf32> to vector<16x512xf32>
    %28 = tpu.concatenate %27, %20 in 0 : vector<16x512xf32>, vector<1x512xf32> -> vector<17x512xf32>
    %29 = tpu.transpose %28, [1, 0] : vector<17x512xf32> -> vector<512x17xf32>
    %30 = vector.extract_strided_slice %25 {offsets = [0, 0], sizes = [256, 2], strides = [1, 1]} : vector<512x2xf32> to vector<256x2xf32>
    %cst_10 = arith.constant dense<0.000000e+00> : vector<256x512xf32>
    %31 = tpu.matmul %30, %26, %cst_10 {dimension_numbers = #tpu.dot_dimension_numbers<[1], [0], [0], [1], [0, 0, 1, 1], [], []>} : vector<256x2xf32>, vector<2x512xf32>, vector<256x512xf32> -> vector<256x512xf32>
    %cst_11 = arith.constant dense<0xFF800000> : vector<256xf32>
    %32 = vector.multi_reduction <maximumf>, %31, %cst_11 [1] : vector<256x512xf32> to vector<256xf32>
    %33 = vector.shape_cast %32 : vector<256xf32> to vector<256x1xf32>
    %34 = vector.broadcast %33 : vector<256x1xf32> to vector<256x512xf32>
    %35 = arith.subf %31, %34 : vector<256x512xf32>
    %36 = math.exp %35 : vector<256x512xf32>
    %cst_12 = arith.constant dense<0.000000e+00> : vector<256x17xf32>
    %37 = tpu.matmul %36, %29, %cst_12 {dimension_numbers = #tpu.dot_dimension_numbers<[1], [0], [0], [1], [0, 0, 1, 1], [], []>} : vector<256x512xf32>, vector<512x17xf32>, vector<256x17xf32> -> vector<256x17xf32>
    %38 = vector.extract_strided_slice %37 {offsets = [0, 16], sizes = [256, 1], strides = [1, 1]} : vector<256x17xf32> to vector<256x1xf32>
    %39 = tpu.reciprocal %38 {approx = true} : vector<256x1xf32> -> vector<256x1xf32>
    %40 = vector.extract_strided_slice %37 {offsets = [0, 0], sizes = [256, 16], strides = [1, 1]} : vector<256x17xf32> to vector<256x16xf32>
    %41 = vector.broadcast %39 : vector<256x1xf32> to vector<256x16xf32>
    %42 = arith.mulf %40, %41 : vector<256x16xf32>
    %43 = vector.broadcast %1 : f32 to vector<256x16xf32>
    %44 = arith.mulf %43, %42 : vector<256x16xf32>
    %45 = tpu.transpose %44, [1, 0] : vector<256x16xf32> -> vector<16x256xf32>
    %46 = vector.extract_strided_slice %19 {offsets = [0, 0], sizes = [16, 256], strides = [1, 1]} : vector<16x512xf32> to vector<16x256xf32>
    %47 = arith.addf %45, %46 : vector<16x256xf32>
    %c0_13 = arith.constant 0 : index
    %c0_14 = arith.constant 0 : index
    %c0_15 = arith.constant 0 : index
    %48 = vector.load %arg6[%c0_13, %c0_14, %c0_15] : memref<1x16x512xf32, #tpu.memory_space<vmem>>, vector<1x16x256xf32>
    %49 = vector.shape_cast %48 : vector<1x16x256xf32> to vector<16x256xf32>
    %50 = vector.shape_cast %47 : vector<16x256xf32> to vector<1x16x256xf32>
    tpu.vector_store %arg6[%c0_13, %c0_14, %c0_15], %50 {strides = array<i32>} : memref<1x16x512xf32, #tpu.memory_space<vmem>>, vector<1x16x256xf32>,
    %51 = vector.extract_strided_slice %25 {offsets = [256, 0], sizes = [256, 2], strides = [1, 1]} : vector<512x2xf32> to vector<256x2xf32>
    %cst_16 = arith.constant dense<0.000000e+00> : vector<256x512xf32>
    %52 = tpu.matmul %51, %26, %cst_16 {dimension_numbers = #tpu.dot_dimension_numbers<[1], [0], [0], [1], [0, 0, 1, 1], [], []>} : vector<256x2xf32>, vector<2x512xf32>, vector<256x512xf32> -> vector<256x512xf32>
    %cst_17 = arith.constant dense<0xFF800000> : vector<256xf32>
    %53 = vector.multi_reduction <maximumf>, %52, %cst_17 [1] : vector<256x512xf32> to vector<256xf32>
    %54 = vector.shape_cast %53 : vector<256xf32> to vector<256x1xf32>
    %55 = vector.broadcast %54 : vector<256x1xf32> to vector<256x512xf32>
    %56 = arith.subf %52, %55 : vector<256x512xf32>
    %57 = math.exp %56 : vector<256x512xf32>
    %cst_18 = arith.constant dense<0.000000e+00> : vector<256x17xf32>
    %58 = tpu.matmul %57, %29, %cst_18 {dimension_numbers = #tpu.dot_dimension_numbers<[1], [0], [0], [1], [0, 0, 1, 1], [], []>} : vector<256x512xf32>, vector<512x17xf32>, vector<256x17xf32> -> vector<256x17xf32>
    %59 = vector.extract_strided_slice %58 {offsets = [0, 16], sizes = [256, 1], strides = [1, 1]} : vector<256x17xf32> to vector<256x1xf32>
    %60 = tpu.reciprocal %59 {approx = true} : vector<256x1xf32> -> vector<256x1xf32>
    %61 = vector.extract_strided_slice %58 {offsets = [0, 0], sizes = [256, 16], strides = [1, 1]} : vector<256x17xf32> to vector<256x16xf32>
    %62 = vector.broadcast %60 : vector<256x1xf32> to vector<256x16xf32>
    %63 = arith.mulf %61, %62 : vector<256x16xf32>
    %64 = vector.broadcast %1 : f32 to vector<256x16xf32>
    %65 = arith.mulf %64, %63 : vector<256x16xf32>
    %66 = tpu.transpose %65, [1, 0] : vector<256x16xf32> -> vector<16x256xf32>
    %67 = vector.extract_strided_slice %19 {offsets = [0, 256], sizes = [16, 256], strides = [1, 1]} : vector<16x512xf32> to vector<16x256xf32>
    %68 = arith.addf %66, %67 : vector<16x256xf32>
    %c0_19 = arith.constant 0 : index
    %c0_20 = arith.constant 0 : index
    %c256 = arith.constant 256 : index
    %69 = vector.load %arg6[%c0_19, %c0_20, %c256] : memref<1x16x512xf32, #tpu.memory_space<vmem>>, vector<1x16x256xf32>
    %70 = vector.shape_cast %69 : vector<1x16x256xf32> to vector<16x256xf32>
    %71 = vector.shape_cast %68 : vector<16x256xf32> to vector<1x16x256xf32>
    tpu.vector_store %arg6[%c0_19, %c0_20, %c256], %71 {strides = array<i32>} : memref<1x16x512xf32, #tpu.memory_space<vmem>>, vector<1x16x256xf32>,
    %c0_21 = arith.constant 0 : index
    %c0_22 = arith.constant 0 : index
    %c0_23 = arith.constant 0 : index
    %72 = vector.load %arg6[%c0_21, %c0_22, %c0_23] : memref<1x16x512xf32, #tpu.memory_space<vmem>>, vector<1x16x512xf32>
    %73 = vector.shape_cast %72 : vector<1x16x512xf32> to vector<16x512xf32>
    %c0_24 = arith.constant 0 : index
    %c0_25 = arith.constant 0 : index
    %74 = vector.load %arg5[%c0_24, %c0_25] : memref<21x512xf32, #tpu.memory_space<vmem>>, vector<7x512xf32>
    %c7 = arith.constant 7 : index
    %c0_26 = arith.constant 0 : index
    %75 = vector.load %arg5[%c7, %c0_26] : memref<21x512xf32, #tpu.memory_space<vmem>>, vector<7x512xf32>
    %c14 = arith.constant 14 : index
    %c0_27 = arith.constant 0 : index
    %76 = vector.load %arg5[%c14, %c0_27] : memref<21x512xf32, #tpu.memory_space<vmem>>, vector<7x512xf32>
    %c3_i32 = arith.constant 3 : i32
    %77 = tpu.dynamic_rotate %73 by %c3_i32 dim 1 : vector<16x512xf32>, i32 -> vector<16x512xf32>
    %78 = vector.extract_strided_slice %74 {offsets = [0, 0], sizes = [1, 512], strides = [1, 1]} : vector<7x512xf32> to vector<1x512xf32>
    %79 = vector.broadcast %78 : vector<1x512xf32> to vector<16x512xf32>
    %80 = arith.mulf %77, %79 : vector<16x512xf32>
    %c2_i32 = arith.constant 2 : i32
    %81 = tpu.dynamic_rotate %73 by %c2_i32 dim 1 : vector<16x512xf32>, i32 -> vector<16x512xf32>
    %82 = vector.extract_strided_slice %74 {offsets = [1, 0], sizes = [1, 512], strides = [1, 1]} : vector<7x512xf32> to vector<1x512xf32>
    %83 = vector.broadcast %82 : vector<1x512xf32> to vector<16x512xf32>
    %84 = arith.mulf %81, %83 : vector<16x512xf32>
    %c1_i32 = arith.constant 1 : i32
    %85 = tpu.dynamic_rotate %73 by %c1_i32 dim 1 : vector<16x512xf32>, i32 -> vector<16x512xf32>
    %86 = vector.extract_strided_slice %74 {offsets = [2, 0], sizes = [1, 512], strides = [1, 1]} : vector<7x512xf32> to vector<1x512xf32>
    %87 = vector.broadcast %86 : vector<1x512xf32> to vector<16x512xf32>
    %88 = arith.mulf %85, %87 : vector<16x512xf32>
    %89 = vector.extract_strided_slice %74 {offsets = [3, 0], sizes = [1, 512], strides = [1, 1]} : vector<7x512xf32> to vector<1x512xf32>
    %90 = vector.broadcast %89 : vector<1x512xf32> to vector<16x512xf32>
    %91 = arith.mulf %73, %90 : vector<16x512xf32>
    %c511_i32 = arith.constant 511 : i32
    %92 = tpu.dynamic_rotate %73 by %c511_i32 dim 1 : vector<16x512xf32>, i32 -> vector<16x512xf32>
    %93 = vector.extract_strided_slice %74 {offsets = [4, 0], sizes = [1, 512], strides = [1, 1]} : vector<7x512xf32> to vector<1x512xf32>
    %94 = vector.broadcast %93 : vector<1x512xf32> to vector<16x512xf32>
    %95 = arith.mulf %92, %94 : vector<16x512xf32>
    %c510_i32 = arith.constant 510 : i32
    %96 = tpu.dynamic_rotate %73 by %c510_i32 dim 1 : vector<16x512xf32>, i32 -> vector<16x512xf32>
    %97 = vector.extract_strided_slice %74 {offsets = [5, 0], sizes = [1, 512], strides = [1, 1]} : vector<7x512xf32> to vector<1x512xf32>
    %98 = vector.broadcast %97 : vector<1x512xf32> to vector<16x512xf32>
    %99 = arith.mulf %96, %98 : vector<16x512xf32>
    %c509_i32 = arith.constant 509 : i32
    %100 = tpu.dynamic_rotate %73 by %c509_i32 dim 1 : vector<16x512xf32>, i32 -> vector<16x512xf32>
    %101 = vector.extract_strided_slice %74 {offsets = [6, 0], sizes = [1, 512], strides = [1, 1]} : vector<7x512xf32> to vector<1x512xf32>
    %102 = vector.broadcast %101 : vector<1x512xf32> to vector<16x512xf32>
    %103 = arith.mulf %100, %102 : vector<16x512xf32>
    %104 = tpu.concatenate %80, %84, %88, %91, %95, %99, %103 in 0 : vector<16x512xf32>, vector<16x512xf32>, vector<16x512xf32>, vector<16x512xf32>, vector<16x512xf32>, vector<16x512xf32>, vector<16x512xf32> -> vector<112x512xf32>
    %c0_28 = arith.constant 0 : index
    %c0_29 = arith.constant 0 : index
    %105 = vector.load %arg4[%c0_28, %c0_29] : memref<49x112xf32, #tpu.memory_space<vmem>>, vector<49x112xf32>
    %cst_30 = arith.constant dense<0.000000e+00> : vector<49x512xf32>
    %106 = tpu.matmul %105, %104, %cst_30 {dimension_numbers = #tpu.dot_dimension_numbers<[1], [0], [0], [1], [0, 0, 1, 1], [], []>} : vector<49x112xf32>, vector<112x512xf32>, vector<49x512xf32> -> vector<49x512xf32>
    %cst_31 = arith.constant 0.000000e+00 : f32
    %107 = vector.broadcast %cst_31 : f32 to vector<7x512xf32>
    %108 = vector.extract_strided_slice %106 {offsets = [0, 0], sizes = [7, 512], strides = [1, 1]} : vector<49x512xf32> to vector<7x512xf32>
    %c24_i32 = arith.constant 24 : i32
    %109 = tpu.dynamic_rotate %108 by %c24_i32 dim 1 : vector<7x512xf32>, i32 -> vector<7x512xf32>
    %110 = vector.extract_strided_slice %75 {offsets = [0, 0], sizes = [1, 512], strides = [1, 1]} : vector<7x512xf32> to vector<1x512xf32>
    %111 = vector.broadcast %110 : vector<1x512xf32> to vector<7x512xf32>
    %112 = arith.mulf %109, %111 : vector<7x512xf32>
    %113 = arith.addf %107, %112 : vector<7x512xf32>
    %114 = vector.extract_strided_slice %106 {offsets = [7, 0], sizes = [7, 512], strides = [1, 1]} : vector<49x512xf32> to vector<7x512xf32>
    %c16_i32 = arith.constant 16 : i32
    %115 = tpu.dynamic_rotate %114 by %c16_i32 dim 1 : vector<7x512xf32>, i32 -> vector<7x512xf32>
    %116 = vector.extract_strided_slice %75 {offsets = [1, 0], sizes = [1, 512], strides = [1, 1]} : vector<7x512xf32> to vector<1x512xf32>
    %117 = vector.broadcast %116 : vector<1x512xf32> to vector<7x512xf32>
    %118 = arith.mulf %115, %117 : vector<7x512xf32>
    %119 = arith.addf %113, %118 : vector<7x512xf32>
    %120 = vector.extract_strided_slice %106 {offsets = [14, 0], sizes = [7, 512], strides = [1, 1]} : vector<49x512xf32> to vector<7x512xf32>
    %c8_i32 = arith.constant 8 : i32
    %121 = tpu.dynamic_rotate %120 by %c8_i32 dim 1 : vector<7x512xf32>, i32 -> vector<7x512xf32>
    %122 = vector.extract_strided_slice %75 {offsets = [2, 0], sizes = [1, 512], strides = [1, 1]} : vector<7x512xf32> to vector<1x512xf32>
    %123 = vector.broadcast %122 : vector<1x512xf32> to vector<7x512xf32>
    %124 = arith.mulf %121, %123 : vector<7x512xf32>
    %125 = arith.addf %119, %124 : vector<7x512xf32>
    %126 = vector.extract_strided_slice %106 {offsets = [21, 0], sizes = [7, 512], strides = [1, 1]} : vector<49x512xf32> to vector<7x512xf32>
    %127 = vector.extract_strided_slice %75 {offsets = [3, 0], sizes = [1, 512], strides = [1, 1]} : vector<7x512xf32> to vector<1x512xf32>
    %128 = vector.broadcast %127 : vector<1x512xf32> to vector<7x512xf32>
    %129 = arith.mulf %126, %128 : vector<7x512xf32>
    %130 = arith.addf %125, %129 : vector<7x512xf32>
    %131 = vector.extract_strided_slice %106 {offsets = [28, 0], sizes = [7, 512], strides = [1, 1]} : vector<49x512xf32> to vector<7x512xf32>
    %c504_i32 = arith.constant 504 : i32
    %132 = tpu.dynamic_rotate %131 by %c504_i32 dim 1 : vector<7x512xf32>, i32 -> vector<7x512xf32>
    %133 = vector.extract_strided_slice %75 {offsets = [4, 0], sizes = [1, 512], strides = [1, 1]} : vector<7x512xf32> to vector<1x512xf32>
    %134 = vector.broadcast %133 : vector<1x512xf32> to vector<7x512xf32>
    %135 = arith.mulf %132, %134 : vector<7x512xf32>
    %136 = arith.addf %130, %135 : vector<7x512xf32>
    %137 = vector.extract_strided_slice %106 {offsets = [35, 0], sizes = [7, 512], strides = [1, 1]} : vector<49x512xf32> to vector<7x512xf32>
    %c496_i32 = arith.constant 496 : i32
    %138 = tpu.dynamic_rotate %137 by %c496_i32 dim 1 : vector<7x512xf32>, i32 -> vector<7x512xf32>
    %139 = vector.extract_strided_slice %75 {offsets = [5, 0], sizes = [1, 512], strides = [1, 1]} : vector<7x512xf32> to vector<1x512xf32>
    %140 = vector.broadcast %139 : vector<1x512xf32> to vector<7x512xf32>
    %141 = arith.mulf %138, %140 : vector<7x512xf32>
    %142 = arith.addf %136, %141 : vector<7x512xf32>
    %143 = vector.extract_strided_slice %106 {offsets = [42, 0], sizes = [7, 512], strides = [1, 1]} : vector<49x512xf32> to vector<7x512xf32>
    %c488_i32 = arith.constant 488 : i32
    %144 = tpu.dynamic_rotate %143 by %c488_i32 dim 1 : vector<7x512xf32>, i32 -> vector<7x512xf32>
    %145 = vector.extract_strided_slice %75 {offsets = [6, 0], sizes = [1, 512], strides = [1, 1]} : vector<7x512xf32> to vector<1x512xf32>
    %146 = vector.broadcast %145 : vector<1x512xf32> to vector<7x512xf32>
    %147 = arith.mulf %144, %146 : vector<7x512xf32>
    %148 = arith.addf %142, %147 : vector<7x512xf32>
    %cst_32 = arith.constant 0.000000e+00 : f32
    %149 = vector.broadcast %cst_32 : f32 to vector<1x512xf32>
    %150 = vector.extract_strided_slice %148 {offsets = [0, 0], sizes = [1, 512], strides = [1, 1]} : vector<7x512xf32> to vector<1x512xf32>
    %c192_i32 = arith.constant 192 : i32
    %151 = tpu.dynamic_rotate %150 by %c192_i32 dim 1 : vector<1x512xf32>, i32 -> vector<1x512xf32>
    %152 = vector.extract_strided_slice %76 {offsets = [0, 0], sizes = [1, 512], strides = [1, 1]} : vector<7x512xf32> to vector<1x512xf32>
    %153 = arith.mulf %151, %152 : vector<1x512xf32>
    %154 = arith.addf %149, %153 : vector<1x512xf32>
    %155 = vector.extract_strided_slice %148 {offsets = [1, 0], sizes = [1, 512], strides = [1, 1]} : vector<7x512xf32> to vector<1x512xf32>
    %c128_i32 = arith.constant 128 : i32
    %156 = tpu.dynamic_rotate %155 by %c128_i32 dim 1 : vector<1x512xf32>, i32 -> vector<1x512xf32>
    %157 = vector.extract_strided_slice %76 {offsets = [1, 0], sizes = [1, 512], strides = [1, 1]} : vector<7x512xf32> to vector<1x512xf32>
    %158 = arith.mulf %156, %157 : vector<1x512xf32>
    %159 = arith.addf %154, %158 : vector<1x512xf32>
    %160 = vector.extract_strided_slice %148 {offsets = [2, 0], sizes = [1, 512], strides = [1, 1]} : vector<7x512xf32> to vector<1x512xf32>
    %c64_i32 = arith.constant 64 : i32
    %161 = tpu.dynamic_rotate %160 by %c64_i32 dim 1 : vector<1x512xf32>, i32 -> vector<1x512xf32>
    %162 = vector.extract_strided_slice %76 {offsets = [2, 0], sizes = [1, 512], strides = [1, 1]} : vector<7x512xf32> to vector<1x512xf32>
    %163 = arith.mulf %161, %162 : vector<1x512xf32>
    %164 = arith.addf %159, %163 : vector<1x512xf32>
    %165 = vector.extract_strided_slice %148 {offsets = [3, 0], sizes = [1, 512], strides = [1, 1]} : vector<7x512xf32> to vector<1x512xf32>
    %166 = vector.extract_strided_slice %76 {offsets = [3, 0], sizes = [1, 512], strides = [1, 1]} : vector<7x512xf32> to vector<1x512xf32>
    %167 = arith.mulf %165, %166 : vector<1x512xf32>
    %168 = arith.addf %164, %167 : vector<1x512xf32>
    %169 = vector.extract_strided_slice %148 {offsets = [4, 0], sizes = [1, 512], strides = [1, 1]} : vector<7x512xf32> to vector<1x512xf32>
    %c448_i32 = arith.constant 448 : i32
    %170 = tpu.dynamic_rotate %169 by %c448_i32 dim 1 : vector<1x512xf32>, i32 -> vector<1x512xf32>
    %171 = vector.extract_strided_slice %76 {offsets = [4, 0], sizes = [1, 512], strides = [1, 1]} : vector<7x512xf32> to vector<1x512xf32>
    %172 = arith.mulf %170, %171 : vector<1x512xf32>
    %173 = arith.addf %168, %172 : vector<1x512xf32>
    %174 = vector.extract_strided_slice %148 {offsets = [5, 0], sizes = [1, 512], strides = [1, 1]} : vector<7x512xf32> to vector<1x512xf32>
    %c384_i32 = arith.constant 384 : i32
    %175 = tpu.dynamic_rotate %174 by %c384_i32 dim 1 : vector<1x512xf32>, i32 -> vector<1x512xf32>
    %176 = vector.extract_strided_slice %76 {offsets = [5, 0], sizes = [1, 512], strides = [1, 1]} : vector<7x512xf32> to vector<1x512xf32>
    %177 = arith.mulf %175, %176 : vector<1x512xf32>
    %178 = arith.addf %173, %177 : vector<1x512xf32>
    %179 = vector.extract_strided_slice %148 {offsets = [6, 0], sizes = [1, 512], strides = [1, 1]} : vector<7x512xf32> to vector<1x512xf32>
    %c320_i32 = arith.constant 320 : i32
    %180 = tpu.dynamic_rotate %179 by %c320_i32 dim 1 : vector<1x512xf32>, i32 -> vector<1x512xf32>
    %181 = vector.extract_strided_slice %76 {offsets = [6, 0], sizes = [1, 512], strides = [1, 1]} : vector<7x512xf32> to vector<1x512xf32>
    %182 = arith.mulf %180, %181 : vector<1x512xf32>
    %183 = arith.addf %178, %182 : vector<1x512xf32>
    %184 = vector.broadcast %2 : f32 to vector<1x512xf32>
    %185 = arith.addf %183, %184 : vector<1x512xf32>
    %c0_33 = arith.constant 0 : index
    %c0_34 = arith.constant 0 : index
    %c0_35 = arith.constant 0 : index
    %186 = vector.load %arg7[%c0_33, %c0_34, %c0_35] : memref<1x1x512xf32, #tpu.memory_space<vmem>>, vector<1x1x512xf32>
    %187 = vector.shape_cast %186 : vector<1x1x512xf32> to vector<1x512xf32>
    %188 = vector.shape_cast %185 : vector<1x512xf32> to vector<1x1x512xf32>
    tpu.vector_store %arg7[%c0_33, %c0_34, %c0_35], %188 {strides = array<i32>} : memref<1x1x512xf32, #tpu.memory_space<vmem>>, vector<1x1x512xf32>,
    return
  }
  func.func @transform_0(%arg0: i32) -> i32 {
    %c0_i32 = arith.constant 0 : i32
    %c0_i32_0 = arith.constant 0 : i32
    return %c0_i32 : i32
  }
  func.func @transform_1(%arg0: i32) -> (i32, i32, i32) {
    %c0_i32 = arith.constant 0 : i32
    %c0_i32_0 = arith.constant 0 : i32
    %c0_i32_1 = arith.constant 0 : i32
    return %arg0, %c0_i32, %c0_i32_0 : i32, i32, i32
  }
  func.func @transform_2(%arg0: i32) -> (i32, i32) {
    %c0_i32 = arith.constant 0 : i32
    %c0_i32_0 = arith.constant 0 : i32
    %c0_i32_1 = arith.constant 0 : i32
    return %c0_i32, %c0_i32_0 : i32, i32
  }
  func.func @transform_3(%arg0: i32) -> (i32, i32) {
    %c0_i32 = arith.constant 0 : i32
    %c0_i32_0 = arith.constant 0 : i32
    %c0_i32_1 = arith.constant 0 : i32
    return %c0_i32, %c0_i32_0 : i32, i32
  }
  func.func @transform_4(%arg0: i32) -> (i32, i32) {
    %c0_i32 = arith.constant 0 : i32
    %c0_i32_0 = arith.constant 0 : i32
    %c0_i32_1 = arith.constant 0 : i32
    return %c0_i32, %c0_i32_0 : i32, i32
  }
  func.func @transform_5(%arg0: i32) -> (i32, i32, i32) {
    %c0_i32 = arith.constant 0 : i32
    %c0_i32_0 = arith.constant 0 : i32
    %c0_i32_1 = arith.constant 0 : i32
    return %arg0, %c0_i32, %c0_i32_0 : i32, i32, i32
  }
  func.func @transform_6(%arg0: i32) -> (i32, i32, i32) {
    %c0_i32 = arith.constant 0 : i32
    %c0_i32_0 = arith.constant 0 : i32
    %c0_i32_1 = arith.constant 0 : i32
    return %arg0, %c0_i32, %c0_i32_0 : i32, i32, i32
  }
}

</mosaic_0001>

<llo_original>
// kernel: identify_forward.1
$region0: #{identify_forward.1}
  #allocation0 [shape = 'u32[]', space=smem, size = 0x4, offset = 0x4, fixed_abs, tag = 'smem constant byte address 0x4 - core index']
  #allocation1 [shape = 'u32[144,128]{1,0:T(1,128)}', space=vmem, size = 0x12000, scoped, tag = 'internal scratch']
  %s0 = inlined_call_operand.vmem [shape: f32[3], index: 0, kind: input, shape index: {}]
  %s1 = inlined_call_operand.vmem [shape: f32[2,16,512], index: 1, kind: input, shape index: {}]
  %s2 = inlined_call_operand.vmem [shape: f32[20,17], index: 2, kind: input, shape index: {}]
  %s3 = inlined_call_operand.vmem [shape: f32[49,112], index: 3, kind: input, shape index: {}]
  %s4 = inlined_call_operand.vmem [shape: f32[21,512], index: 4, kind: input, shape index: {}]
  %s5 = inlined_call_operand.vmem [shape: f32[2,16,512], index: 5, kind: output, shape index: {0}]
  %s6 = inlined_call_operand.vmem [shape: f32[2,1,512], index: 6, kind: output, shape index: {1}]
  %7 = xla_tuple %s5, %s6
  %s8 = sld [smem:[#allocation0]]
  $region65: #{identify_forward.1} parent=0
    _
  %s10 = ssub.s32 1, %s8
  %s11 = scalar_select 0, %s10, %s8
  $region1: #{identify_forward.1} parent=0
    #allocation2 [shape = 'u8[512]{0}', space=smem, size = 0x200, scoped, tag = 'input window, operand 0, single buffered']
    #allocation3 [shape = 's32[2]{0}', space=sflag, size = 0x8, scoped, tag = 'scoped memory for identify_forward.1']
    %12 = vsyncpa [#allocation3], 0
    loop: start=0, step=1, limit=4
    $region2: #{identify_forward.1} parent=1 // loop_pre_header
      _
    $region3: #{identify_forward.1} parent=1 // loop_header
      %s14 = sphi 0, %s18
      %p15 = scmp.ge.s32.totalorder %s14, 4
      %s22 = sphi 0, %s22
      %s24 = sphi 0, %s22
      %s25 = sphi 0, %s24
      %s39 = sphi 0, %s25
      %s45 = sphi 0, %s47
      %s48 = sphi 0, %s45
      %s49 = sphi 0, %s48
      %s65 = sphi 0, %s49
      %s69 = sphi 0, %s69
      %s71 = sphi 0, %s69
      %s72 = sphi 0, %s71
      %s86 = sphi 0, %s72
      %s90 = sphi 0, %s90
      %s92 = sphi 0, %s90
      %s93 = sphi 0, %s92
      %s107 = sphi 0, %s93
      %s111 = sphi 0, %s111
      %s113 = sphi 0, %s111
      %s114 = sphi 0, %s113
      %s128 = sphi 0, %s114
      %s134 = sphi 0, %s136
      %s137 = sphi 0, %s134
      %s138 = sphi 0, %s137
      %s154 = sphi 0, %s138
      %s160 = sphi 0, %s162
      %s163 = sphi 0, %s160
      %s164 = sphi 0, %s163
      %s180 = sphi 0, %s164
    $region4: #{identify_forward.1} parent=1 // loop_header_branch
      %17 = sbr.rel (%p15) target = $region8
    $region5: #{identify_forward.1} parent=1 // loop_body
      %s19 = ssub.s32 %s14, 1
      %s20 = ssub.s32 %s14, 2
      %s21 = sadd.s32 %s14, 1
      %s23 = sadd.s32 %s22, 1
      %p26 = scmp.eq.s32.totalorder %s14, 1
      %p27 = scmp.ne.s32.totalorder %s22, %s24
      %p28 = scmp.eq.s32.totalorder %s14, 0
      %p29 = por %p27, %p28
      %p30 = scmp.ne.s32.totalorder %s22, %s24
      %p31 = scmp.eq.s32.totalorder %s19, 1
      %p32 = por %p30, %p31
      %p33 = scmp.ne.s32.totalorder %s24, %s25
      %p34 = scmp.eq.s32.totalorder %s19, 0
      %p35 = por %p33, %p34
      %p36 = scmp.ne.s32.totalorder %s24, %s25
      %p37 = scmp.eq.s32.totalorder %s20, 1
      %p38 = por %p36, %p37
      %p40 = scmp.ne.s32.totalorder %s25, %s39
      %p41 = scmp.eq.s32.totalorder %s20, 0
      %p42 = por %p40, %p41
      %s43 = ssub.s32 %s14, %s21
      %p44 = scmp.eq.s32.totalorder %s43, 0
      %s46 = sadd.s32 %s45, 1
      %s47 = scalar_select %p44, %s45, %s46
      %p50 = pneg %p44
      %p51 = scmp.eq.s32.totalorder %s14, 1
      %p52 = por %p50, %p51
      %p53 = scmp.ne.s32.totalorder %s45, %s48
      %p54 = scmp.eq.s32.totalorder %s14, 0
      %p55 = por %p53, %p54
      %p56 = scmp.ne.s32.totalorder %s45, %s48
      %p57 = scmp.eq.s32.totalorder %s19, 1
      %p58 = por %p56, %p57
      %p59 = scmp.ne.s32.totalorder %s48, %s49
      %p60 = scmp.eq.s32.totalorder %s19, 0
      %p61 = por %p59, %p60
      %p62 = scmp.ne.s32.totalorder %s48, %s49
      %p63 = scmp.eq.s32.totalorder %s20, 1
      %p64 = por %p62, %p63
      %p66 = scmp.ne.s32.totalorder %s49, %s65
      %p67 = scmp.eq.s32.totalorder %s20, 0
      %p68 = por %p66, %p67
      %s70 = sadd.s32 %s69, 1
      %p73 = scmp.eq.s32.totalorder %s14, 1
      %p74 = scmp.ne.s32.totalorder %s69, %s71
      %p75 = scmp.eq.s32.totalorder %s14, 0
      %p76 = por %p74, %p75
      %p77 = scmp.ne.s32.totalorder %s69, %s71
      %p78 = scmp.eq.s32.totalorder %s19, 1
      %p79 = por %p77, %p78
      %p80 = scmp.ne.s32.totalorder %s71, %s72
      %p81 = scmp.eq.s32.totalorder %s19, 0
      %p82 = por %p80, %p81
      %p83 = scmp.ne.s32.totalorder %s71, %s72
      %p84 = scmp.eq.s32.totalorder %s20, 1
      %p85 = por %p83, %p84
      %p87 = scmp.ne.s32.totalorder %s72, %s86
      %p88 = scmp.eq.s32.totalorder %s20, 0
      %p89 = por %p87, %p88
      %s91 = sadd.s32 %s90, 1
      %p94 = scmp.eq.s32.totalorder %s14, 1
      %p95 = scmp.ne.s32.totalorder %s90, %s92
      %p96 = scmp.eq.s32.totalorder %s14, 0
      %p97 = por %p95, %p96
      %p98 = scmp.ne.s32.totalorder %s90, %s92
      %p99 = scmp.eq.s32.totalorder %s19, 1
      %p100 = por %p98, %p99
      %p101 = scmp.ne.s32.totalorder %s92, %s93
      %p102 = scmp.eq.s32.totalorder %s19, 0
      %p103 = por %p101, %p102
      %p104 = scmp.ne.s32.totalorder %s92, %s93
      %p105 = scmp.eq.s32.totalorder %s20, 1
      %p106 = por %p104, %p105
      %p108 = scmp.ne.s32.totalorder %s93, %s107
      %p109 = scmp.eq.s32.totalorder %s20, 0
      %p110 = por %p108, %p109
      %s112 = sadd.s32 %s111, 1
      %p115 = scmp.eq.s32.totalorder %s14, 1
      %p116 = scmp.ne.s32.totalorder %s111, %s113
      %p117 = scmp.eq.s32.totalorder %s14, 0
      %p118 = por %p116, %p117
      %p119 = scmp.ne.s32.totalorder %s111, %s113
      %p120 = scmp.eq.s32.totalorder %s19, 1
      %p121 = por %p119, %p120
      %p122 = scmp.ne.s32.totalorder %s113, %s114
      %p123 = scmp.eq.s32.totalorder %s19, 0
      %p124 = por %p122, %p123
      %p125 = scmp.ne.s32.totalorder %s113, %s114
      %p126 = scmp.eq.s32.totalorder %s20, 1
      %p127 = por %p125, %p126
      %p129 = scmp.ne.s32.totalorder %s114, %s128
      %p130 = scmp.eq.s32.totalorder %s20, 0
      %p131 = por %p129, %p130
      %s132 = ssub.s32 %s14, %s21
      %p133 = scmp.eq.s32.totalorder %s132, 0
      %s135 = sadd.s32 %s134, 1
      %s136 = scalar_select %p133, %s134, %s135
      %p139 = pneg %p133
      %p140 = scmp.eq.s32.totalorder %s14, 1
      %p141 = por %p139, %p140
      %p142 = scmp.ne.s32.totalorder %s134, %s137
      %p143 = scmp.eq.s32.totalorder %s14, 0
      %p144 = por %p142, %p143
      %p145 = scmp.ne.s32.totalorder %s134, %s137
      %p146 = scmp.eq.s32.totalorder %s19, 1
      %p147 = por %p145, %p146
      %p148 = scmp.ne.s32.totalorder %s137, %s138
      %p149 = scmp.eq.s32.totalorder %s19, 0
      %p150 = por %p148, %p149
      %p151 = scmp.ne.s32.totalorder %s137, %s138
      %p152 = scmp.eq.s32.totalorder %s20, 1
      %p153 = por %p151, %p152
      %p155 = scmp.ne.s32.totalorder %s138, %s154
      %p156 = scmp.eq.s32.totalorder %s20, 0
      %p157 = por %p155, %p156
      %s158 = ssub.s32 %s14, %s21
      %p159 = scmp.eq.s32.totalorder %s158, 0
      %s161 = sadd.s32 %s160, 1
      %s162 = scalar_select %p159, %s160, %s161
      %p165 = pneg %p159
      %p166 = scmp.eq.s32.totalorder %s14, 1
      %p167 = por %p165, %p166
      %p168 = scmp.ne.s32.totalorder %s160, %s163
      %p169 = scmp.eq.s32.totalorder %s14, 0
      %p170 = por %p168, %p169
      %p171 = scmp.ne.s32.totalorder %s160, %s163
      %p172 = scmp.eq.s32.totalorder %s19, 1
      %p173 = por %p171, %p172
      %p174 = scmp.ne.s32.totalorder %s163, %s164
      %p175 = scmp.eq.s32.totalorder %s19, 0
      %p176 = por %p174, %p175
      %p177 = scmp.ne.s32.totalorder %s163, %s164
      %p178 = scmp.eq.s32.totalorder %s20, 1
      %p179 = por %p177, %p178
      %p181 = scmp.ne.s32.totalorder %s164, %s180
      %p182 = scmp.eq.s32.totalorder %s20, 0
      %p183 = por %p181, %p182
      %p184 = scmp.le.s32.totalorder 1, %s14
      %p185 = scmp.lt.s32.totalorder %s14, 3
      %p186 = pnand %p184, %p185
      %p187 = pneg %p186
      // Predicated region
      $region9: #{identify_forward.1} parent=5 // pred_check
        _
      $region10: #{identify_forward.1} parent=5 // pred_check_branch
        %189 = sbr.rel (%p186) target = $region12
      $region11: #{identify_forward.1} parent=5 // pred_region
        %s190 = ssub.s32 %s14, 1
        // Predicated region
        $region13: #{identify_forward.1} parent=11 // pred_check
          %p191 = pneg %p35
        $region14: #{identify_forward.1} parent=11 // pred_check_branch
          %193 = sbr.rel (%p191) target = $region16
        $region15: #{identify_forward.1} parent=11 // pred_region
          %s195 = ssub.s32 16, 16
          %196 = vsyncadd [#allocation3], %s195
          %s198 = sshll.u32 %s0, 4
          %s199 = int_to_ptr.vmem [resolvable:$true] %s198
          %201 = dma.vmem_to_smem %s199, 16, [#allocation2], [#allocation3]
        $region16: #{identify_forward.1} parent=11 // pred_fallthru
          _
        // Predicated region
        $region17: #{identify_forward.1} parent=11 // pred_check
          %p202 = pneg %p82
        $region18: #{identify_forward.1} parent=11 // pred_check_branch
          %204 = sbr.rel (%p202) target = $region20
        $region19: #{identify_forward.1} parent=11 // pred_region
          _
        $region20: #{identify_forward.1} parent=11 // pred_fallthru
          _
        // Predicated region
        $region21: #{identify_forward.1} parent=11 // pred_check
          %p205 = pneg %p103
        $region22: #{identify_forward.1} parent=11 // pred_check_branch
          %207 = sbr.rel (%p205) target = $region24
        $region23: #{identify_forward.1} parent=11 // pred_region
          _
        $region24: #{identify_forward.1} parent=11 // pred_fallthru
          _
        // Predicated region
        $region25: #{identify_forward.1} parent=11 // pred_check
          %p208 = pneg %p124
        $region26: #{identify_forward.1} parent=11 // pred_check_branch
          %210 = sbr.rel (%p208) target = $region28
        $region27: #{identify_forward.1} parent=11 // pred_region
          _
        $region28: #{identify_forward.1} parent=11 // pred_fallthru
          _
      $region12: #{identify_forward.1} parent=5 // pred_fallthru
        _
      %p211 = scmp.lt.s32.totalorder %s14, 2
      // Predicated region
      $region29: #{identify_forward.1} parent=5 // pred_check
        %p212 = pneg %p211
      $region30: #{identify_forward.1} parent=5 // pred_check_branch
        %214 = sbr.rel (%p212) target = $region32
      $region31: #{identify_forward.1} parent=5 // pred_region
        // Predicated region
        $region33: #{identify_forward.1} parent=31 // pred_check
          %p215 = pneg %p55
        $region34: #{identify_forward.1} parent=31 // pred_check_branch
          %217 = sbr.rel (%p215) target = $region36
        $region35: #{identify_forward.1} parent=31 // pred_region
          %p218 = scmp.lt.s32.totalorder %s14, 1
          %s219 = scalar_select %p218, %s14, 1
          %s220 = smul.addr %s219, 8
          %s221 = smul.addr %s220, 8
          %s222 = scalar_lea.vmem %s1, %s221
        $region36: #{identify_forward.1} parent=31 // pred_fallthru
          _
      $region32: #{identify_forward.1} parent=5 // pred_fallthru
        _
      %p223 = scmp.le.s32.totalorder 1, %s14
      %p224 = scmp.lt.s32.totalorder %s14, 3
      %p225 = pnand %p223, %p224
      %p226 = pneg %p225
      // Predicated region
      $region37: #{identify_forward.1} parent=5 // pred_check
        _
      $region38: #{identify_forward.1} parent=5 // pred_check_branch
        %228 = sbr.rel (%p225) target = $region40
      $region39: #{identify_forward.1} parent=5 // pred_region
        %s229 = ssub.s32 %s14, 1
        // Predicated region
        $region41: #{identify_forward.1} parent=39 // pred_check
          %p230 = pneg %p35
        $region42: #{identify_forward.1} parent=39 // pred_check_branch
          %232 = sbr.rel (%p230) target = $region44
        $region43: #{identify_forward.1} parent=39 // pred_region
          %233 = dma.done [#allocation3], 16
        $region44: #{identify_forward.1} parent=39 // pred_fallthru
          _
        %234 = sfence
        %p235 = pneg %p35
        %p236 = pneg %p32
        %p237 = scmp.lt.s32.totalorder %s19, 1
        %s238 = scalar_select %p237, %s19, 1
        %s239 = smul.addr %s238, 8
        %s240 = smul.addr %s239, 8
        %s241 = scalar_lea.vmem %s1, %s240
        %p242 = pneg %p61
        %p243 = pneg %p58
        %p244 = pneg %p82
        %p245 = pneg %p79
        %p246 = pneg %p103
        %p247 = pneg %p100
        %p248 = pneg %p124
        %p249 = pneg %p121
        %p250 = pneg %p150
        %p251 = pneg %p147
        %p252 = scmp.lt.s32.totalorder %s19, 1
        %s253 = scalar_select %p252, %s19, 1
        %s254 = smul.addr %s253, 8
        %s255 = smul.addr %s254, 8
        %s256 = scalar_lea.vmem %s5, %s255
        %p257 = pneg %p176
        %p258 = pneg %p173
        %p259 = scmp.lt.s32.totalorder %s19, 1
        %s260 = scalar_select %p259, %s19, 1
        %s261 = smul.addr %s260, 4
        %s262 = scalar_lea.vmem %s6, %s261
        %p263 = scmp.lt.s32.totalorder %s19, 1
        %s264 = scalar_select %p263, %s19, 1
        %s265 = smul.addr %s264, 8
        %s266 = smul.addr %s265, 8
        %s267 = scalar_lea.vmem %s1, %s266
        %p268 = scmp.lt.s32.totalorder %s19, 1
        %s269 = scalar_select %p268, %s19, 1
        %s270 = smul.addr %s269, 8
        %s271 = smul.addr %s270, 8
        %s272 = scalar_lea.vmem %s5, %s271
        %p273 = scmp.lt.s32.totalorder %s19, 1
        %s274 = scalar_select %p273, %s19, 1
        %s275 = smul.addr %s274, 4
        %s276 = scalar_lea.vmem %s6, %s275
        %s277 = sld [smem:[#allocation2]]
        %s278 = sld [smem:[#allocation2 + $0x1]]
        %s279 = sld [smem:[#allocation2 + $0x2]]
        %v280 = vld [vmem:[%s267] sm:$0xff]
        %v281 = vld [vmem:[%s267 + $0x8] sm:$0xff]
        %v282 = vld [vmem:[%s267 + $0x10] sm:$0xff]
        %v283 = vld [vmem:[%s267 + $0x18] sm:$0xff]
        %v284 = vld [vmem:[%s267 + $0x20] sm:$0xff]
        %v285 = vld [vmem:[%s267 + $0x28] sm:$0xff]
        %v286 = vld [vmem:[%s267 + $0x30] sm:$0xff]
        %v287 = vld [vmem:[%s267 + $0x38] sm:$0xff]
        %288 = vmatprep.subr.mxu0 %v281
        %289 = vmatpush1.xpose.msra.mxu0 %v280
        %290 = vmatprep.subr.mxu0 %v285
        %291 = vmatpush1.xpose.msra.mxu0 %v284
        %292 = vmatprep.subr.mxu0 0.0
        %293 = vmatpush1.xpose.msra.mxu0 0.0
        %294 = vmatprep.subr.mxu0 0.0
        %295 = vmatpush1.xpose.msra.mxu0 0.0
        %296 = vmatprep.subr.mxu0 0.0
        %297 = vmatpush1.xpose.msra.mxu0 0.0
        %298 = vmatprep.subr.mxu0 0.0
        %299 = vmatpush1.xpose.msra.mxu0 0.0
        %300 = vmatprep.subr.mxu0 0.0
        %301 = vmatpush1.xpose.msra.mxu0 0.0
        %302 = vmatprep.subr.mxu0 0.0
        %303 = vmatpush1.xpose.msra.mxu0 0.0
        %304 = vmatprep.subr.mxu0 0.0
        %305 = vmatpush1.xpose.msra.mxu0 0.0
        %306 = vmatprep.subr.mxu0 0.0
        %307 = vmatpush1.xpose.msra.mxu0 0.0
        %308 = vmatprep.subr.mxu0 0.0
        %309 = vmatpush1.xpose.msra.mxu0 0.0
        %310 = vmatprep.subr.mxu0 0.0
        %311 = vmatpush1.xpose.msra.mxu0 0.0
        %312 = vmatprep.subr.mxu0 0.0
        %313 = vmatpush1.xpose.msra.mxu0 0.0
        %314 = vmatprep.subr.mxu0 0.0
        %315 = vmatpush1.xpose.msra.mxu0 0.0
        %316 = vmatprep.subr.mxu0 0.0
        %317 = vmatpush1.xpose.msra.mxu0 0.0
        %318 = vmatprep.subr.mxu0 0.0
        %319 = vmatpush1.xpose.msra.mxu0 0.0
        %320 = vmatprep.subr.mxu0 0.0
        %321 = vmatpush1.xpose.msra.mxu0 0.0
        %322 = vmatprep.subr.mxu0 0.0
        %323 = vmatpush1.xpose.msra.mxu0 0.0
        %324 = vmatprep.subr.mxu0 0.0
        %325 = vmatpush1.xpose.msra.mxu0 0.0
        %326 = vmatprep.subr.mxu0 0.0
        %327 = vmatpush1.xpose.msra.mxu0 0.0
        %328 = vmatprep.subr.mxu0 0.0
        %329 = vmatpush1.xpose.msra.mxu0 0.0
        %330 = vmatprep.subr.mxu0 0.0
        %331 = vmatpush1.xpose.msra.mxu0 0.0
        %332 = vmatprep.subr.mxu0 0.0
        %333 = vmatpush1.xpose.msra.mxu0 0.0
        %334 = vmatprep.subr.mxu0 0.0
        %335 = vmatpush1.xpose.msra.mxu0 0.0
        %336 = vmatprep.subr.mxu0 0.0
        %337 = vmatpush1.xpose.msra.mxu0 0.0
        %338 = vmatprep.subr.mxu0 0.0
        %339 = vmatpush1.xpose.msra.mxu0 0.0
        %340 = vmatprep.subr.mxu0 0.0
        %341 = vmatpush1.xpose.msra.mxu0 0.0
        %342 = vmatprep.subr.mxu0 0.0
        %343 = vmatpush1.xpose.msra.mxu0 0.0
        %344 = vmatprep.subr.mxu0 0.0
        %345 = vmatpush1.xpose.msra.mxu0 0.0
        %346 = vmatprep.subr.mxu0 0.0
        %347 = vmatpush1.xpose.msra.mxu0 0.0
        %348 = vmatprep.subr.mxu0 0.0
        %349 = vmatpush1.xpose.msra.mxu0 0.0
        %350 = vmatprep.subr.mxu0 0.0
        %351 = vmatpush1.xpose.msra.mxu0 0.0
        %352 = vmatprep.mubr.f32.mxu0 %v281
        %353 = vmatmul.mubr.f32.gmra.mrb[0].mxu0 %v280
        %v354 = vpop.f32.mrb[0].mxu0
        %v355 = vadd.f32 0.0, %v354
        %v356 = vpop.f32.mrb[0].mxu0
        %357 = vmatprep.mubr.f32.mxu0 %v285
        %358 = vmatmul.mubr.f32.gmra.mrb[0].mxu0 %v284
        %v359 = vpop.f32.mrb[0].mxu0
        %v360 = vadd.f32 0.0, %v359
        %v361 = vpop.f32.mrb[0].mxu0
        %362 = vdwg.mxu0
        %363 = vmatprep.subr.mxu0 %v283
        %364 = vmatpush1.xpose.msra.mxu0 %v282
        %365 = vmatprep.subr.mxu0 %v287
        %366 = vmatpush1.xpose.msra.mxu0 %v286
        %367 = vmatprep.subr.mxu0 0.0
        %368 = vmatpush1.xpose.msra.mxu0 0.0
        %369 = vmatprep.subr.mxu0 0.0
        %370 = vmatpush1.xpose.msra.mxu0 0.0
        %371 = vmatprep.subr.mxu0 0.0
        %372 = vmatpush1.xpose.msra.mxu0 0.0
        %373 = vmatprep.subr.mxu0 0.0
        %374 = vmatpush1.xpose.msra.mxu0 0.0
        %375 = vmatprep.subr.mxu0 0.0
        %376 = vmatpush1.xpose.msra.mxu0 0.0
        %377 = vmatprep.subr.mxu0 0.0
        %378 = vmatpush1.xpose.msra.mxu0 0.0
        %379 = vmatprep.subr.mxu0 0.0
        %380 = vmatpush1.xpose.msra.mxu0 0.0
        %381 = vmatprep.subr.mxu0 0.0
        %382 = vmatpush1.xpose.msra.mxu0 0.0
        %383 = vmatprep.subr.mxu0 0.0
        %384 = vmatpush1.xpose.msra.mxu0 0.0
        %385 = vmatprep.subr.mxu0 0.0
        %386 = vmatpush1.xpose.msra.mxu0 0.0
        %387 = vmatprep.subr.mxu0 0.0
        %388 = vmatpush1.xpose.msra.mxu0 0.0
        %389 = vmatprep.subr.mxu0 0.0
        %390 = vmatpush1.xpose.msra.mxu0 0.0
        %391 = vmatprep.subr.mxu0 0.0
        %392 = vmatpush1.xpose.msra.mxu0 0.0
        %393 = vmatprep.subr.mxu0 0.0
        %394 = vmatpush1.xpose.msra.mxu0 0.0
        %395 = vmatprep.subr.mxu0 0.0
        %396 = vmatpush1.xpose.msra.mxu0 0.0
        %397 = vmatprep.subr.mxu0 0.0
        %398 = vmatpush1.xpose.msra.mxu0 0.0
        %399 = vmatprep.subr.mxu0 0.0
        %400 = vmatpush1.xpose.msra.mxu0 0.0
        %401 = vmatprep.subr.mxu0 0.0
        %402 = vmatpush1.xpose.msra.mxu0 0.0
        %403 = vmatprep.subr.mxu0 0.0
        %404 = vmatpush1.xpose.msra.mxu0 0.0
        %405 = vmatprep.subr.mxu0 0.0
        %406 = vmatpush1.xpose.msra.mxu0 0.0
        %407 = vmatprep.subr.mxu0 0.0
        %408 = vmatpush1.xpose.msra.mxu0 0.0
        %409 = vmatprep.subr.mxu0 0.0
        %410 = vmatpush1.xpose.msra.mxu0 0.0
        %411 = vmatprep.subr.mxu0 0.0
        %412 = vmatpush1.xpose.msra.mxu0 0.0
        %413 = vmatprep.subr.mxu0 0.0
        %414 = vmatpush1.xpose.msra.mxu0 0.0
        %415 = vmatprep.subr.mxu0 0.0
        %416 = vmatpush1.xpose.msra.mxu0 0.0
        %417 = vmatprep.subr.mxu0 0.0
        %418 = vmatpush1.xpose.msra.mxu0 0.0
        %419 = vmatprep.subr.mxu0 0.0
        %420 = vmatpush1.xpose.msra.mxu0 0.0
        %421 = vmatprep.subr.mxu0 0.0
        %422 = vmatpush1.xpose.msra.mxu0 0.0
        %423 = vmatprep.subr.mxu0 0.0
        %424 = vmatpush1.xpose.msra.mxu0 0.0
        %425 = vmatprep.subr.mxu0 0.0
        %426 = vmatpush1.xpose.msra.mxu0 0.0
        %427 = vmatprep.mubr.f32.mxu0 %v283
        %428 = vmatmul.mubr.f32.gmra.mrb[0].mxu0 %v282
        %v429 = vpop.f32.mrb[0].mxu0
        %v430 = vadd.f32 %v355, %v429
        %v431 = vpop.f32.mrb[0].mxu0
        %432 = vmatprep.mubr.f32.mxu0 %v287
        %433 = vmatmul.mubr.f32.gmra.mrb[0].mxu0 %v286
        %v434 = vpop.f32.mrb[0].mxu0
        %v435 = vadd.f32 %v360, %v434
        %v436 = vpop.f32.mrb[0].mxu0
        %437 = vdwg.mxu0
        %vm438 = vcmask 130048
        %v439 = vsel %vm438, %v430, -inf
        %440 = vmax.xlane.f32.xlu0 %v439
        %v441 = vpop.xlane.xlu0 %440
        %v442 = vsel %vm438, %v435, -inf
        %443 = vmax.xlane.f32.xlu0 %v442
        %v444 = vpop.xlane.xlu0 %443
        %v445 = vsub.f32 %v430, %v441
        %v446 = vsub.f32 %v435, %v444
        %v447 = vmul.f32 %v445, 1.442695
        %v448 = vpow.pop %v447
        %v449 = vmul.f32 %v446, 1.442695
        %v450 = vpow.pop %v449
        %v452 = vsel %vm438, %v448, 0
        %v455 = vsel %vm438, %v450, 0
        %457 = vmatprep.subr.mxu0 %v281
        %458 = vmatpush1.msra.mxu0 %v280
        %459 = vmatprep.subr.mxu0 %v285
        %460 = vmatpush1.msra.mxu0 %v284
        %461 = vmatprep.subr.mxu0 0.0
        %462 = vmatpush1.msra.mxu0 0.0
        %463 = vmatprep.subr.mxu0 0.0
        %464 = vmatpush1.msra.mxu0 0.0
        %465 = vmatprep.subr.mxu0 0.0
        %466 = vmatpush1.msra.mxu0 0.0
        %467 = vmatprep.subr.mxu0 0.0
        %468 = vmatpush1.msra.mxu0 0.0
        %469 = vmatprep.subr.mxu0 0.0
        %470 = vmatpush1.msra.mxu0 0.0
        %471 = vmatprep.subr.mxu0 0.0
        %472 = vmatpush1.msra.mxu0 0.0
        %473 = vmatprep.subr.mxu0 0.0
        %474 = vmatpush1.msra.mxu0 0.0
        %475 = vmatprep.subr.mxu0 0.0
        %476 = vmatpush1.msra.mxu0 0.0
        %477 = vmatprep.subr.mxu0 0.0
        %478 = vmatpush1.msra.mxu0 0.0
        %479 = vmatprep.subr.mxu0 0.0
        %480 = vmatpush1.msra.mxu0 0.0
        %481 = vmatprep.subr.mxu0 0.0
        %482 = vmatpush1.msra.mxu0 0.0
        %483 = vmatprep.subr.mxu0 0.0
        %484 = vmatpush1.msra.mxu0 0.0
        %485 = vmatprep.subr.mxu0 0.0
        %486 = vmatpush1.msra.mxu0 0.0
        %487 = vmatprep.subr.mxu0 0.0
        %488 = vmatpush1.msra.mxu0 0.0
        %489 = vmatprep.subr.mxu0 0.0
        %490 = vmatpush1.msra.mxu0 0.0
        %491 = vmatprep.subr.mxu0 0.0
        %492 = vmatpush1.msra.mxu0 0.0
        %493 = vmatprep.subr.mxu0 0.0
        %494 = vmatpush1.msra.mxu0 0.0
        %495 = vmatprep.subr.mxu0 0.0
        %496 = vmatpush1.msra.mxu0 0.0
        %497 = vmatprep.subr.mxu0 0.0
        %498 = vmatpush1.msra.mxu0 0.0
        %499 = vmatprep.subr.mxu0 0.0
        %500 = vmatpush1.msra.mxu0 0.0
        %501 = vmatprep.subr.mxu0 0.0
        %502 = vmatpush1.msra.mxu0 0.0
        %503 = vmatprep.subr.mxu0 0.0
        %504 = vmatpush1.msra.mxu0 0.0
        %505 = vmatprep.subr.mxu0 0.0
        %506 = vmatpush1.msra.mxu0 0.0
        %507 = vmatprep.subr.mxu0 0.0
        %508 = vmatpush1.msra.mxu0 0.0
        %509 = vmatprep.subr.mxu0 0.0
        %510 = vmatpush1.msra.mxu0 0.0
        %511 = vmatprep.subr.mxu0 0.0
        %512 = vmatpush1.msra.mxu0 0.0
        %513 = vmatprep.subr.mxu0 0.0
        %514 = vmatpush1.msra.mxu0 0.0
        %515 = vmatprep.subr.mxu0 0.0
        %516 = vmatpush1.msra.mxu0 0.0
        %517 = vmatprep.subr.mxu0 0.0
        %518 = vmatpush1.msra.mxu0 0.0
        %519 = vmatprep.subr.mxu0 0.0
        %520 = vmatpush1.msra.mxu0 0.0
        %521 = vmatprep.mubr.f32.mxu0 0.0
        %522 = vmatmul.mubr.f32.gmra.mrb[0].mxu0 %v452
        %v523 = vpop.f32.mrb[0].mxu0
        %v524 = vadd.f32 0.0, %v523
        %v525 = vpop.f32.mrb[0].mxu0
        %v526 = vadd.f32 0.0, %v525
        %527 = vmatprep.mubr.f32.mxu0 0.0
        %528 = vmatmul.mubr.f32.gmra.mrb[0].mxu0 %v455
        %v529 = vpop.f32.mrb[0].mxu0
        %v530 = vadd.f32 0.0, %v529
        %v531 = vpop.f32.mrb[0].mxu0
        %v532 = vadd.f32 0.0, %v531
        %533 = vdwg.mxu0
        %534 = vmatprep.subr.mxu0 %v283
        %535 = vmatpush1.msra.mxu0 %v282
        %536 = vmatprep.subr.mxu0 %v287
        %537 = vmatpush1.msra.mxu0 %v286
        %538 = vmatprep.subr.mxu0 0.0
        %539 = vmatpush1.msra.mxu0 0.0
        %540 = vmatprep.subr.mxu0 0.0
        %541 = vmatpush1.msra.mxu0 0.0
        %542 = vmatprep.subr.mxu0 0.0
        %543 = vmatpush1.msra.mxu0 0.0
        %544 = vmatprep.subr.mxu0 0.0
        %545 = vmatpush1.msra.mxu0 0.0
        %546 = vmatprep.subr.mxu0 0.0
        %547 = vmatpush1.msra.mxu0 0.0
        %548 = vmatprep.subr.mxu0 0.0
        %549 = vmatpush1.msra.mxu0 0.0
        %550 = vmatprep.subr.mxu0 0.0
        %551 = vmatpush1.msra.mxu0 0.0
        %552 = vmatprep.subr.mxu0 0.0
        %553 = vmatpush1.msra.mxu0 0.0
        %554 = vmatprep.subr.mxu0 0.0
        %555 = vmatpush1.msra.mxu0 0.0
        %556 = vmatprep.subr.mxu0 0.0
        %557 = vmatpush1.msra.mxu0 0.0
        %558 = vmatprep.subr.mxu0 0.0
        %559 = vmatpush1.msra.mxu0 0.0
        %560 = vmatprep.subr.mxu0 0.0
        %561 = vmatpush1.msra.mxu0 0.0
        %562 = vmatprep.subr.mxu0 0.0
        %563 = vmatpush1.msra.mxu0 0.0
        %564 = vmatprep.subr.mxu0 0.0
        %565 = vmatpush1.msra.mxu0 0.0
        %566 = vmatprep.subr.mxu0 0.0
        %567 = vmatpush1.msra.mxu0 0.0
        %568 = vmatprep.subr.mxu0 0.0
        %569 = vmatpush1.msra.mxu0 0.0
        %570 = vmatprep.subr.mxu0 0.0
        %571 = vmatpush1.msra.mxu0 0.0
        %572 = vmatprep.subr.mxu0 0.0
        %573 = vmatpush1.msra.mxu0 0.0
        %574 = vmatprep.subr.mxu0 0.0
        %575 = vmatpush1.msra.mxu0 0.0
        %576 = vmatprep.subr.mxu0 0.0
        %577 = vmatpush1.msra.mxu0 0.0
        %578 = vmatprep.subr.mxu0 0.0
        %579 = vmatpush1.msra.mxu0 0.0
        %580 = vmatprep.subr.mxu0 0.0
        %581 = vmatpush1.msra.mxu0 0.0
        %582 = vmatprep.subr.mxu0 0.0
        %583 = vmatpush1.msra.mxu0 0.0
        %584 = vmatprep.subr.mxu0 0.0
        %585 = vmatpush1.msra.mxu0 0.0
        %586 = vmatprep.subr.mxu0 0.0
        %587 = vmatpush1.msra.mxu0 0.0
        %588 = vmatprep.subr.mxu0 0.0
        %589 = vmatpush1.msra.mxu0 0.0
        %590 = vmatprep.subr.mxu0 0.0
        %591 = vmatpush1.msra.mxu0 0.0
        %592 = vmatprep.subr.mxu0 0.0
        %593 = vmatpush1.msra.mxu0 0.0
        %594 = vmatprep.subr.mxu0 0.0
        %595 = vmatpush1.msra.mxu0 0.0
        %596 = vmatprep.subr.mxu0 0.0
        %597 = vmatpush1.msra.mxu0 0.0
        %598 = vmatprep.mubr.f32.mxu0 0.0
        %599 = vmatmul.mubr.f32.gmra.mrb[0].mxu0 %v452
        %v600 = vpop.f32.mrb[0].mxu0
        %v601 = vadd.f32 0.0, %v600
        %v602 = vpop.f32.mrb[0].mxu0
        %v603 = vadd.f32 0.0, %v602
        %604 = vmatprep.mubr.f32.mxu0 0.0
        %605 = vmatmul.mubr.f32.gmra.mrb[0].mxu0 %v455
        %v606 = vpop.f32.mrb[0].mxu0
        %v607 = vadd.f32 0.0, %v606
        %v608 = vpop.f32.mrb[0].mxu0
        %v609 = vadd.f32 0.0, %v608
        %610 = vdwg.mxu0
        %v611 = vsel %vm438, %v448, 0.0
        %612 = vadd.xlane.f32.xlu0 %v611
        %v613 = vpop.xlane.xlu0 %612
        %v614 = vsel %vm438, %v450, 0.0
        %615 = vadd.xlane.f32.xlu0 %v614
        %v616 = vpop.xlane.xlu0 %615
        %v617 = vrcp.pop %v613
        %v618 = vrcp.pop %v616
        %v619 = vmul.f32 %v524, %v617
        %v620 = vmul.f32 %v526, %v617
        %v621 = vmul.f32 %v601, %v617
        %v622 = vmul.f32 %v603, %v617
        %v623 = vmul.f32 %v530, %v618
        %v624 = vmul.f32 %v532, %v618
        %v625 = vmul.f32 %v607, %v618
        %v626 = vmul.f32 %v609, %v618
        %v627 = vstv %s277
        %v628 = vmul.f32 %v627, %v619
        %v629 = vmul.f32 %v627, %v620
        %v630 = vmul.f32 %v627, %v621
        %v631 = vmul.f32 %v627, %v622
        %v632 = vmul.f32 %v627, %v623
        %v633 = vmul.f32 %v627, %v624
        %v634 = vmul.f32 %v627, %v625
        %v635 = vmul.f32 %v627, %v626
        %v636 = vadd.f32 %v628, %v280
        %v637 = vadd.f32 %v629, %v281
        %v638 = vadd.f32 %v630, %v282
        %v639 = vadd.f32 %v631, %v283
        %v640 = vadd.f32 %v632, %v284
        %v641 = vadd.f32 %v633, %v285
        %v642 = vadd.f32 %v634, %v286
        %v643 = vadd.f32 %v635, %v287
        %v644 = vld [vmem:[%s2] sm:$0xff]
        %v645 = vld [vmem:[%s2 + $0x8] sm:$0xff]
        %v646 = vld [vmem:[%s2 + $0x10] sm:$0xf]
        %vm647 = vcmask 138240
        %v649 = vsel %vm647, %v644, 0
        %v652 = vsel %vm647, %v645, 0
        %v655 = vsel %vm647, %v646, 0
        %vm657 = vcmask 1040384
        %v659 = vsel %vm657, 1.0, 0
        %661 = vmatprep.subr.mxu0 %v637
        %662 = vmatpush1.msra.mxu0 %v636
        %663 = vmatprep.subr.mxu0 %v641
        %664 = vmatpush1.msra.mxu0 %v640
        %665 = vmatprep.subr.mxu0 %v659
        %666 = vmatpush1.msra.mxu0 %v659
        %667 = vmatprep.subr.mxu0 0.0
        %668 = vmatpush1.msra.mxu0 0.0
        %669 = vmatprep.subr.mxu0 0.0
        %670 = vmatpush1.msra.mxu0 0.0
        %671 = vmatprep.subr.mxu0 0.0
        %672 = vmatpush1.msra.mxu0 0.0
        %673 = vmatprep.subr.mxu0 0.0
        %674 = vmatpush1.msra.mxu0 0.0
        %675 = vmatprep.subr.mxu0 0.0
        %676 = vmatpush1.msra.mxu0 0.0
        %677 = vmatprep.subr.mxu0 0.0
        %678 = vmatpush1.msra.mxu0 0.0
        %679 = vmatprep.subr.mxu0 0.0
        %680 = vmatpush1.msra.mxu0 0.0
        %681 = vmatprep.subr.mxu0 0.0
        %682 = vmatpush1.msra.mxu0 0.0
        %683 = vmatprep.subr.mxu0 0.0
        %684 = vmatpush1.msra.mxu0 0.0
        %685 = vmatprep.subr.mxu0 0.0
        %686 = vmatpush1.msra.mxu0 0.0
        %687 = vmatprep.subr.mxu0 0.0
        %688 = vmatpush1.msra.mxu0 0.0
        %689 = vmatprep.subr.mxu0 0.0
        %690 = vmatpush1.msra.mxu0 0.0
        %691 = vmatprep.subr.mxu0 0.0
        %692 = vmatpush1.msra.mxu0 0.0
        %693 = vmatprep.subr.mxu0 0.0
        %694 = vmatpush1.msra.mxu0 0.0
        %695 = vmatprep.subr.mxu0 0.0
        %696 = vmatpush1.msra.mxu0 0.0
        %697 = vmatprep.subr.mxu0 0.0
        %698 = vmatpush1.msra.mxu0 0.0
        %699 = vmatprep.subr.mxu0 0.0
        %700 = vmatpush1.msra.mxu0 0.0
        %701 = vmatprep.subr.mxu0 0.0
        %702 = vmatpush1.msra.mxu0 0.0
        %703 = vmatprep.subr.mxu0 0.0
        %704 = vmatpush1.msra.mxu0 0.0
        %705 = vmatprep.subr.mxu0 0.0
        %706 = vmatpush1.msra.mxu0 0.0
        %707 = vmatprep.subr.mxu0 0.0
        %708 = vmatpush1.msra.mxu0 0.0
        %709 = vmatprep.subr.mxu0 0.0
        %710 = vmatpush1.msra.mxu0 0.0
        %711 = vmatprep.subr.mxu0 0.0
        %712 = vmatpush1.msra.mxu0 0.0
        %713 = vmatprep.subr.mxu0 0.0
        %714 = vmatpush1.msra.mxu0 0.0
        %715 = vmatprep.subr.mxu0 0.0
        %716 = vmatpush1.msra.mxu0 0.0
        %717 = vmatprep.subr.mxu0 0.0
        %718 = vmatpush1.msra.mxu0 0.0
        %719 = vmatprep.subr.mxu0 0.0
        %720 = vmatpush1.msra.mxu0 0.0
        %721 = vmatprep.subr.mxu0 0.0
        %722 = vmatpush1.msra.mxu0 0.0
        %723 = vmatprep.subr.mxu0 0.0
        %724 = vmatpush1.msra.mxu0 0.0
        %725 = vmatprep.mubr.f32.mxu0 0.0
        %726 = vmatmul.mubr.f32.gmra.mrb[0].mxu0 %v649
        %v727 = vpop.f32.mrb[0].mxu0
        %v728 = vadd.f32 0.0, %v727
        %v729 = vpop.f32.mrb[0].mxu0
        %v730 = vadd.f32 0.0, %v729
        %731 = vmatprep.mubr.f32.mxu0 0.0
        %732 = vmatmul.mubr.f32.gmra.mrb[0].mxu0 %v652
        %v733 = vpop.f32.mrb[0].mxu0
        %v734 = vadd.f32 0.0, %v733
        %v735 = vpop.f32.mrb[0].mxu0
        %v736 = vadd.f32 0.0, %v735
        %737 = vmatprep.mubr.f32.mxu0 0.0
        %738 = vmatmul.mubr.f32.gmra.mrb[0].mxu0 %v655
        %v739 = vpop.f32.mrb[0].mxu0
        %v740 = vadd.f32 0.0, %v739
        %v741 = vpop.f32.mrb[0].mxu0
        %v742 = vadd.f32 0.0, %v741
        %743 = vdwg.mxu0
        %744 = vmatprep.subr.mxu0 %v639
        %745 = vmatpush1.msra.mxu0 %v638
        %746 = vmatprep.subr.mxu0 %v643
        %747 = vmatpush1.msra.mxu0 %v642
        %748 = vmatprep.subr.mxu0 %v659
        %749 = vmatpush1.msra.mxu0 %v659
        %750 = vmatprep.subr.mxu0 0.0
        %751 = vmatpush1.msra.mxu0 0.0
        %752 = vmatprep.subr.mxu0 0.0
        %753 = vmatpush1.msra.mxu0 0.0
        %754 = vmatprep.subr.mxu0 0.0
        %755 = vmatpush1.msra.mxu0 0.0
        %756 = vmatprep.subr.mxu0 0.0
        %757 = vmatpush1.msra.mxu0 0.0
        %758 = vmatprep.subr.mxu0 0.0
        %759 = vmatpush1.msra.mxu0 0.0
        %760 = vmatprep.subr.mxu0 0.0
        %761 = vmatpush1.msra.mxu0 0.0
        %762 = vmatprep.subr.mxu0 0.0
        %763 = vmatpush1.msra.mxu0 0.0
        %764 = vmatprep.subr.mxu0 0.0
        %765 = vmatpush1.msra.mxu0 0.0
        %766 = vmatprep.subr.mxu0 0.0
        %767 = vmatpush1.msra.mxu0 0.0
        %768 = vmatprep.subr.mxu0 0.0
        %769 = vmatpush1.msra.mxu0 0.0
        %770 = vmatprep.subr.mxu0 0.0
        %771 = vmatpush1.msra.mxu0 0.0
        %772 = vmatprep.subr.mxu0 0.0
        %773 = vmatpush1.msra.mxu0 0.0
        %774 = vmatprep.subr.mxu0 0.0
        %775 = vmatpush1.msra.mxu0 0.0
        %776 = vmatprep.subr.mxu0 0.0
        %777 = vmatpush1.msra.mxu0 0.0
        %778 = vmatprep.subr.mxu0 0.0
        %779 = vmatpush1.msra.mxu0 0.0
        %780 = vmatprep.subr.mxu0 0.0
        %781 = vmatpush1.msra.mxu0 0.0
        %782 = vmatprep.subr.mxu0 0.0
        %783 = vmatpush1.msra.mxu0 0.0
        %784 = vmatprep.subr.mxu0 0.0
        %785 = vmatpush1.msra.mxu0 0.0
        %786 = vmatprep.subr.mxu0 0.0
        %787 = vmatpush1.msra.mxu0 0.0
        %788 = vmatprep.subr.mxu0 0.0
        %789 = vmatpush1.msra.mxu0 0.0
        %790 = vmatprep.subr.mxu0 0.0
        %791 = vmatpush1.msra.mxu0 0.0
        %792 = vmatprep.subr.mxu0 0.0
        %793 = vmatpush1.msra.mxu0 0.0
        %794 = vmatprep.subr.mxu0 0.0
        %795 = vmatpush1.msra.mxu0 0.0
        %796 = vmatprep.subr.mxu0 0.0
        %797 = vmatpush1.msra.mxu0 0.0
        %798 = vmatprep.subr.mxu0 0.0
        %799 = vmatpush1.msra.mxu0 0.0
        %800 = vmatprep.subr.mxu0 0.0
        %801 = vmatpush1.msra.mxu0 0.0
        %802 = vmatprep.subr.mxu0 0.0
        %803 = vmatpush1.msra.mxu0 0.0
        %804 = vmatprep.subr.mxu0 0.0
        %805 = vmatpush1.msra.mxu0 0.0
        %806 = vmatprep.subr.mxu0 0.0
        %807 = vmatpush1.msra.mxu0 0.0
        %808 = vmatprep.mubr.f32.mxu0 0.0
        %809 = vmatmul.mubr.f32.gmra.mrb[0].mxu0 %v649
        %v810 = vpop.f32.mrb[0].mxu0
        %v811 = vadd.f32 0.0, %v810
        %v812 = vpop.f32.mrb[0].mxu0
        %v813 = vadd.f32 0.0, %v812
        %814 = vmatprep.mubr.f32.mxu0 0.0
        %815 = vmatmul.mubr.f32.gmra.mrb[0].mxu0 %v652
        %v816 = vpop.f32.mrb[0].mxu0
        %v817 = vadd.f32 0.0, %v816
        %v818 = vpop.f32.mrb[0].mxu0
        %v819 = vadd.f32 0.0, %v818
        %820 = vmatprep.mubr.f32.mxu0 0.0
        %821 = vmatmul.mubr.f32.gmra.mrb[0].mxu0 %v655
        %v822 = vpop.f32.mrb[0].mxu0
        %v823 = vadd.f32 0.0, %v822
        %v824 = vpop.f32.mrb[0].mxu0
        %v825 = vadd.f32 0.0, %v824
        %826 = vdwg.mxu0
        %827 = vxpose.xlu0.b32.start [1/16] %v728, 128
        %828 = vxpose.xlu0.b32.cont [2/16] 0.0, 128
        %829 = vxpose.xlu0.b32.cont [3/16] 0.0, 128
        %830 = vxpose.xlu0.b32.cont [4/16] 0.0, 128
        %831 = vxpose.xlu0.b32.cont [5/16] 0.0, 128
        %832 = vxpose.xlu0.b32.cont [6/16] 0.0, 128
        %833 = vxpose.xlu0.b32.cont [7/16] 0.0, 128
        %834 = vxpose.xlu0.b32.cont [8/16] 0.0, 128
        %835 = vxpose.xlu0.b32.cont [9/16] 0.0, 128
        %836 = vxpose.xlu0.b32.cont [10/16] 0.0, 128
        %837 = vxpose.xlu0.b32.cont [11/16] 0.0, 128
        %838 = vxpose.xlu0.b32.cont [12/16] 0.0, 128
        %839 = vxpose.xlu0.b32.cont [13/16] 0.0, 128
        %840 = vxpose.xlu0.b32.cont [14/16] 0.0, 128
        %841 = vxpose.xlu0.b32.cont [15/16] 0.0, 128
        %842 = vxpose.xlu0.b32.end [16/16] 0.0, 128
        %v843 = vpop.trf.xlu0
        %v844 = vpop.trf.xlu0
        %v845 = vpop.trf.xlu0
        %v846 = vpop.trf.xlu0
        %v847 = vpop.trf.xlu0
        %v848 = vpop.trf.xlu0
        %v849 = vpop.trf.xlu0
        %v850 = vpop.trf.xlu0
        %v851 = vpop.trf.xlu0
        %v852 = vpop.trf.xlu0
        %v853 = vpop.trf.xlu0
        %v854 = vpop.trf.xlu0
        %v855 = vpop.trf.xlu0
        %v856 = vpop.trf.xlu0
        %v857 = vpop.trf.xlu0
        %v858 = vpop.trf.xlu0
        %859 = vxpose.xlu0.b32.start [1/16] %v730, 128
        %860 = vxpose.xlu0.b32.cont [2/16] 0.0, 128
        %861 = vxpose.xlu0.b32.cont [3/16] 0.0, 128
        %862 = vxpose.xlu0.b32.cont [4/16] 0.0, 128
        %863 = vxpose.xlu0.b32.cont [5/16] 0.0, 128
        %864 = vxpose.xlu0.b32.cont [6/16] 0.0, 128
        %865 = vxpose.xlu0.b32.cont [7/16] 0.0, 128
        %866 = vxpose.xlu0.b32.cont [8/16] 0.0, 128
        %867 = vxpose.xlu0.b32.cont [9/16] 0.0, 128
        %868 = vxpose.xlu0.b32.cont [10/16] 0.0, 128
        %869 = vxpose.xlu0.b32.cont [11/16] 0.0, 128
        %870 = vxpose.xlu0.b32.cont [12/16] 0.0, 128
        %871 = vxpose.xlu0.b32.cont [13/16] 0.0, 128
        %872 = vxpose.xlu0.b32.cont [14/16] 0.0, 128
        %873 = vxpose.xlu0.b32.cont [15/16] 0.0, 128
        %874 = vxpose.xlu0.b32.end [16/16] 0.0, 128
        %v875 = vpop.trf.xlu0
        %v876 = vpop.trf.xlu0
        %v877 = vpop.trf.xlu0
        %v878 = vpop.trf.xlu0
        %v879 = vpop.trf.xlu0
        %v880 = vpop.trf.xlu0
        %v881 = vpop.trf.xlu0
        %v882 = vpop.trf.xlu0
        %v883 = vpop.trf.xlu0
        %v884 = vpop.trf.xlu0
        %v885 = vpop.trf.xlu0
        %v886 = vpop.trf.xlu0
        %v887 = vpop.trf.xlu0
        %v888 = vpop.trf.xlu0
        %v889 = vpop.trf.xlu0
        %v890 = vpop.trf.xlu0
        %891 = vxpose.xlu0.b32.start [1/16] %v811, 128
        %892 = vxpose.xlu0.b32.cont [2/16] 0.0, 128
        %893 = vxpose.xlu0.b32.cont [3/16] 0.0, 128
        %894 = vxpose.xlu0.b32.cont [4/16] 0.0, 128
        %895 = vxpose.xlu0.b32.cont [5/16] 0.0, 128
        %896 = vxpose.xlu0.b32.cont [6/16] 0.0, 128
        %897 = vxpose.xlu0.b32.cont [7/16] 0.0, 128
        %898 = vxpose.xlu0.b32.cont [8/16] 0.0, 128
        %899 = vxpose.xlu0.b32.cont [9/16] 0.0, 128
        %900 = vxpose.xlu0.b32.cont [10/16] 0.0, 128
        %901 = vxpose.xlu0.b32.cont [11/16] 0.0, 128
        %902 = vxpose.xlu0.b32.cont [12/16] 0.0, 128
        %903 = vxpose.xlu0.b32.cont [13/16] 0.0, 128
        %904 = vxpose.xlu0.b32.cont [14/16] 0.0, 128
        %905 = vxpose.xlu0.b32.cont [15/16] 0.0, 128
        %906 = vxpose.xlu0.b32.end [16/16] 0.0, 128
        %v907 = vpop.trf.xlu0
        %v908 = vpop.trf.xlu0
        %v909 = vpop.trf.xlu0
        %v910 = vpop.trf.xlu0
        %v911 = vpop.trf.xlu0
        %v912 = vpop.trf.xlu0
        %v913 = vpop.trf.xlu0
        %v914 = vpop.trf.xlu0
        %v915 = vpop.trf.xlu0
        %v916 = vpop.trf.xlu0
        %v917 = vpop.trf.xlu0
        %v918 = vpop.trf.xlu0
        %v919 = vpop.trf.xlu0
        %v920 = vpop.trf.xlu0
        %v921 = vpop.trf.xlu0
        %v922 = vpop.trf.xlu0
        %923 = vxpose.xlu0.b32.start [1/16] %v813, 128
        %924 = vxpose.xlu0.b32.cont [2/16] 0.0, 128
        %925 = vxpose.xlu0.b32.cont [3/16] 0.0, 128
        %926 = vxpose.xlu0.b32.cont [4/16] 0.0, 128
        %927 = vxpose.xlu0.b32.cont [5/16] 0.0, 128
        %928 = vxpose.xlu0.b32.cont [6/16] 0.0, 128
        %929 = vxpose.xlu0.b32.cont [7/16] 0.0, 128
        %930 = vxpose.xlu0.b32.cont [8/16] 0.0, 128
        %931 = vxpose.xlu0.b32.cont [9/16] 0.0, 128
        %932 = vxpose.xlu0.b32.cont [10/16] 0.0, 128
        %933 = vxpose.xlu0.b32.cont [11/16] 0.0, 128
        %934 = vxpose.xlu0.b32.cont [12/16] 0.0, 128
        %935 = vxpose.xlu0.b32.cont [13/16] 0.0, 128
        %936 = vxpose.xlu0.b32.cont [14/16] 0.0, 128
        %937 = vxpose.xlu0.b32.cont [15/16] 0.0, 128
        %938 = vxpose.xlu0.b32.end [16/16] 0.0, 128
        %v939 = vpop.trf.xlu0
        %v940 = vpop.trf.xlu0
        %v941 = vpop.trf.xlu0
        %v942 = vpop.trf.xlu0
        %v943 = vpop.trf.xlu0
        %v944 = vpop.trf.xlu0
        %v945 = vpop.trf.xlu0
        %v946 = vpop.trf.xlu0
        %v947 = vpop.trf.xlu0
        %v948 = vpop.trf.xlu0
        %v949 = vpop.trf.xlu0
        %v950 = vpop.trf.xlu0
        %v951 = vpop.trf.xlu0
        %v952 = vpop.trf.xlu0
        %v953 = vpop.trf.xlu0
        %v954 = vpop.trf.xlu0
        %vm967 = vcmask 1043456
        %v968 = vrot.slane %v728, 4
        %v969 = vrot.slane %v734, 4
        %v970 = vsel %vm967, %v968, %v969
        %v971 = vrot.slane %v730, 4
        %v972 = vrot.slane %v736, 4
        %v973 = vsel %vm967, %v971, %v972
        %v974 = vrot.slane %v811, 4
        %v975 = vrot.slane %v817, 4
        %v976 = vsel %vm967, %v974, %v975
        %v977 = vrot.slane %v813, 4
        %v978 = vrot.slane %v819, 4
        %v979 = vsel %vm967, %v977, %v978
        %v980 = vrot.slane %v740, 4
        %v981 = vsel %vm967, %v969, %v980
        %v982 = vrot.slane %v742, 4
        %v983 = vsel %vm967, %v972, %v982
        %v984 = vrot.slane %v823, 4
        %v985 = vsel %vm967, %v975, %v984
        %v986 = vrot.slane %v825, 4
        %v987 = vsel %vm967, %v978, %v986
        %v996 = vrot.slane %v728, 2
        %v997 = vrot.slane %v730, 2
        %v998 = vrot.slane %v811, 2
        %v999 = vrot.slane %v813, 2
        %vm1000 = vcmask 15360
        %v1002 = vsel %vm1000, %v843, 0
        %v1005 = vsel %vm1000, %v844, 0
        %v1008 = vsel %vm1000, %v845, 0
        %v1011 = vsel %vm1000, %v846, 0
        %v1014 = vsel %vm1000, %v847, 0
        %v1017 = vsel %vm1000, %v848, 0
        %v1020 = vsel %vm1000, %v849, 0
        %v1023 = vsel %vm1000, %v850, 0
        %v1026 = vsel %vm1000, %v851, 0
        %v1029 = vsel %vm1000, %v852, 0
        %v1032 = vsel %vm1000, %v853, 0
        %v1035 = vsel %vm1000, %v854, 0
        %v1038 = vsel %vm1000, %v855, 0
        %v1041 = vsel %vm1000, %v856, 0
        %v1044 = vsel %vm1000, %v857, 0
        %v1047 = vsel %vm1000, %v858, 0
        %v1050 = vsel %vm1000, %v875, 0
        %v1053 = vsel %vm1000, %v876, 0
        %v1056 = vsel %vm1000, %v877, 0
        %v1059 = vsel %vm1000, %v878, 0
        %v1062 = vsel %vm1000, %v879, 0
        %v1065 = vsel %vm1000, %v880, 0
        %v1068 = vsel %vm1000, %v881, 0
        %v1071 = vsel %vm1000, %v882, 0
        %v1074 = vsel %vm1000, %v883, 0
        %v1077 = vsel %vm1000, %v884, 0
        %v1080 = vsel %vm1000, %v885, 0
        %v1083 = vsel %vm1000, %v886, 0
        %v1086 = vsel %vm1000, %v887, 0
        %v1089 = vsel %vm1000, %v888, 0
        %v1092 = vsel %vm1000, %v889, 0
        %v1095 = vsel %vm1000, %v890, 0
        %vm1097 = vcmask 1041408
        %v1098 = vsel %vm1097, %v996, 0
        %v1100 = vsel %vm1097, %v997, 0
        %v1102 = vsel %vm1097, %v998, 0
        %v1104 = vsel %vm1097, %v999, 0
        %1106 = vmatprep.subr.mxu0 %v1100
        %1107 = vmatpush1.msra.mxu0 %v1098
        %1108 = vmatprep.subr.mxu0 0.0
        %1109 = vmatpush1.msra.mxu0 0.0
        %1110 = vmatprep.subr.mxu0 0.0
        %1111 = vmatpush1.msra.mxu0 0.0
        %1112 = vmatprep.subr.mxu0 0.0
        %1113 = vmatpush1.msra.mxu0 0.0
        %1114 = vmatprep.subr.mxu0 0.0
        %1115 = vmatpush1.msra.mxu0 0.0
        %1116 = vmatprep.subr.mxu0 0.0
        %1117 = vmatpush1.msra.mxu0 0.0
        %1118 = vmatprep.subr.mxu0 0.0
        %1119 = vmatpush1.msra.mxu0 0.0
        %1120 = vmatprep.subr.mxu0 0.0
        %1121 = vmatpush1.msra.mxu0 0.0
        %1122 = vmatprep.subr.mxu0 0.0
        %1123 = vmatpush1.msra.mxu0 0.0
        %1124 = vmatprep.subr.mxu0 0.0
        %1125 = vmatpush1.msra.mxu0 0.0
        %1126 = vmatprep.subr.mxu0 0.0
        %1127 = vmatpush1.msra.mxu0 0.0
        %1128 = vmatprep.subr.mxu0 0.0
        %1129 = vmatpush1.msra.mxu0 0.0
        %1130 = vmatprep.subr.mxu0 0.0
        %1131 = vmatpush1.msra.mxu0 0.0
        %1132 = vmatprep.subr.mxu0 0.0
        %1133 = vmatpush1.msra.mxu0 0.0
        %1134 = vmatprep.subr.mxu0 0.0
        %1135 = vmatpush1.msra.mxu0 0.0
        %1136 = vmatprep.subr.mxu0 0.0
        %1137 = vmatpush1.msra.mxu0 0.0
        %1138 = vmatprep.subr.mxu0 0.0
        %1139 = vmatpush1.msra.mxu0 0.0
        %1140 = vmatprep.subr.mxu0 0.0
        %1141 = vmatpush1.msra.mxu0 0.0
        %1142 = vmatprep.subr.mxu0 0.0
        %1143 = vmatpush1.msra.mxu0 0.0
        %1144 = vmatprep.subr.mxu0 0.0
        %1145 = vmatpush1.msra.mxu0 0.0
        %1146 = vmatprep.subr.mxu0 0.0
        %1147 = vmatpush1.msra.mxu0 0.0
        %1148 = vmatprep.subr.mxu0 0.0
        %1149 = vmatpush1.msra.mxu0 0.0
        %1150 = vmatprep.subr.mxu0 0.0
        %1151 = vmatpush1.msra.mxu0 0.0
        %1152 = vmatprep.subr.mxu0 0.0
        %1153 = vmatpush1.msra.mxu0 0.0
        %1154 = vmatprep.subr.mxu0 0.0
        %1155 = vmatpush1.msra.mxu0 0.0
        %1156 = vmatprep.subr.mxu0 0.0
        %1157 = vmatpush1.msra.mxu0 0.0
        %1158 = vmatprep.subr.mxu0 0.0
        %1159 = vmatpush1.msra.mxu0 0.0
        %1160 = vmatprep.subr.mxu0 0.0
        %1161 = vmatpush1.msra.mxu0 0.0
        %1162 = vmatprep.subr.mxu0 0.0
        %1163 = vmatpush1.msra.mxu0 0.0
        %1164 = vmatprep.subr.mxu0 0.0
        %1165 = vmatpush1.msra.mxu0 0.0
        %1166 = vmatprep.subr.mxu0 0.0
        %1167 = vmatpush1.msra.mxu0 0.0
        %1168 = vmatprep.subr.mxu0 0.0
        %1169 = vmatpush1.msra.mxu0 0.0
        %1170 = vmatprep.mubr.f32.mxu0 0.0
        %1171 = vmatmul.mubr.f32.gmra.mrb[0].mxu0 %v1002
        %v1172 = vpop.f32.mrb[0].mxu0
        %v1173 = vadd.f32 0.0, %v1172
        %v1174 = vpop.f32.mrb[0].mxu0
        %v1175 = vadd.f32 0.0, %v1174
        %1176 = vmatprep.mubr.f32.mxu0 0.0
        %1177 = vmatmul.mubr.f32.gmra.mrb[0].mxu0 %v1005
        %v1178 = vpop.f32.mrb[0].mxu0
        %v1179 = vadd.f32 0.0, %v1178
        %v1180 = vpop.f32.mrb[0].mxu0
        %v1181 = vadd.f32 0.0, %v1180
        %1182 = vmatprep.mubr.f32.mxu0 0.0
        %1183 = vmatmul.mubr.f32.gmra.mrb[0].mxu0 %v1008
        %v1184 = vpop.f32.mrb[0].mxu0
        %v1185 = vadd.f32 0.0, %v1184
        %v1186 = vpop.f32.mrb[0].mxu0
        %v1187 = vadd.f32 0.0, %v1186
        %1188 = vmatprep.mubr.f32.mxu0 0.0
        %1189 = vmatmul.mubr.f32.gmra.mrb[0].mxu0 %v1011
        %v1190 = vpop.f32.mrb[0].mxu0
        %v1191 = vadd.f32 0.0, %v1190
        %v1192 = vpop.f32.mrb[0].mxu0
        %v1193 = vadd.f32 0.0, %v1192
        %1194 = vmatprep.mubr.f32.mxu0 0.0
        %1195 = vmatmul.mubr.f32.gmra.mrb[0].mxu0 %v1014
        %v1196 = vpop.f32.mrb[0].mxu0
        %v1197 = vadd.f32 0.0, %v1196
        %v1198 = vpop.f32.mrb[0].mxu0
        %v1199 = vadd.f32 0.0, %v1198
        %1200 = vmatprep.mubr.f32.mxu0 0.0
        %1201 = vmatmul.mubr.f32.gmra.mrb[0].mxu0 %v1017
        %v1202 = vpop.f32.mrb[0].mxu0
        %v1203 = vadd.f32 0.0, %v1202
        %v1204 = vpop.f32.mrb[0].mxu0
        %v1205 = vadd.f32 0.0, %v1204
        %1206 = vmatprep.mubr.f32.mxu0 0.0
        %1207 = vmatmul.mubr.f32.gmra.mrb[0].mxu0 %v1020
        %v1208 = vpop.f32.mrb[0].mxu0
        %v1209 = vadd.f32 0.0, %v1208
        %v1210 = vpop.f32.mrb[0].mxu0
        %v1211 = vadd.f32 0.0, %v1210
        %1212 = vmatprep.mubr.f32.mxu0 0.0
        %1213 = vmatmul.mubr.f32.gmra.mrb[0].mxu0 %v1023
        %v1214 = vpop.f32.mrb[0].mxu0
        %v1215 = vadd.f32 0.0, %v1214
        %v1216 = vpop.f32.mrb[0].mxu0
        %v1217 = vadd.f32 0.0, %v1216
        %1218 = vmatprep.mubr.f32.mxu0 0.0
        %1219 = vmatmul.mubr.f32.gmra.mrb[0].mxu0 %v1026
        %v1220 = vpop.f32.mrb[0].mxu0
        %v1221 = vadd.f32 0.0, %v1220
        %v1222 = vpop.f32.mrb[0].mxu0
        %v1223 = vadd.f32 0.0, %v1222
        %1224 = vmatprep.mubr.f32.mxu0 0.0
        %1225 = vmatmul.mubr.f32.gmra.mrb[0].mxu0 %v1029
        %v1226 = vpop.f32.mrb[0].mxu0
        %v1227 = vadd.f32 0.0, %v1226
        %v1228 = vpop.f32.mrb[0].mxu0
        %v1229 = vadd.f32 0.0, %v1228
        %1230 = vmatprep.mubr.f32.mxu0 0.0
        %1231 = vmatmul.mubr.f32.gmra.mrb[0].mxu0 %v1032
        %v1232 = vpop.f32.mrb[0].mxu0
        %v1233 = vadd.f32 0.0, %v1232
        %v1234 = vpop.f32.mrb[0].mxu0
        %v1235 = vadd.f32 0.0, %v1234
        %1236 = vmatprep.mubr.f32.mxu0 0.0
        %1237 = vmatmul.mubr.f32.gmra.mrb[0].mxu0 %v1035
        %v1238 = vpop.f32.mrb[0].mxu0
        %v1239 = vadd.f32 0.0, %v1238
        %v1240 = vpop.f32.mrb[0].mxu0
        %v1241 = vadd.f32 0.0, %v1240
        %1242 = vmatprep.mubr.f32.mxu0 0.0
        %1243 = vmatmul.mubr.f32.gmra.mrb[0].mxu0 %v1038
        %v1244 = vpop.f32.mrb[0].mxu0
        %v1245 = vadd.f32 0.0, %v1244
        %v1246 = vpop.f32.mrb[0].mxu0
        %v1247 = vadd.f32 0.0, %v1246
        %1248 = vmatprep.mubr.f32.mxu0 0.0
        %1249 = vmatmul.mubr.f32.gmra.mrb[0].mxu0 %v1041
        %v1250 = vpop.f32.mrb[0].mxu0
        %v1251 = vadd.f32 0.0, %v1250
        %v1252 = vpop.f32.mrb[0].mxu0
        %v1253 = vadd.f32 0.0, %v1252
        %1254 = vmatprep.mubr.f32.mxu0 0.0
        %1255 = vmatmul.mubr.f32.gmra.mrb[0].mxu0 %v1044
        %v1256 = vpop.f32.mrb[0].mxu0
        %v1257 = vadd.f32 0.0, %v1256
        %v1258 = vpop.f32.mrb[0].mxu0
        %v1259 = vadd.f32 0.0, %v1258
        %1260 = vmatprep.mubr.f32.mxu0 0.0
        %1261 = vmatmul.mubr.f32.gmra.mrb[0].mxu0 %v1047
        %v1262 = vpop.f32.mrb[0].mxu0
        %v1263 = vadd.f32 0.0, %v1262
        %v1264 = vpop.f32.mrb[0].mxu0
        %v1265 = vadd.f32 0.0, %v1264
        %1266 = vmatprep.mubr.f32.mxu0 0.0
        %1267 = vmatmul.mubr.f32.gmra.mrb[0].mxu0 %v1050
        %v1268 = vpop.f32.mrb[0].mxu0
        %v1269 = vadd.f32 0.0, %v1268
        %v1270 = vpop.f32.mrb[0].mxu0
        %v1271 = vadd.f32 0.0, %v1270
        %1272 = vmatprep.mubr.f32.mxu0 0.0
        %1273 = vmatmul.mubr.f32.gmra.mrb[0].mxu0 %v1053
        %v1274 = vpop.f32.mrb[0].mxu0
        %v1275 = vadd.f32 0.0, %v1274
        %v1276 = vpop.f32.mrb[0].mxu0
        %v1277 = vadd.f32 0.0, %v1276
        %1278 = vmatprep.mubr.f32.mxu0 0.0
        %1279 = vmatmul.mubr.f32.gmra.mrb[0].mxu0 %v1056
        %v1280 = vpop.f32.mrb[0].mxu0
        %v1281 = vadd.f32 0.0, %v1280
        %v1282 = vpop.f32.mrb[0].mxu0
        %v1283 = vadd.f32 0.0, %v1282
        %1284 = vmatprep.mubr.f32.mxu0 0.0
        %1285 = vmatmul.mubr.f32.gmra.mrb[0].mxu0 %v1059
        %v1286 = vpop.f32.mrb[0].mxu0
        %v1287 = vadd.f32 0.0, %v1286
        %v1288 = vpop.f32.mrb[0].mxu0
        %v1289 = vadd.f32 0.0, %v1288
        %1290 = vmatprep.mubr.f32.mxu0 0.0
        %1291 = vmatmul.mubr.f32.gmra.mrb[0].mxu0 %v1062
        %v1292 = vpop.f32.mrb[0].mxu0
        %v1293 = vadd.f32 0.0, %v1292
        %v1294 = vpop.f32.mrb[0].mxu0
        %v1295 = vadd.f32 0.0, %v1294
        %1296 = vmatprep.mubr.f32.mxu0 0.0
        %1297 = vmatmul.mubr.f32.gmra.mrb[0].mxu0 %v1065
        %v1298 = vpop.f32.mrb[0].mxu0
        %v1299 = vadd.f32 0.0, %v1298
        %v1300 = vpop.f32.mrb[0].mxu0
        %v1301 = vadd.f32 0.0, %v1300
        %1302 = vmatprep.mubr.f32.mxu0 0.0
        %1303 = vmatmul.mubr.f32.gmra.mrb[0].mxu0 %v1068
        %v1304 = vpop.f32.mrb[0].mxu0
        %v1305 = vadd.f32 0.0, %v1304
        %v1306 = vpop.f32.mrb[0].mxu0
        %v1307 = vadd.f32 0.0, %v1306
        %1308 = vmatprep.mubr.f32.mxu0 0.0
        %1309 = vmatmul.mubr.f32.gmra.mrb[0].mxu0 %v1071
        %v1310 = vpop.f32.mrb[0].mxu0
        %v1311 = vadd.f32 0.0, %v1310
        %v1312 = vpop.f32.mrb[0].mxu0
        %v1313 = vadd.f32 0.0, %v1312
        %1314 = vmatprep.mubr.f32.mxu0 0.0
        %1315 = vmatmul.mubr.f32.gmra.mrb[0].mxu0 %v1074
        %v1316 = vpop.f32.mrb[0].mxu0
        %v1317 = vadd.f32 0.0, %v1316
        %v1318 = vpop.f32.mrb[0].mxu0
        %v1319 = vadd.f32 0.0, %v1318
        %1320 = vmatprep.mubr.f32.mxu0 0.0
        %1321 = vmatmul.mubr.f32.gmra.mrb[0].mxu0 %v1077
        %v1322 = vpop.f32.mrb[0].mxu0
        %v1323 = vadd.f32 0.0, %v1322
        %v1324 = vpop.f32.mrb[0].mxu0
        %v1325 = vadd.f32 0.0, %v1324
        %1326 = vmatprep.mubr.f32.mxu0 0.0
        %1327 = vmatmul.mubr.f32.gmra.mrb[0].mxu0 %v1080
        %v1328 = vpop.f32.mrb[0].mxu0
        %v1329 = vadd.f32 0.0, %v1328
        %v1330 = vpop.f32.mrb[0].mxu0
        %v1331 = vadd.f32 0.0, %v1330
        %1332 = vmatprep.mubr.f32.mxu0 0.0
        %1333 = vmatmul.mubr.f32.gmra.mrb[0].mxu0 %v1083
        %v1334 = vpop.f32.mrb[0].mxu0
        %v1335 = vadd.f32 0.0, %v1334
        %v1336 = vpop.f32.mrb[0].mxu0
        %v1337 = vadd.f32 0.0, %v1336
        %1338 = vmatprep.mubr.f32.mxu0 0.0
        %1339 = vmatmul.mubr.f32.gmra.mrb[0].mxu0 %v1086
        %v1340 = vpop.f32.mrb[0].mxu0
        %v1341 = vadd.f32 0.0, %v1340
        %v1342 = vpop.f32.mrb[0].mxu0
        %v1343 = vadd.f32 0.0, %v1342
        %1344 = vmatprep.mubr.f32.mxu0 0.0
        %1345 = vmatmul.mubr.f32.gmra.mrb[0].mxu0 %v1089
        %v1346 = vpop.f32.mrb[0].mxu0
        %v1347 = vadd.f32 0.0, %v1346
        %v1348 = vpop.f32.mrb[0].mxu0
        %v1349 = vadd.f32 0.0, %v1348
        %1350 = vmatprep.mubr.f32.mxu0 0.0
        %1351 = vmatmul.mubr.f32.gmra.mrb[0].mxu0 %v1092
        %v1352 = vpop.f32.mrb[0].mxu0
        %v1353 = vadd.f32 0.0, %v1352
        %v1354 = vpop.f32.mrb[0].mxu0
        %v1355 = vadd.f32 0.0, %v1354
        %1356 = vmatprep.mubr.f32.mxu0 0.0
        %1357 = vmatmul.mubr.f32.gmra.mrb[0].mxu0 %v1095
        %v1358 = vpop.f32.mrb[0].mxu0
        %v1359 = vadd.f32 0.0, %v1358
        %v1360 = vpop.f32.mrb[0].mxu0
        %v1361 = vadd.f32 0.0, %v1360
        %1362 = vdwg.mxu0
        %1363 = vmatprep.subr.mxu0 %v1104
        %1364 = vmatpush1.msra.mxu0 %v1102
        %1365 = vmatprep.subr.mxu0 0.0
        %1366 = vmatpush1.msra.mxu0 0.0
        %1367 = vmatprep.subr.mxu0 0.0
        %1368 = vmatpush1.msra.mxu0 0.0
        %1369 = vmatprep.subr.mxu0 0.0
        %1370 = vmatpush1.msra.mxu0 0.0
        %1371 = vmatprep.subr.mxu0 0.0
        %1372 = vmatpush1.msra.mxu0 0.0
        %1373 = vmatprep.subr.mxu0 0.0
        %1374 = vmatpush1.msra.mxu0 0.0
        %1375 = vmatprep.subr.mxu0 0.0
        %1376 = vmatpush1.msra.mxu0 0.0
        %1377 = vmatprep.subr.mxu0 0.0
        %1378 = vmatpush1.msra.mxu0 0.0
        %1379 = vmatprep.subr.mxu0 0.0
        %1380 = vmatpush1.msra.mxu0 0.0
        %1381 = vmatprep.subr.mxu0 0.0
        %1382 = vmatpush1.msra.mxu0 0.0
        %1383 = vmatprep.subr.mxu0 0.0
        %1384 = vmatpush1.msra.mxu0 0.0
        %1385 = vmatprep.subr.mxu0 0.0
        %1386 = vmatpush1.msra.mxu0 0.0
        %1387 = vmatprep.subr.mxu0 0.0
        %1388 = vmatpush1.msra.mxu0 0.0
        %1389 = vmatprep.subr.mxu0 0.0
        %1390 = vmatpush1.msra.mxu0 0.0
        %1391 = vmatprep.subr.mxu0 0.0
        %1392 = vmatpush1.msra.mxu0 0.0
        %1393 = vmatprep.subr.mxu0 0.0
        %1394 = vmatpush1.msra.mxu0 0.0
        %1395 = vmatprep.subr.mxu0 0.0
        %1396 = vmatpush1.msra.mxu0 0.0
        %1397 = vmatprep.subr.mxu0 0.0
        %1398 = vmatpush1.msra.mxu0 0.0
        %1399 = vmatprep.subr.mxu0 0.0
        %1400 = vmatpush1.msra.mxu0 0.0
        %1401 = vmatprep.subr.mxu0 0.0
        %1402 = vmatpush1.msra.mxu0 0.0
        %1403 = vmatprep.subr.mxu0 0.0
        %1404 = vmatpush1.msra.mxu0 0.0
        %1405 = vmatprep.subr.mxu0 0.0
        %1406 = vmatpush1.msra.mxu0 0.0
        %1407 = vmatprep.subr.mxu0 0.0
        %1408 = vmatpush1.msra.mxu0 0.0
        %1409 = vmatprep.subr.mxu0 0.0
        %1410 = vmatpush1.msra.mxu0 0.0
        %1411 = vmatprep.subr.mxu0 0.0
        %1412 = vmatpush1.msra.mxu0 0.0
        %1413 = vmatprep.subr.mxu0 0.0
        %1414 = vmatpush1.msra.mxu0 0.0
        %1415 = vmatprep.subr.mxu0 0.0
        %1416 = vmatpush1.msra.mxu0 0.0
        %1417 = vmatprep.subr.mxu0 0.0
        %1418 = vmatpush1.msra.mxu0 0.0
        %1419 = vmatprep.subr.mxu0 0.0
        %1420 = vmatpush1.msra.mxu0 0.0
        %1421 = vmatprep.subr.mxu0 0.0
        %1422 = vmatpush1.msra.mxu0 0.0
        %1423 = vmatprep.subr.mxu0 0.0
        %1424 = vmatpush1.msra.mxu0 0.0
        %1425 = vmatprep.subr.mxu0 0.0
        %1426 = vmatpush1.msra.mxu0 0.0
        %1427 = vmatprep.mubr.f32.mxu0 0.0
        %1428 = vmatmul.mubr.f32.gmra.mrb[0].mxu0 %v1002
        %v1429 = vpop.f32.mrb[0].mxu0
        %v1430 = vadd.f32 0.0, %v1429
        %v1431 = vpop.f32.mrb[0].mxu0
        %v1432 = vadd.f32 0.0, %v1431
        %1433 = vmatprep.mubr.f32.mxu0 0.0
        %1434 = vmatmul.mubr.f32.gmra.mrb[0].mxu0 %v1005
        %v1435 = vpop.f32.mrb[0].mxu0
        %v1436 = vadd.f32 0.0, %v1435
        %v1437 = vpop.f32.mrb[0].mxu0
        %v1438 = vadd.f32 0.0, %v1437
        %1439 = vmatprep.mubr.f32.mxu0 0.0
        %1440 = vmatmul.mubr.f32.gmra.mrb[0].mxu0 %v1008
        %v1441 = vpop.f32.mrb[0].mxu0
        %v1442 = vadd.f32 0.0, %v1441
        %v1443 = vpop.f32.mrb[0].mxu0
        %v1444 = vadd.f32 0.0, %v1443
        %1445 = vmatprep.mubr.f32.mxu0 0.0
        %1446 = vmatmul.mubr.f32.gmra.mrb[0].mxu0 %v1011
        %v1447 = vpop.f32.mrb[0].mxu0
        %v1448 = vadd.f32 0.0, %v1447
        %v1449 = vpop.f32.mrb[0].mxu0
        %v1450 = vadd.f32 0.0, %v1449
        %1451 = vmatprep.mubr.f32.mxu0 0.0
        %1452 = vmatmul.mubr.f32.gmra.mrb[0].mxu0 %v1014
        %v1453 = vpop.f32.mrb[0].mxu0
        %v1454 = vadd.f32 0.0, %v1453
        %v1455 = vpop.f32.mrb[0].mxu0
        %v1456 = vadd.f32 0.0, %v1455
        %1457 = vmatprep.mubr.f32.mxu0 0.0
        %1458 = vmatmul.mubr.f32.gmra.mrb[0].mxu0 %v1017
        %v1459 = vpop.f32.mrb[0].mxu0
        %v1460 = vadd.f32 0.0, %v1459
        %v1461 = vpop.f32.mrb[0].mxu0
        %v1462 = vadd.f32 0.0, %v1461
        %1463 = vmatprep.mubr.f32.mxu0 0.0
        %1464 = vmatmul.mubr.f32.gmra.mrb[0].mxu0 %v1020
        %v1465 = vpop.f32.mrb[0].mxu0
        %v1466 = vadd.f32 0.0, %v1465
        %v1467 = vpop.f32.mrb[0].mxu0
        %v1468 = vadd.f32 0.0, %v1467
        %1469 = vmatprep.mubr.f32.mxu0 0.0
        %1470 = vmatmul.mubr.f32.gmra.mrb[0].mxu0 %v1023
        %v1471 = vpop.f32.mrb[0].mxu0
        %v1472 = vadd.f32 0.0, %v1471
        %v1473 = vpop.f32.mrb[0].mxu0
        %v1474 = vadd.f32 0.0, %v1473
        %1475 = vmatprep.mubr.f32.mxu0 0.0
        %1476 = vmatmul.mubr.f32.gmra.mrb[0].mxu0 %v1026
        %v1477 = vpop.f32.mrb[0].mxu0
        %v1478 = vadd.f32 0.0, %v1477
        %v1479 = vpop.f32.mrb[0].mxu0
        %v1480 = vadd.f32 0.0, %v1479
        %1481 = vmatprep.mubr.f32.mxu0 0.0
        %1482 = vmatmul.mubr.f32.gmra.mrb[0].mxu0 %v1029
        %v1483 = vpop.f32.mrb[0].mxu0
        %v1484 = vadd.f32 0.0, %v1483
        %v1485 = vpop.f32.mrb[0].mxu0
        %v1486 = vadd.f32 0.0, %v1485
        %1487 = vmatprep.mubr.f32.mxu0 0.0
        %1488 = vmatmul.mubr.f32.gmra.mrb[0].mxu0 %v1032
        %v1489 = vpop.f32.mrb[0].mxu0
        %v1490 = vadd.f32 0.0, %v1489
        %v1491 = vpop.f32.mrb[0].mxu0
        %v1492 = vadd.f32 0.0, %v1491
        %1493 = vmatprep.mubr.f32.mxu0 0.0
        %1494 = vmatmul.mubr.f32.gmra.mrb[0].mxu0 %v1035
        %v1495 = vpop.f32.mrb[0].mxu0
        %v1496 = vadd.f32 0.0, %v1495
        %v1497 = vpop.f32.mrb[0].mxu0
        %v1498 = vadd.f32 0.0, %v1497
        %1499 = vmatprep.mubr.f32.mxu0 0.0
        %1500 = vmatmul.mubr.f32.gmra.mrb[0].mxu0 %v1038
        %v1501 = vpop.f32.mrb[0].mxu0
        %v1502 = vadd.f32 0.0, %v1501
        %v1503 = vpop.f32.mrb[0].mxu0
        %v1504 = vadd.f32 0.0, %v1503
        %1505 = vmatprep.mubr.f32.mxu0 0.0
        %1506 = vmatmul.mubr.f32.gmra.mrb[0].mxu0 %v1041
        %v1507 = vpop.f32.mrb[0].mxu0
        %v1508 = vadd.f32 0.0, %v1507
        %v1509 = vpop.f32.mrb[0].mxu0
        %v1510 = vadd.f32 0.0, %v1509
        %1511 = vmatprep.mubr.f32.mxu0 0.0
        %1512 = vmatmul.mubr.f32.gmra.mrb[0].mxu0 %v1044
        %v1513 = vpop.f32.mrb[0].mxu0
        %v1514 = vadd.f32 0.0, %v1513
        %v1515 = vpop.f32.mrb[0].mxu0
        %v1516 = vadd.f32 0.0, %v1515
        %1517 = vmatprep.mubr.f32.mxu0 0.0
        %1518 = vmatmul.mubr.f32.gmra.mrb[0].mxu0 %v1047
        %v1519 = vpop.f32.mrb[0].mxu0
        %v1520 = vadd.f32 0.0, %v1519
        %v1521 = vpop.f32.mrb[0].mxu0
        %v1522 = vadd.f32 0.0, %v1521
        %1523 = vmatprep.mubr.f32.mxu0 0.0
        %1524 = vmatmul.mubr.f32.gmra.mrb[0].mxu0 %v1050
        %v1525 = vpop.f32.mrb[0].mxu0
        %v1526 = vadd.f32 0.0, %v1525
        %v1527 = vpop.f32.mrb[0].mxu0
        %v1528 = vadd.f32 0.0, %v1527
        %1529 = vmatprep.mubr.f32.mxu0 0.0
        %1530 = vmatmul.mubr.f32.gmra.mrb[0].mxu0 %v1053
        %v1531 = vpop.f32.mrb[0].mxu0
        %v1532 = vadd.f32 0.0, %v1531
        %v1533 = vpop.f32.mrb[0].mxu0
        %v1534 = vadd.f32 0.0, %v1533
        %1535 = vmatprep.mubr.f32.mxu0 0.0
        %1536 = vmatmul.mubr.f32.gmra.mrb[0].mxu0 %v1056
        %v1537 = vpop.f32.mrb[0].mxu0
        %v1538 = vadd.f32 0.0, %v1537
        %v1539 = vpop.f32.mrb[0].mxu0
        %v1540 = vadd.f32 0.0, %v1539
        %1541 = vmatprep.mubr.f32.mxu0 0.0
        %1542 = vmatmul.mubr.f32.gmra.mrb[0].mxu0 %v1059
        %v1543 = vpop.f32.mrb[0].mxu0
        %v1544 = vadd.f32 0.0, %v1543
        %v1545 = vpop.f32.mrb[0].mxu0
        %v1546 = vadd.f32 0.0, %v1545
        %1547 = vmatprep.mubr.f32.mxu0 0.0
        %1548 = vmatmul.mubr.f32.gmra.mrb[0].mxu0 %v1062
        %v1549 = vpop.f32.mrb[0].mxu0
        %v1550 = vadd.f32 0.0, %v1549
        %v1551 = vpop.f32.mrb[0].mxu0
        %v1552 = vadd.f32 0.0, %v1551
        %1553 = vmatprep.mubr.f32.mxu0 0.0
        %1554 = vmatmul.mubr.f32.gmra.mrb[0].mxu0 %v1065
        %v1555 = vpop.f32.mrb[0].mxu0
        %v1556 = vadd.f32 0.0, %v1555
        %v1557 = vpop.f32.mrb[0].mxu0
        %v1558 = vadd.f32 0.0, %v1557
        %1559 = vmatprep.mubr.f32.mxu0 0.0
        %1560 = vmatmul.mubr.f32.gmra.mrb[0].mxu0 %v1068
        %v1561 = vpop.f32.mrb[0].mxu0
        %v1562 = vadd.f32 0.0, %v1561
        %v1563 = vpop.f32.mrb[0].mxu0
        %v1564 = vadd.f32 0.0, %v1563
        %1565 = vmatprep.mubr.f32.mxu0 0.0
        %1566 = vmatmul.mubr.f32.gmra.mrb[0].mxu0 %v1071
        %v1567 = vpop.f32.mrb[0].mxu0
        %v1568 = vadd.f32 0.0, %v1567
        %v1569 = vpop.f32.mrb[0].mxu0
        %v1570 = vadd.f32 0.0, %v1569
        %1571 = vmatprep.mubr.f32.mxu0 0.0
        %1572 = vmatmul.mubr.f32.gmra.mrb[0].mxu0 %v1074
        %v1573 = vpop.f32.mrb[0].mxu0
        %v1574 = vadd.f32 0.0, %v1573
        %v1575 = vpop.f32.mrb[0].mxu0
        %v1576 = vadd.f32 0.0, %v1575
        %1577 = vmatprep.mubr.f32.mxu0 0.0
        %1578 = vmatmul.mubr.f32.gmra.mrb[0].mxu0 %v1077
        %v1579 = vpop.f32.mrb[0].mxu0
        %v1580 = vadd.f32 0.0, %v1579
        %v1581 = vpop.f32.mrb[0].mxu0
        %v1582 = vadd.f32 0.0, %v1581
        %1583 = vmatprep.mubr.f32.mxu0 0.0
        %1584 = vmatmul.mubr.f32.gmra.mrb[0].mxu0 %v1080
        %v1585 = vpop.f32.mrb[0].mxu0
        %v1586 = vadd.f32 0.0, %v1585
        %v1587 = vpop.f32.mrb[0].mxu0
        %v1588 = vadd.f32 0.0, %v1587
        %1589 = vmatprep.mubr.f32.mxu0 0.0
        %1590 = vmatmul.mubr.f32.gmra.mrb[0].mxu0 %v1083
        %v1591 = vpop.f32.mrb[0].mxu0
        %v1592 = vadd.f32 0.0, %v1591
        %v1593 = vpop.f32.mrb[0].mxu0
        %v1594 = vadd.f32 0.0, %v1593
        %1595 = vmatprep.mubr.f32.mxu0 0.0
        %1596 = vmatmul.mubr.f32.gmra.mrb[0].mxu0 %v1086
        %v1597 = vpop.f32.mrb[0].mxu0
        %v1598 = vadd.f32 0.0, %v1597
        %v1599 = vpop.f32.mrb[0].mxu0
        %v1600 = vadd.f32 0.0, %v1599
        %1601 = vmatprep.mubr.f32.mxu0 0.0
        %1602 = vmatmul.mubr.f32.gmra.mrb[0].mxu0 %v1089
        %v1603 = vpop.f32.mrb[0].mxu0
        %v1604 = vadd.f32 0.0, %v1603
        %v1605 = vpop.f32.mrb[0].mxu0
        %v1606 = vadd.f32 0.0, %v1605
        %1607 = vmatprep.mubr.f32.mxu0 0.0
        %1608 = vmatmul.mubr.f32.gmra.mrb[0].mxu0 %v1092
        %v1609 = vpop.f32.mrb[0].mxu0
        %v1610 = vadd.f32 0.0, %v1609
        %v1611 = vpop.f32.mrb[0].mxu0
        %v1612 = vadd.f32 0.0, %v1611
        %1613 = vmatprep.mubr.f32.mxu0 0.0
        %1614 = vmatmul.mubr.f32.gmra.mrb[0].mxu0 %v1095
        %v1615 = vpop.f32.mrb[0].mxu0
        %v1616 = vadd.f32 0.0, %v1615
        %v1617 = vpop.f32.mrb[0].mxu0
        %v1618 = vadd.f32 0.0, %v1617
        %1619 = vdwg.mxu0
        %v1620 = vmax.f32 %v1173, %v1175
        %v1621 = vmax.f32 %v1620, %v1430
        %v1622 = vmax.f32 %v1621, %v1432
        %1623 = vmax.xlane.f32.xlu0 %v1622
        %v1624 = vpop.xlane.xlu0 %1623
        %v1625 = vmax.f32 %v1179, %v1181
        %v1626 = vmax.f32 %v1625, %v1436
        %v1627 = vmax.f32 %v1626, %v1438
        %1628 = vmax.xlane.f32.xlu0 %v1627
        %v1629 = vpop.xlane.xlu0 %1628
        %v1630 = vmax.f32 %v1185, %v1187
        %v1631 = vmax.f32 %v1630, %v1442
        %v1632 = vmax.f32 %v1631, %v1444
        %1633 = vmax.xlane.f32.xlu0 %v1632
        %v1634 = vpop.xlane.xlu0 %1633
        %v1635 = vmax.f32 %v1191, %v1193
        %v1636 = vmax.f32 %v1635, %v1448
        %v1637 = vmax.f32 %v1636, %v1450
        %1638 = vmax.xlane.f32.xlu0 %v1637
        %v1639 = vpop.xlane.xlu0 %1638
        %v1640 = vmax.f32 %v1197, %v1199
        %v1641 = vmax.f32 %v1640, %v1454
        %v1642 = vmax.f32 %v1641, %v1456
        %1643 = vmax.xlane.f32.xlu0 %v1642
        %v1644 = vpop.xlane.xlu0 %1643
        %v1645 = vmax.f32 %v1203, %v1205
        %v1646 = vmax.f32 %v1645, %v1460
        %v1647 = vmax.f32 %v1646, %v1462
        %1648 = vmax.xlane.f32.xlu0 %v1647
        %v1649 = vpop.xlane.xlu0 %1648
        %v1650 = vmax.f32 %v1209, %v1211
        %v1651 = vmax.f32 %v1650, %v1466
        %v1652 = vmax.f32 %v1651, %v1468
        %1653 = vmax.xlane.f32.xlu0 %v1652
        %v1654 = vpop.xlane.xlu0 %1653
        %v1655 = vmax.f32 %v1215, %v1217
        %v1656 = vmax.f32 %v1655, %v1472
        %v1657 = vmax.f32 %v1656, %v1474
        %1658 = vmax.xlane.f32.xlu0 %v1657
        %v1659 = vpop.xlane.xlu0 %1658
        %v1660 = vmax.f32 %v1221, %v1223
        %v1661 = vmax.f32 %v1660, %v1478
        %v1662 = vmax.f32 %v1661, %v1480
        %1663 = vmax.xlane.f32.xlu0 %v1662
        %v1664 = vpop.xlane.xlu0 %1663
        %v1665 = vmax.f32 %v1227, %v1229
        %v1666 = vmax.f32 %v1665, %v1484
        %v1667 = vmax.f32 %v1666, %v1486
        %1668 = vmax.xlane.f32.xlu0 %v1667
        %v1669 = vpop.xlane.xlu0 %1668
        %v1670 = vmax.f32 %v1233, %v1235
        %v1671 = vmax.f32 %v1670, %v1490
        %v1672 = vmax.f32 %v1671, %v1492
        %1673 = vmax.xlane.f32.xlu0 %v1672
        %v1674 = vpop.xlane.xlu0 %1673
        %v1675 = vmax.f32 %v1239, %v1241
        %v1676 = vmax.f32 %v1675, %v1496
        %v1677 = vmax.f32 %v1676, %v1498
        %1678 = vmax.xlane.f32.xlu0 %v1677
        %v1679 = vpop.xlane.xlu0 %1678
        %v1680 = vmax.f32 %v1245, %v1247
        %v1681 = vmax.f32 %v1680, %v1502
        %v1682 = vmax.f32 %v1681, %v1504
        %1683 = vmax.xlane.f32.xlu0 %v1682
        %v1684 = vpop.xlane.xlu0 %1683
        %v1685 = vmax.f32 %v1251, %v1253
        %v1686 = vmax.f32 %v1685, %v1508
        %v1687 = vmax.f32 %v1686, %v1510
        %1688 = vmax.xlane.f32.xlu0 %v1687
        %v1689 = vpop.xlane.xlu0 %1688
        %v1690 = vmax.f32 %v1257, %v1259
        %v1691 = vmax.f32 %v1690, %v1514
        %v1692 = vmax.f32 %v1691, %v1516
        %1693 = vmax.xlane.f32.xlu0 %v1692
        %v1694 = vpop.xlane.xlu0 %1693
        %v1695 = vmax.f32 %v1263, %v1265
        %v1696 = vmax.f32 %v1695, %v1520
        %v1697 = vmax.f32 %v1696, %v1522
        %1698 = vmax.xlane.f32.xlu0 %v1697
        %v1699 = vpop.xlane.xlu0 %1698
        %v1700 = vmax.f32 %v1269, %v1271
        %v1701 = vmax.f32 %v1700, %v1526
        %v1702 = vmax.f32 %v1701, %v1528
        %1703 = vmax.xlane.f32.xlu0 %v1702
        %v1704 = vpop.xlane.xlu0 %1703
        %v1705 = vmax.f32 %v1275, %v1277
        %v1706 = vmax.f32 %v1705, %v1532
        %v1707 = vmax.f32 %v1706, %v1534
        %1708 = vmax.xlane.f32.xlu0 %v1707
        %v1709 = vpop.xlane.xlu0 %1708
        %v1710 = vmax.f32 %v1281, %v1283
        %v1711 = vmax.f32 %v1710, %v1538
        %v1712 = vmax.f32 %v1711, %v1540
        %1713 = vmax.xlane.f32.xlu0 %v1712
        %v1714 = vpop.xlane.xlu0 %1713
        %v1715 = vmax.f32 %v1287, %v1289
        %v1716 = vmax.f32 %v1715, %v1544
        %v1717 = vmax.f32 %v1716, %v1546
        %1718 = vmax.xlane.f32.xlu0 %v1717
        %v1719 = vpop.xlane.xlu0 %1718
        %v1720 = vmax.f32 %v1293, %v1295
        %v1721 = vmax.f32 %v1720, %v1550
        %v1722 = vmax.f32 %v1721, %v1552
        %1723 = vmax.xlane.f32.xlu0 %v1722
        %v1724 = vpop.xlane.xlu0 %1723
        %v1725 = vmax.f32 %v1299, %v1301
        %v1726 = vmax.f32 %v1725, %v1556
        %v1727 = vmax.f32 %v1726, %v1558
        %1728 = vmax.xlane.f32.xlu0 %v1727
        %v1729 = vpop.xlane.xlu0 %1728
        %v1730 = vmax.f32 %v1305, %v1307
        %v1731 = vmax.f32 %v1730, %v1562
        %v1732 = vmax.f32 %v1731, %v1564
        %1733 = vmax.xlane.f32.xlu0 %v1732
        %v1734 = vpop.xlane.xlu0 %1733
        %v1735 = vmax.f32 %v1311, %v1313
        %v1736 = vmax.f32 %v1735, %v1568
        %v1737 = vmax.f32 %v1736, %v1570
        %1738 = vmax.xlane.f32.xlu0 %v1737
        %v1739 = vpop.xlane.xlu0 %1738
        %v1740 = vmax.f32 %v1317, %v1319
        %v1741 = vmax.f32 %v1740, %v1574
        %v1742 = vmax.f32 %v1741, %v1576
        %1743 = vmax.xlane.f32.xlu0 %v1742
        %v1744 = vpop.xlane.xlu0 %1743
        %v1745 = vmax.f32 %v1323, %v1325
        %v1746 = vmax.f32 %v1745, %v1580
        %v1747 = vmax.f32 %v1746, %v1582
        %1748 = vmax.xlane.f32.xlu0 %v1747
        %v1749 = vpop.xlane.xlu0 %1748
        %v1750 = vmax.f32 %v1329, %v1331
        %v1751 = vmax.f32 %v1750, %v1586
        %v1752 = vmax.f32 %v1751, %v1588
        %1753 = vmax.xlane.f32.xlu0 %v1752
        %v1754 = vpop.xlane.xlu0 %1753
        %v1755 = vmax.f32 %v1335, %v1337
        %v1756 = vmax.f32 %v1755, %v1592
        %v1757 = vmax.f32 %v1756, %v1594
        %1758 = vmax.xlane.f32.xlu0 %v1757
        %v1759 = vpop.xlane.xlu0 %1758
        %v1760 = vmax.f32 %v1341, %v1343
        %v1761 = vmax.f32 %v1760, %v1598
        %v1762 = vmax.f32 %v1761, %v1600
        %1763 = vmax.xlane.f32.xlu0 %v1762
        %v1764 = vpop.xlane.xlu0 %1763
        %v1765 = vmax.f32 %v1347, %v1349
        %v1766 = vmax.f32 %v1765, %v1604
        %v1767 = vmax.f32 %v1766, %v1606
        %1768 = vmax.xlane.f32.xlu0 %v1767
        %v1769 = vpop.xlane.xlu0 %1768
        %v1770 = vmax.f32 %v1353, %v1355
        %v1771 = vmax.f32 %v1770, %v1610
        %v1772 = vmax.f32 %v1771, %v1612
        %1773 = vmax.xlane.f32.xlu0 %v1772
        %v1774 = vpop.xlane.xlu0 %1773
        %v1775 = vmax.f32 %v1359, %v1361
        %v1776 = vmax.f32 %v1775, %v1616
        %v1777 = vmax.f32 %v1776, %v1618
        %1778 = vmax.xlane.f32.xlu0 %v1777
        %v1779 = vpop.xlane.xlu0 %1778
        %v1780 = vsub.f32 %v1173, %v1624
        %v1781 = vsub.f32 %v1175, %v1624
        %v1782 = vsub.f32 %v1430, %v1624
        %v1783 = vsub.f32 %v1432, %v1624
        %v1784 = vsub.f32 %v1179, %v1629
        %v1785 = vsub.f32 %v1181, %v1629
        %v1786 = vsub.f32 %v1436, %v1629
        %v1787 = vsub.f32 %v1438, %v1629
        %v1788 = vsub.f32 %v1185, %v1634
        %v1789 = vsub.f32 %v1187, %v1634
        %v1790 = vsub.f32 %v1442, %v1634
        %v1791 = vsub.f32 %v1444, %v1634
        %v1792 = vsub.f32 %v1191, %v1639
        %v1793 = vsub.f32 %v1193, %v1639
        %v1794 = vsub.f32 %v1448, %v1639
        %v1795 = vsub.f32 %v1450, %v1639
        %v1796 = vsub.f32 %v1197, %v1644
        %v1797 = vsub.f32 %v1199, %v1644
        %v1798 = vsub.f32 %v1454, %v1644
        %v1799 = vsub.f32 %v1456, %v1644
        %v1800 = vsub.f32 %v1203, %v1649
        %v1801 = vsub.f32 %v1205, %v1649
        %v1802 = vsub.f32 %v1460, %v1649
        %v1803 = vsub.f32 %v1462, %v1649
        %v1804 = vsub.f32 %v1209, %v1654
        %v1805 = vsub.f32 %v1211, %v1654
        %v1806 = vsub.f32 %v1466, %v1654
        %v1807 = vsub.f32 %v1468, %v1654
        %v1808 = vsub.f32 %v1215, %v1659
        %v1809 = vsub.f32 %v1217, %v1659
        %v1810 = vsub.f32 %v1472, %v1659
        %v1811 = vsub.f32 %v1474, %v1659
        %v1812 = vsub.f32 %v1221, %v1664
        %v1813 = vsub.f32 %v1223, %v1664
        %v1814 = vsub.f32 %v1478, %v1664
        %v1815 = vsub.f32 %v1480, %v1664
        %v1816 = vsub.f32 %v1227, %v1669
        %v1817 = vsub.f32 %v1229, %v1669
        %v1818 = vsub.f32 %v1484, %v1669
        %v1819 = vsub.f32 %v1486, %v1669
        %v1820 = vsub.f32 %v1233, %v1674
        %v1821 = vsub.f32 %v1235, %v1674
        %v1822 = vsub.f32 %v1490, %v1674
        %v1823 = vsub.f32 %v1492, %v1674
        %v1824 = vsub.f32 %v1239, %v1679
        %v1825 = vsub.f32 %v1241, %v1679
        %v1826 = vsub.f32 %v1496, %v1679
        %v1827 = vsub.f32 %v1498, %v1679
        %v1828 = vsub.f32 %v1245, %v1684
        %v1829 = vsub.f32 %v1247, %v1684
        %v1830 = vsub.f32 %v1502, %v1684
        %v1831 = vsub.f32 %v1504, %v1684
        %v1832 = vsub.f32 %v1251, %v1689
        %v1833 = vsub.f32 %v1253, %v1689
        %v1834 = vsub.f32 %v1508, %v1689
        %v1835 = vsub.f32 %v1510, %v1689
        %v1836 = vsub.f32 %v1257, %v1694
        %v1837 = vsub.f32 %v1259, %v1694
        %v1838 = vsub.f32 %v1514, %v1694
        %v1839 = vsub.f32 %v1516, %v1694
        %v1840 = vsub.f32 %v1263, %v1699
        %v1841 = vsub.f32 %v1265, %v1699
        %v1842 = vsub.f32 %v1520, %v1699
        %v1843 = vsub.f32 %v1522, %v1699
        %v1844 = vsub.f32 %v1269, %v1704
        %v1845 = vsub.f32 %v1271, %v1704
        %v1846 = vsub.f32 %v1526, %v1704
        %v1847 = vsub.f32 %v1528, %v1704
        %v1848 = vsub.f32 %v1275, %v1709
        %v1849 = vsub.f32 %v1277, %v1709
        %v1850 = vsub.f32 %v1532, %v1709
        %v1851 = vsub.f32 %v1534, %v1709
        %v1852 = vsub.f32 %v1281, %v1714
        %v1853 = vsub.f32 %v1283, %v1714
        %v1854 = vsub.f32 %v1538, %v1714
        %v1855 = vsub.f32 %v1540, %v1714
        %v1856 = vsub.f32 %v1287, %v1719
        %v1857 = vsub.f32 %v1289, %v1719
        %v1858 = vsub.f32 %v1544, %v1719
        %v1859 = vsub.f32 %v1546, %v1719
        %v1860 = vsub.f32 %v1293, %v1724
        %v1861 = vsub.f32 %v1295, %v1724
        %v1862 = vsub.f32 %v1550, %v1724
        %v1863 = vsub.f32 %v1552, %v1724
        %v1864 = vsub.f32 %v1299, %v1729
        %v1865 = vsub.f32 %v1301, %v1729
        %v1866 = vsub.f32 %v1556, %v1729
        %v1867 = vsub.f32 %v1558, %v1729
        %v1868 = vsub.f32 %v1305, %v1734
        %v1869 = vsub.f32 %v1307, %v1734
        %v1870 = vsub.f32 %v1562, %v1734
        %v1871 = vsub.f32 %v1564, %v1734
        %v1872 = vsub.f32 %v1311, %v1739
        %v1873 = vsub.f32 %v1313, %v1739
        %v1874 = vsub.f32 %v1568, %v1739
        %v1875 = vsub.f32 %v1570, %v1739
        %v1876 = vsub.f32 %v1317, %v1744
        %v1877 = vsub.f32 %v1319, %v1744
        %v1878 = vsub.f32 %v1574, %v1744
        %v1879 = vsub.f32 %v1576, %v1744
        %v1880 = vsub.f32 %v1323, %v1749
        %v1881 = vsub.f32 %v1325, %v1749
        %v1882 = vsub.f32 %v1580, %v1749
        %v1883 = vsub.f32 %v1582, %v1749
        %v1884 = vsub.f32 %v1329, %v1754
        %v1885 = vsub.f32 %v1331, %v1754
        %v1886 = vsub.f32 %v1586, %v1754
        %v1887 = vsub.f32 %v1588, %v1754
        %v1888 = vsub.f32 %v1335, %v1759
        %v1889 = vsub.f32 %v1337, %v1759
        %v1890 = vsub.f32 %v1592, %v1759
        %v1891 = vsub.f32 %v1594, %v1759
        %v1892 = vsub.f32 %v1341, %v1764
        %v1893 = vsub.f32 %v1343, %v1764
        %v1894 = vsub.f32 %v1598, %v1764
        %v1895 = vsub.f32 %v1600, %v1764
        %v1896 = vsub.f32 %v1347, %v1769
        %v1897 = vsub.f32 %v1349, %v1769
        %v1898 = vsub.f32 %v1604, %v1769
        %v1899 = vsub.f32 %v1606, %v1769
        %v1900 = vsub.f32 %v1353, %v1774
        %v1901 = vsub.f32 %v1355, %v1774
        %v1902 = vsub.f32 %v1610, %v1774
        %v1903 = vsub.f32 %v1612, %v1774
        %v1904 = vsub.f32 %v1359, %v1779
        %v1905 = vsub.f32 %v1361, %v1779
        %v1906 = vsub.f32 %v1616, %v1779
        %v1907 = vsub.f32 %v1618, %v1779
        %v1908 = vmul.f32 %v1780, 1.442695
        %v1909 = vpow.pop %v1908
        %v1910 = vmul.f32 %v1781, 1.442695
        %v1911 = vpow.pop %v1910
        %v1912 = vmul.f32 %v1782, 1.442695
        %v1913 = vpow.pop %v1912
        %v1914 = vmul.f32 %v1783, 1.442695
        %v1915 = vpow.pop %v1914
        %v1916 = vmul.f32 %v1784, 1.442695
        %v1917 = vpow.pop %v1916
        %v1918 = vmul.f32 %v1785, 1.442695
        %v1919 = vpow.pop %v1918
        %v1920 = vmul.f32 %v1786, 1.442695
        %v1921 = vpow.pop %v1920
        %v1922 = vmul.f32 %v1787, 1.442695
        %v1923 = vpow.pop %v1922
        %v1924 = vmul.f32 %v1788, 1.442695
        %v1925 = vpow.pop %v1924
        %v1926 = vmul.f32 %v1789, 1.442695
        %v1927 = vpow.pop %v1926
        %v1928 = vmul.f32 %v1790, 1.442695
        %v1929 = vpow.pop %v1928
        %v1930 = vmul.f32 %v1791, 1.442695
        %v1931 = vpow.pop %v1930
        %v1932 = vmul.f32 %v1792, 1.442695
        %v1933 = vpow.pop %v1932
        %v1934 = vmul.f32 %v1793, 1.442695
        %v1935 = vpow.pop %v1934
        %v1936 = vmul.f32 %v1794, 1.442695
        %v1937 = vpow.pop %v1936
        %v1938 = vmul.f32 %v1795, 1.442695
        %v1939 = vpow.pop %v1938
        %v1940 = vmul.f32 %v1796, 1.442695
        %v1941 = vpow.pop %v1940
        %v1942 = vmul.f32 %v1797, 1.442695
        %v1943 = vpow.pop %v1942
        %v1944 = vmul.f32 %v1798, 1.442695
        %v1945 = vpow.pop %v1944
        %v1946 = vmul.f32 %v1799, 1.442695
        %v1947 = vpow.pop %v1946
        %v1948 = vmul.f32 %v1800, 1.442695
        %v1949 = vpow.pop %v1948
        %v1950 = vmul.f32 %v1801, 1.442695
        %v1951 = vpow.pop %v1950
        %v1952 = vmul.f32 %v1802, 1.442695
        %v1953 = vpow.pop %v1952
        %v1954 = vmul.f32 %v1803, 1.442695
        %v1955 = vpow.pop %v1954
        %v1956 = vmul.f32 %v1804, 1.442695
        %v1957 = vpow.pop %v1956
        %v1958 = vmul.f32 %v1805, 1.442695
        %v1959 = vpow.pop %v1958
        %v1960 = vmul.f32 %v1806, 1.442695
        %v1961 = vpow.pop %v1960
        %v1962 = vmul.f32 %v1807, 1.442695
        %v1963 = vpow.pop %v1962
        %v1964 = vmul.f32 %v1808, 1.442695
        %v1965 = vpow.pop %v1964
        %v1966 = vmul.f32 %v1809, 1.442695
        %v1967 = vpow.pop %v1966
        %v1968 = vmul.f32 %v1810, 1.442695
        %v1969 = vpow.pop %v1968
        %v1970 = vmul.f32 %v1811, 1.442695
        %v1971 = vpow.pop %v1970
        %v1972 = vmul.f32 %v1812, 1.442695
        %v1973 = vpow.pop %v1972
        %v1974 = vmul.f32 %v1813, 1.442695
        %v1975 = vpow.pop %v1974
        %v1976 = vmul.f32 %v1814, 1.442695
        %v1977 = vpow.pop %v1976
        %v1978 = vmul.f32 %v1815, 1.442695
        %v1979 = vpow.pop %v1978
        %v1980 = vmul.f32 %v1816, 1.442695
        %v1981 = vpow.pop %v1980
        %v1982 = vmul.f32 %v1817, 1.442695
        %v1983 = vpow.pop %v1982
        %v1984 = vmul.f32 %v1818, 1.442695
        %v1985 = vpow.pop %v1984
        %v1986 = vmul.f32 %v1819, 1.442695
        %v1987 = vpow.pop %v1986
        %v1988 = vmul.f32 %v1820, 1.442695
        %v1989 = vpow.pop %v1988
        %v1990 = vmul.f32 %v1821, 1.442695
        %v1991 = vpow.pop %v1990
        %v1992 = vmul.f32 %v1822, 1.442695
        %v1993 = vpow.pop %v1992
        %v1994 = vmul.f32 %v1823, 1.442695
        %v1995 = vpow.pop %v1994
        %v1996 = vmul.f32 %v1824, 1.442695
        %v1997 = vpow.pop %v1996
        %v1998 = vmul.f32 %v1825, 1.442695
        %v1999 = vpow.pop %v1998
        %v2000 = vmul.f32 %v1826, 1.442695
        %v2001 = vpow.pop %v2000
        %v2002 = vmul.f32 %v1827, 1.442695
        %v2003 = vpow.pop %v2002
        %v2004 = vmul.f32 %v1828, 1.442695
        %v2005 = vpow.pop %v2004
        %v2006 = vmul.f32 %v1829, 1.442695
        %v2007 = vpow.pop %v2006
        %v2008 = vmul.f32 %v1830, 1.442695
        %v2009 = vpow.pop %v2008
        %v2010 = vmul.f32 %v1831, 1.442695
        %v2011 = vpow.pop %v2010
        %v2012 = vmul.f32 %v1832, 1.442695
        %v2013 = vpow.pop %v2012
        %v2014 = vmul.f32 %v1833, 1.442695
        %v2015 = vpow.pop %v2014
        %v2016 = vmul.f32 %v1834, 1.442695
        %v2017 = vpow.pop %v2016
        %v2018 = vmul.f32 %v1835, 1.442695
        %v2019 = vpow.pop %v2018
        %v2020 = vmul.f32 %v1836, 1.442695
        %v2021 = vpow.pop %v2020
        %v2022 = vmul.f32 %v1837, 1.442695
        %v2023 = vpow.pop %v2022
        %v2024 = vmul.f32 %v1838, 1.442695
        %v2025 = vpow.pop %v2024
        %v2026 = vmul.f32 %v1839, 1.442695
        %v2027 = vpow.pop %v2026
        %v2028 = vmul.f32 %v1840, 1.442695
        %v2029 = vpow.pop %v2028
        %v2030 = vmul.f32 %v1841, 1.442695
        %v2031 = vpow.pop %v2030
        %v2032 = vmul.f32 %v1842, 1.442695
        %v2033 = vpow.pop %v2032
        %v2034 = vmul.f32 %v1843, 1.442695
        %v2035 = vpow.pop %v2034
        %v2036 = vmul.f32 %v1844, 1.442695
        %v2037 = vpow.pop %v2036
        %v2038 = vmul.f32 %v1845, 1.442695
        %v2039 = vpow.pop %v2038
        %v2040 = vmul.f32 %v1846, 1.442695
        %v2041 = vpow.pop %v2040
        %v2042 = vmul.f32 %v1847, 1.442695
        %v2043 = vpow.pop %v2042
        %v2044 = vmul.f32 %v1848, 1.442695
        %v2045 = vpow.pop %v2044
        %v2046 = vmul.f32 %v1849, 1.442695
        %v2047 = vpow.pop %v2046
        %v2048 = vmul.f32 %v1850, 1.442695
        %v2049 = vpow.pop %v2048
        %v2050 = vmul.f32 %v1851, 1.442695
        %v2051 = vpow.pop %v2050
        %v2052 = vmul.f32 %v1852, 1.442695
        %v2053 = vpow.pop %v2052
        %v2054 = vmul.f32 %v1853, 1.442695
        %v2055 = vpow.pop %v2054
        %v2056 = vmul.f32 %v1854, 1.442695
        %v2057 = vpow.pop %v2056
        %v2058 = vmul.f32 %v1855, 1.442695
        %v2059 = vpow.pop %v2058
        %v2060 = vmul.f32 %v1856, 1.442695
        %v2061 = vpow.pop %v2060
        %v2062 = vmul.f32 %v1857, 1.442695
        %v2063 = vpow.pop %v2062
        %v2064 = vmul.f32 %v1858, 1.442695
        %v2065 = vpow.pop %v2064
        %v2066 = vmul.f32 %v1859, 1.442695
        %v2067 = vpow.pop %v2066
        %v2068 = vmul.f32 %v1860, 1.442695
        %v2069 = vpow.pop %v2068
        %v2070 = vmul.f32 %v1861, 1.442695
        %v2071 = vpow.pop %v2070
        %v2072 = vmul.f32 %v1862, 1.442695
        %v2073 = vpow.pop %v2072
        %v2074 = vmul.f32 %v1863, 1.442695
        %v2075 = vpow.pop %v2074
        %v2076 = vmul.f32 %v1864, 1.442695
        %v2077 = vpow.pop %v2076
        %v2078 = vmul.f32 %v1865, 1.442695
        %v2079 = vpow.pop %v2078
        %v2080 = vmul.f32 %v1866, 1.442695
        %v2081 = vpow.pop %v2080
        %v2082 = vmul.f32 %v1867, 1.442695
        %v2083 = vpow.pop %v2082
        %v2084 = vmul.f32 %v1868, 1.442695
        %v2085 = vpow.pop %v2084
        %v2086 = vmul.f32 %v1869, 1.442695
        %v2087 = vpow.pop %v2086
        %v2088 = vmul.f32 %v1870, 1.442695
        %v2089 = vpow.pop %v2088
        %v2090 = vmul.f32 %v1871, 1.442695
        %v2091 = vpow.pop %v2090
        %v2092 = vmul.f32 %v1872, 1.442695
        %v2093 = vpow.pop %v2092
        %v2094 = vmul.f32 %v1873, 1.442695
        %v2095 = vpow.pop %v2094
        %v2096 = vmul.f32 %v1874, 1.442695
        %v2097 = vpow.pop %v2096
        %v2098 = vmul.f32 %v1875, 1.442695
        %v2099 = vpow.pop %v2098
        %v2100 = vmul.f32 %v1876, 1.442695
        %v2101 = vpow.pop %v2100
        %v2102 = vmul.f32 %v1877, 1.442695
        %v2103 = vpow.pop %v2102
        %v2104 = vmul.f32 %v1878, 1.442695
        %v2105 = vpow.pop %v2104
        %v2106 = vmul.f32 %v1879, 1.442695
        %v2107 = vpow.pop %v2106
        %v2108 = vmul.f32 %v1880, 1.442695
        %v2109 = vpow.pop %v2108
        %v2110 = vmul.f32 %v1881, 1.442695
        %v2111 = vpow.pop %v2110
        %v2112 = vmul.f32 %v1882, 1.442695
        %v2113 = vpow.pop %v2112
        %v2114 = vmul.f32 %v1883, 1.442695
        %v2115 = vpow.pop %v2114
        %v2116 = vmul.f32 %v1884, 1.442695
        %v2117 = vpow.pop %v2116
        %v2118 = vmul.f32 %v1885, 1.442695
        %v2119 = vpow.pop %v2118
        %v2120 = vmul.f32 %v1886, 1.442695
        %v2121 = vpow.pop %v2120
        %v2122 = vmul.f32 %v1887, 1.442695
        %v2123 = vpow.pop %v2122
        %v2124 = vmul.f32 %v1888, 1.442695
        %v2125 = vpow.pop %v2124
        %v2126 = vmul.f32 %v1889, 1.442695
        %v2127 = vpow.pop %v2126
        %v2128 = vmul.f32 %v1890, 1.442695
        %v2129 = vpow.pop %v2128
        %v2130 = vmul.f32 %v1891, 1.442695
        %v2131 = vpow.pop %v2130
        %v2132 = vmul.f32 %v1892, 1.442695
        %v2133 = vpow.pop %v2132
        %v2134 = vmul.f32 %v1893, 1.442695
        %v2135 = vpow.pop %v2134
        %v2136 = vmul.f32 %v1894, 1.442695
        %v2137 = vpow.pop %v2136
        %v2138 = vmul.f32 %v1895, 1.442695
        %v2139 = vpow.pop %v2138
        %v2140 = vmul.f32 %v1896, 1.442695
        %v2141 = vpow.pop %v2140
        %v2142 = vmul.f32 %v1897, 1.442695
        %v2143 = vpow.pop %v2142
        %v2144 = vmul.f32 %v1898, 1.442695
        %v2145 = vpow.pop %v2144
        %v2146 = vmul.f32 %v1899, 1.442695
        %v2147 = vpow.pop %v2146
        %v2148 = vmul.f32 %v1900, 1.442695
        %v2149 = vpow.pop %v2148
        %v2150 = vmul.f32 %v1901, 1.442695
        %v2151 = vpow.pop %v2150
        %v2152 = vmul.f32 %v1902, 1.442695
        %v2153 = vpow.pop %v2152
        %v2154 = vmul.f32 %v1903, 1.442695
        %v2155 = vpow.pop %v2154
        %v2156 = vmul.f32 %v1904, 1.442695
        %v2157 = vpow.pop %v2156
        %v2158 = vmul.f32 %v1905, 1.442695
        %v2159 = vpow.pop %v2158
        %v2160 = vmul.f32 %v1906, 1.442695
        %v2161 = vpow.pop %v2160
        %v2162 = vmul.f32 %v1907, 1.442695
        %v2163 = vpow.pop %v2162
        %2164 = vmatprep.subr.mxu0 %v973
        %2165 = vmatpush1.xpose.msra.mxu0 %v970
        %2166 = vmatprep.subr.mxu0 %v983
        %2167 = vmatpush1.xpose.msra.mxu0 %v981
        %2168 = vmatprep.subr.mxu0 1.0
        %2169 = vmatpush1.xpose.msra.mxu0 1.0
        %2170 = vmatprep.subr.mxu0 0.0
        %2171 = vmatpush1.xpose.msra.mxu0 0.0
        %2172 = vmatprep.subr.mxu0 0.0
        %2173 = vmatpush1.xpose.msra.mxu0 0.0
        %2174 = vmatprep.subr.mxu0 0.0
        %2175 = vmatpush1.xpose.msra.mxu0 0.0
        %2176 = vmatprep.subr.mxu0 0.0
        %2177 = vmatpush1.xpose.msra.mxu0 0.0
        %2178 = vmatprep.subr.mxu0 0.0
        %2179 = vmatpush1.xpose.msra.mxu0 0.0
        %2180 = vmatprep.subr.mxu0 0.0
        %2181 = vmatpush1.xpose.msra.mxu0 0.0
        %2182 = vmatprep.subr.mxu0 0.0
        %2183 = vmatpush1.xpose.msra.mxu0 0.0
        %2184 = vmatprep.subr.mxu0 0.0
        %2185 = vmatpush1.xpose.msra.mxu0 0.0
        %2186 = vmatprep.subr.mxu0 0.0
        %2187 = vmatpush1.xpose.msra.mxu0 0.0
        %2188 = vmatprep.subr.mxu0 0.0
        %2189 = vmatpush1.xpose.msra.mxu0 0.0
        %2190 = vmatprep.subr.mxu0 0.0
        %2191 = vmatpush1.xpose.msra.mxu0 0.0
        %2192 = vmatprep.subr.mxu0 0.0
        %2193 = vmatpush1.xpose.msra.mxu0 0.0
        %2194 = vmatprep.subr.mxu0 0.0
        %2195 = vmatpush1.xpose.msra.mxu0 0.0
        %2196 = vmatprep.subr.mxu0 0.0
        %2197 = vmatpush1.xpose.msra.mxu0 0.0
        %2198 = vmatprep.subr.mxu0 0.0
        %2199 = vmatpush1.xpose.msra.mxu0 0.0
        %2200 = vmatprep.subr.mxu0 0.0
        %2201 = vmatpush1.xpose.msra.mxu0 0.0
        %2202 = vmatprep.subr.mxu0 0.0
        %2203 = vmatpush1.xpose.msra.mxu0 0.0
        %2204 = vmatprep.subr.mxu0 0.0
        %2205 = vmatpush1.xpose.msra.mxu0 0.0
        %2206 = vmatprep.subr.mxu0 0.0
        %2207 = vmatpush1.xpose.msra.mxu0 0.0
        %2208 = vmatprep.subr.mxu0 0.0
        %2209 = vmatpush1.xpose.msra.mxu0 0.0
        %2210 = vmatprep.subr.mxu0 0.0
        %2211 = vmatpush1.xpose.msra.mxu0 0.0
        %2212 = vmatprep.subr.mxu0 0.0
        %2213 = vmatpush1.xpose.msra.mxu0 0.0
        %2214 = vmatprep.subr.mxu0 0.0
        %2215 = vmatpush1.xpose.msra.mxu0 0.0
        %2216 = vmatprep.subr.mxu0 0.0
        %2217 = vmatpush1.xpose.msra.mxu0 0.0
        %2218 = vmatprep.subr.mxu0 0.0
        %2219 = vmatpush1.xpose.msra.mxu0 0.0
        %2220 = vmatprep.subr.mxu0 0.0
        %2221 = vmatpush1.xpose.msra.mxu0 0.0
        %2222 = vmatprep.subr.mxu0 0.0
        %2223 = vmatpush1.xpose.msra.mxu0 0.0
        %2224 = vmatprep.subr.mxu0 0.0
        %2225 = vmatpush1.xpose.msra.mxu0 0.0
        %2226 = vmatprep.subr.mxu0 0.0
        %2227 = vmatpush1.xpose.msra.mxu0 0.0
        %2228 = vmatprep.mubr.f32.mxu0 %v1911
        %2229 = vmatmul.mubr.f32.gmra.mrb[0].mxu0 %v1909
        %v2230 = vpop.f32.mrb[0].mxu0
        %v2231 = vadd.f32 0.0, %v2230
        %v2232 = vpop.f32.mrb[0].mxu0
        %2233 = vmatprep.mubr.f32.mxu0 %v1919
        %2234 = vmatmul.mubr.f32.gmra.mrb[0].mxu0 %v1917
        %v2235 = vpop.f32.mrb[0].mxu0
        %v2236 = vadd.f32 0.0, %v2235
        %v2237 = vpop.f32.mrb[0].mxu0
        %2238 = vmatprep.mubr.f32.mxu0 %v1927
        %2239 = vmatmul.mubr.f32.gmra.mrb[0].mxu0 %v1925
        %v2240 = vpop.f32.mrb[0].mxu0
        %v2241 = vadd.f32 0.0, %v2240
        %v2242 = vpop.f32.mrb[0].mxu0
        %2243 = vmatprep.mubr.f32.mxu0 %v1935
        %2244 = vmatmul.mubr.f32.gmra.mrb[0].mxu0 %v1933
        %v2245 = vpop.f32.mrb[0].mxu0
        %v2246 = vadd.f32 0.0, %v2245
        %v2247 = vpop.f32.mrb[0].mxu0
        %2248 = vmatprep.mubr.f32.mxu0 %v1943
        %2249 = vmatmul.mubr.f32.gmra.mrb[0].mxu0 %v1941
        %v2250 = vpop.f32.mrb[0].mxu0
        %v2251 = vadd.f32 0.0, %v2250
        %v2252 = vpop.f32.mrb[0].mxu0
        %2253 = vmatprep.mubr.f32.mxu0 %v1951
        %2254 = vmatmul.mubr.f32.gmra.mrb[0].mxu0 %v1949
        %v2255 = vpop.f32.mrb[0].mxu0
        %v2256 = vadd.f32 0.0, %v2255
        %v2257 = vpop.f32.mrb[0].mxu0
        %2258 = vmatprep.mubr.f32.mxu0 %v1959
        %2259 = vmatmul.mubr.f32.gmra.mrb[0].mxu0 %v1957
        %v2260 = vpop.f32.mrb[0].mxu0
        %v2261 = vadd.f32 0.0, %v2260
        %v2262 = vpop.f32.mrb[0].mxu0
        %2263 = vmatprep.mubr.f32.mxu0 %v1967
        %2264 = vmatmul.mubr.f32.gmra.mrb[0].mxu0 %v1965
        %v2265 = vpop.f32.mrb[0].mxu0
        %v2266 = vadd.f32 0.0, %v2265
        %v2267 = vpop.f32.mrb[0].mxu0
        %2268 = vmatprep.mubr.f32.mxu0 %v1975
        %2269 = vmatmul.mubr.f32.gmra.mrb[0].mxu0 %v1973
        %v2270 = vpop.f32.mrb[0].mxu0
        %v2271 = vadd.f32 0.0, %v2270
        %v2272 = vpop.f32.mrb[0].mxu0
        %2273 = vmatprep.mubr.f32.mxu0 %v1983
        %2274 = vmatmul.mubr.f32.gmra.mrb[0].mxu0 %v1981
        %v2275 = vpop.f32.mrb[0].mxu0
        %v2276 = vadd.f32 0.0, %v2275
        %v2277 = vpop.f32.mrb[0].mxu0
        %2278 = vmatprep.mubr.f32.mxu0 %v1991
        %2279 = vmatmul.mubr.f32.gmra.mrb[0].mxu0 %v1989
        %v2280 = vpop.f32.mrb[0].mxu0
        %v2281 = vadd.f32 0.0, %v2280
        %v2282 = vpop.f32.mrb[0].mxu0
        %2283 = vmatprep.mubr.f32.mxu0 %v1999
        %2284 = vmatmul.mubr.f32.gmra.mrb[0].mxu0 %v1997
        %v2285 = vpop.f32.mrb[0].mxu0
        %v2286 = vadd.f32 0.0, %v2285
        %v2287 = vpop.f32.mrb[0].mxu0
        %2288 = vmatprep.mubr.f32.mxu0 %v2007
        %2289 = vmatmul.mubr.f32.gmra.mrb[0].mxu0 %v2005
        %v2290 = vpop.f32.mrb[0].mxu0
        %v2291 = vadd.f32 0.0, %v2290
        %v2292 = vpop.f32.mrb[0].mxu0
        %2293 = vmatprep.mubr.f32.mxu0 %v2015
        %2294 = vmatmul.mubr.f32.gmra.mrb[0].mxu0 %v2013
        %v2295 = vpop.f32.mrb[0].mxu0
        %v2296 = vadd.f32 0.0, %v2295
        %v2297 = vpop.f32.mrb[0].mxu0
        %2298 = vmatprep.mubr.f32.mxu0 %v2023
        %2299 = vmatmul.mubr.f32.gmra.mrb[0].mxu0 %v2021
        %v2300 = vpop.f32.mrb[0].mxu0
        %v2301 = vadd.f32 0.0, %v2300
        %v2302 = vpop.f32.mrb[0].mxu0
        %2303 = vmatprep.mubr.f32.mxu0 %v2031
        %2304 = vmatmul.mubr.f32.gmra.mrb[0].mxu0 %v2029
        %v2305 = vpop.f32.mrb[0].mxu0
        %v2306 = vadd.f32 0.0, %v2305
        %v2307 = vpop.f32.mrb[0].mxu0
        %2308 = vmatprep.mubr.f32.mxu0 %v2039
        %2309 = vmatmul.mubr.f32.gmra.mrb[0].mxu0 %v2037
        %v2310 = vpop.f32.mrb[0].mxu0
        %v2311 = vadd.f32 0.0, %v2310
        %v2312 = vpop.f32.mrb[0].mxu0
        %2313 = vmatprep.mubr.f32.mxu0 %v2047
        %2314 = vmatmul.mubr.f32.gmra.mrb[0].mxu0 %v2045
        %v2315 = vpop.f32.mrb[0].mxu0
        %v2316 = vadd.f32 0.0, %v2315
        %v2317 = vpop.f32.mrb[0].mxu0
        %2318 = vmatprep.mubr.f32.mxu0 %v2055
        %2319 = vmatmul.mubr.f32.gmra.mrb[0].mxu0 %v2053
        %v2320 = vpop.f32.mrb[0].mxu0
        %v2321 = vadd.f32 0.0, %v2320
        %v2322 = vpop.f32.mrb[0].mxu0
        %2323 = vmatprep.mubr.f32.mxu0 %v2063
        %2324 = vmatmul.mubr.f32.gmra.mrb[0].mxu0 %v2061
        %v2325 = vpop.f32.mrb[0].mxu0
        %v2326 = vadd.f32 0.0, %v2325
        %v2327 = vpop.f32.mrb[0].mxu0
        %2328 = vmatprep.mubr.f32.mxu0 %v2071
        %2329 = vmatmul.mubr.f32.gmra.mrb[0].mxu0 %v2069
        %v2330 = vpop.f32.mrb[0].mxu0
        %v2331 = vadd.f32 0.0, %v2330
        %v2332 = vpop.f32.mrb[0].mxu0
        %2333 = vmatprep.mubr.f32.mxu0 %v2079
        %2334 = vmatmul.mubr.f32.gmra.mrb[0].mxu0 %v2077
        %v2335 = vpop.f32.mrb[0].mxu0
        %v2336 = vadd.f32 0.0, %v2335
        %v2337 = vpop.f32.mrb[0].mxu0
        %2338 = vmatprep.mubr.f32.mxu0 %v2087
        %2339 = vmatmul.mubr.f32.gmra.mrb[0].mxu0 %v2085
        %v2340 = vpop.f32.mrb[0].mxu0
        %v2341 = vadd.f32 0.0, %v2340
        %v2342 = vpop.f32.mrb[0].mxu0
        %2343 = vmatprep.mubr.f32.mxu0 %v2095
        %2344 = vmatmul.mubr.f32.gmra.mrb[0].mxu0 %v2093
        %v2345 = vpop.f32.mrb[0].mxu0
        %v2346 = vadd.f32 0.0, %v2345
        %v2347 = vpop.f32.mrb[0].mxu0
        %2348 = vmatprep.mubr.f32.mxu0 %v2103
        %2349 = vmatmul.mubr.f32.gmra.mrb[0].mxu0 %v2101
        %v2350 = vpop.f32.mrb[0].mxu0
        %v2351 = vadd.f32 0.0, %v2350
        %v2352 = vpop.f32.mrb[0].mxu0
        %2353 = vmatprep.mubr.f32.mxu0 %v2111
        %2354 = vmatmul.mubr.f32.gmra.mrb[0].mxu0 %v2109
        %v2355 = vpop.f32.mrb[0].mxu0
        %v2356 = vadd.f32 0.0, %v2355
        %v2357 = vpop.f32.mrb[0].mxu0
        %2358 = vmatprep.mubr.f32.mxu0 %v2119
        %2359 = vmatmul.mubr.f32.gmra.mrb[0].mxu0 %v2117
        %v2360 = vpop.f32.mrb[0].mxu0
        %v2361 = vadd.f32 0.0, %v2360
        %v2362 = vpop.f32.mrb[0].mxu0
        %2363 = vmatprep.mubr.f32.mxu0 %v2127
        %2364 = vmatmul.mubr.f32.gmra.mrb[0].mxu0 %v2125
        %v2365 = vpop.f32.mrb[0].mxu0
        %v2366 = vadd.f32 0.0, %v2365
        %v2367 = vpop.f32.mrb[0].mxu0
        %2368 = vmatprep.mubr.f32.mxu0 %v2135
        %2369 = vmatmul.mubr.f32.gmra.mrb[0].mxu0 %v2133
        %v2370 = vpop.f32.mrb[0].mxu0
        %v2371 = vadd.f32 0.0, %v2370
        %v2372 = vpop.f32.mrb[0].mxu0
        %2373 = vmatprep.mubr.f32.mxu0 %v2143
        %2374 = vmatmul.mubr.f32.gmra.mrb[0].mxu0 %v2141
        %v2375 = vpop.f32.mrb[0].mxu0
        %v2376 = vadd.f32 0.0, %v2375
        %v2377 = vpop.f32.mrb[0].mxu0
        %2378 = vmatprep.mubr.f32.mxu0 %v2151
        %2379 = vmatmul.mubr.f32.gmra.mrb[0].mxu0 %v2149
        %v2380 = vpop.f32.mrb[0].mxu0
        %v2381 = vadd.f32 0.0, %v2380
        %v2382 = vpop.f32.mrb[0].mxu0
        %2383 = vmatprep.mubr.f32.mxu0 %v2159
        %2384 = vmatmul.mubr.f32.gmra.mrb[0].mxu0 %v2157
        %v2385 = vpop.f32.mrb[0].mxu0
        %v2386 = vadd.f32 0.0, %v2385
        %v2387 = vpop.f32.mrb[0].mxu0
        %2388 = vdwg.mxu0
        %2389 = vmatprep.subr.mxu0 %v979
        %2390 = vmatpush1.xpose.msra.mxu0 %v976
        %2391 = vmatprep.subr.mxu0 %v987
        %2392 = vmatpush1.xpose.msra.mxu0 %v985
        %2393 = vmatprep.subr.mxu0 1.0
        %2394 = vmatpush1.xpose.msra.mxu0 1.0
        %2395 = vmatprep.subr.mxu0 0.0
        %2396 = vmatpush1.xpose.msra.mxu0 0.0
        %2397 = vmatprep.subr.mxu0 0.0
        %2398 = vmatpush1.xpose.msra.mxu0 0.0
        %2399 = vmatprep.subr.mxu0 0.0
        %2400 = vmatpush1.xpose.msra.mxu0 0.0
        %2401 = vmatprep.subr.mxu0 0.0
        %2402 = vmatpush1.xpose.msra.mxu0 0.0
        %2403 = vmatprep.subr.mxu0 0.0
        %2404 = vmatpush1.xpose.msra.mxu0 0.0
        %2405 = vmatprep.subr.mxu0 0.0
        %2406 = vmatpush1.xpose.msra.mxu0 0.0
        %2407 = vmatprep.subr.mxu0 0.0
        %2408 = vmatpush1.xpose.msra.mxu0 0.0
        %2409 = vmatprep.subr.mxu0 0.0
        %2410 = vmatpush1.xpose.msra.mxu0 0.0
        %2411 = vmatprep.subr.mxu0 0.0
        %2412 = vmatpush1.xpose.msra.mxu0 0.0
        %2413 = vmatprep.subr.mxu0 0.0
        %2414 = vmatpush1.xpose.msra.mxu0 0.0
        %2415 = vmatprep.subr.mxu0 0.0
        %2416 = vmatpush1.xpose.msra.mxu0 0.0
        %2417 = vmatprep.subr.mxu0 0.0
        %2418 = vmatpush1.xpose.msra.mxu0 0.0
        %2419 = vmatprep.subr.mxu0 0.0
        %2420 = vmatpush1.xpose.msra.mxu0 0.0
        %2421 = vmatprep.subr.mxu0 0.0
        %2422 = vmatpush1.xpose.msra.mxu0 0.0
        %2423 = vmatprep.subr.mxu0 0.0
        %2424 = vmatpush1.xpose.msra.mxu0 0.0
        %2425 = vmatprep.subr.mxu0 0.0
        %2426 = vmatpush1.xpose.msra.mxu0 0.0
        %2427 = vmatprep.subr.mxu0 0.0
        %2428 = vmatpush1.xpose.msra.mxu0 0.0
        %2429 = vmatprep.subr.mxu0 0.0
        %2430 = vmatpush1.xpose.msra.mxu0 0.0
        %2431 = vmatprep.subr.mxu0 0.0
        %2432 = vmatpush1.xpose.msra.mxu0 0.0
        %2433 = vmatprep.subr.mxu0 0.0
        %2434 = vmatpush1.xpose.msra.mxu0 0.0
        %2435 = vmatprep.subr.mxu0 0.0
        %2436 = vmatpush1.xpose.msra.mxu0 0.0
        %2437 = vmatprep.subr.mxu0 0.0
        %2438 = vmatpush1.xpose.msra.mxu0 0.0
        %2439 = vmatprep.subr.mxu0 0.0
        %2440 = vmatpush1.xpose.msra.mxu0 0.0
        %2441 = vmatprep.subr.mxu0 0.0
        %2442 = vmatpush1.xpose.msra.mxu0 0.0
        %2443 = vmatprep.subr.mxu0 0.0
        %2444 = vmatpush1.xpose.msra.mxu0 0.0
        %2445 = vmatprep.subr.mxu0 0.0
        %2446 = vmatpush1.xpose.msra.mxu0 0.0
        %2447 = vmatprep.subr.mxu0 0.0
        %2448 = vmatpush1.xpose.msra.mxu0 0.0
        %2449 = vmatprep.subr.mxu0 0.0
        %2450 = vmatpush1.xpose.msra.mxu0 0.0
        %2451 = vmatprep.subr.mxu0 0.0
        %2452 = vmatpush1.xpose.msra.mxu0 0.0
        %2453 = vmatprep.mubr.f32.mxu0 %v1915
        %2454 = vmatmul.mubr.f32.gmra.mrb[0].mxu0 %v1913
        %v2455 = vpop.f32.mrb[0].mxu0
        %v2456 = vadd.f32 %v2231, %v2455
        %v2457 = vpop.f32.mrb[0].mxu0
        %2458 = vmatprep.mubr.f32.mxu0 %v1923
        %2459 = vmatmul.mubr.f32.gmra.mrb[0].mxu0 %v1921
        %v2460 = vpop.f32.mrb[0].mxu0
        %v2461 = vadd.f32 %v2236, %v2460
        %v2462 = vpop.f32.mrb[0].mxu0
        %2463 = vmatprep.mubr.f32.mxu0 %v1931
        %2464 = vmatmul.mubr.f32.gmra.mrb[0].mxu0 %v1929
        %v2465 = vpop.f32.mrb[0].mxu0
        %v2466 = vadd.f32 %v2241, %v2465
        %v2467 = vpop.f32.mrb[0].mxu0
        %2468 = vmatprep.mubr.f32.mxu0 %v1939
        %2469 = vmatmul.mubr.f32.gmra.mrb[0].mxu0 %v1937
        %v2470 = vpop.f32.mrb[0].mxu0
        %v2471 = vadd.f32 %v2246, %v2470
        %v2472 = vpop.f32.mrb[0].mxu0
        %2473 = vmatprep.mubr.f32.mxu0 %v1947
        %2474 = vmatmul.mubr.f32.gmra.mrb[0].mxu0 %v1945
        %v2475 = vpop.f32.mrb[0].mxu0
        %v2476 = vadd.f32 %v2251, %v2475
        %v2477 = vpop.f32.mrb[0].mxu0
        %2478 = vmatprep.mubr.f32.mxu0 %v1955
        %2479 = vmatmul.mubr.f32.gmra.mrb[0].mxu0 %v1953
        %v2480 = vpop.f32.mrb[0].mxu0
        %v2481 = vadd.f32 %v2256, %v2480
        %v2482 = vpop.f32.mrb[0].mxu0
        %2483 = vmatprep.mubr.f32.mxu0 %v1963
        %2484 = vmatmul.mubr.f32.gmra.mrb[0].mxu0 %v1961
        %v2485 = vpop.f32.mrb[0].mxu0
        %v2486 = vadd.f32 %v2261, %v2485
        %v2487 = vpop.f32.mrb[0].mxu0
        %2488 = vmatprep.mubr.f32.mxu0 %v1971
        %2489 = vmatmul.mubr.f32.gmra.mrb[0].mxu0 %v1969
        %v2490 = vpop.f32.mrb[0].mxu0
        %v2491 = vadd.f32 %v2266, %v2490
        %v2492 = vpop.f32.mrb[0].mxu0
        %2493 = vmatprep.mubr.f32.mxu0 %v1979
        %2494 = vmatmul.mubr.f32.gmra.mrb[0].mxu0 %v1977
        %v2495 = vpop.f32.mrb[0].mxu0
        %v2496 = vadd.f32 %v2271, %v2495
        %v2497 = vpop.f32.mrb[0].mxu0
        %2498 = vmatprep.mubr.f32.mxu0 %v1987
        %2499 = vmatmul.mubr.f32.gmra.mrb[0].mxu0 %v1985
        %v2500 = vpop.f32.mrb[0].mxu0
        %v2501 = vadd.f32 %v2276, %v2500
        %v2502 = vpop.f32.mrb[0].mxu0
        %2503 = vmatprep.mubr.f32.mxu0 %v1995
        %2504 = vmatmul.mubr.f32.gmra.mrb[0].mxu0 %v1993
        %v2505 = vpop.f32.mrb[0].mxu0
        %v2506 = vadd.f32 %v2281, %v2505
        %v2507 = vpop.f32.mrb[0].mxu0
        %2508 = vmatprep.mubr.f32.mxu0 %v2003
        %2509 = vmatmul.mubr.f32.gmra.mrb[0].mxu0 %v2001
        %v2510 = vpop.f32.mrb[0].mxu0
        %v2511 = vadd.f32 %v2286, %v2510
        %v2512 = vpop.f32.mrb[0].mxu0
        %2513 = vmatprep.mubr.f32.mxu0 %v2011
        %2514 = vmatmul.mubr.f32.gmra.mrb[0].mxu0 %v2009
        %v2515 = vpop.f32.mrb[0].mxu0
        %v2516 = vadd.f32 %v2291, %v2515
        %v2517 = vpop.f32.mrb[0].mxu0
        %2518 = vmatprep.mubr.f32.mxu0 %v2019
        %2519 = vmatmul.mubr.f32.gmra.mrb[0].mxu0 %v2017
        %v2520 = vpop.f32.mrb[0].mxu0
        %v2521 = vadd.f32 %v2296, %v2520
        %v2522 = vpop.f32.mrb[0].mxu0
        %2523 = vmatprep.mubr.f32.mxu0 %v2027
        %2524 = vmatmul.mubr.f32.gmra.mrb[0].mxu0 %v2025
        %v2525 = vpop.f32.mrb[0].mxu0
        %v2526 = vadd.f32 %v2301, %v2525
        %v2527 = vpop.f32.mrb[0].mxu0
        %2528 = vmatprep.mubr.f32.mxu0 %v2035
        %2529 = vmatmul.mubr.f32.gmra.mrb[0].mxu0 %v2033
        %v2530 = vpop.f32.mrb[0].mxu0
        %v2531 = vadd.f32 %v2306, %v2530
        %v2532 = vpop.f32.mrb[0].mxu0
        %2533 = vmatprep.mubr.f32.mxu0 %v2043
        %2534 = vmatmul.mubr.f32.gmra.mrb[0].mxu0 %v2041
        %v2535 = vpop.f32.mrb[0].mxu0
        %v2536 = vadd.f32 %v2311, %v2535
        %v2537 = vpop.f32.mrb[0].mxu0
        %2538 = vmatprep.mubr.f32.mxu0 %v2051
        %2539 = vmatmul.mubr.f32.gmra.mrb[0].mxu0 %v2049
        %v2540 = vpop.f32.mrb[0].mxu0
        %v2541 = vadd.f32 %v2316, %v2540
        %v2542 = vpop.f32.mrb[0].mxu0
        %2543 = vmatprep.mubr.f32.mxu0 %v2059
        %2544 = vmatmul.mubr.f32.gmra.mrb[0].mxu0 %v2057
        %v2545 = vpop.f32.mrb[0].mxu0
        %v2546 = vadd.f32 %v2321, %v2545
        %v2547 = vpop.f32.mrb[0].mxu0
        %2548 = vmatprep.mubr.f32.mxu0 %v2067
        %2549 = vmatmul.mubr.f32.gmra.mrb[0].mxu0 %v2065
        %v2550 = vpop.f32.mrb[0].mxu0
        %v2551 = vadd.f32 %v2326, %v2550
        %v2552 = vpop.f32.mrb[0].mxu0
        %2553 = vmatprep.mubr.f32.mxu0 %v2075
        %2554 = vmatmul.mubr.f32.gmra.mrb[0].mxu0 %v2073
        %v2555 = vpop.f32.mrb[0].mxu0
        %v2556 = vadd.f32 %v2331, %v2555
        %v2557 = vpop.f32.mrb[0].mxu0
        %2558 = vmatprep.mubr.f32.mxu0 %v2083
        %2559 = vmatmul.mubr.f32.gmra.mrb[0].mxu0 %v2081
        %v2560 = vpop.f32.mrb[0].mxu0
        %v2561 = vadd.f32 %v2336, %v2560
        %v2562 = vpop.f32.mrb[0].mxu0
        %2563 = vmatprep.mubr.f32.mxu0 %v2091
        %2564 = vmatmul.mubr.f32.gmra.mrb[0].mxu0 %v2089
        %v2565 = vpop.f32.mrb[0].mxu0
        %v2566 = vadd.f32 %v2341, %v2565
        %v2567 = vpop.f32.mrb[0].mxu0
        %2568 = vmatprep.mubr.f32.mxu0 %v2099
        %2569 = vmatmul.mubr.f32.gmra.mrb[0].mxu0 %v2097
        %v2570 = vpop.f32.mrb[0].mxu0
        %v2571 = vadd.f32 %v2346, %v2570
        %v2572 = vpop.f32.mrb[0].mxu0
        %2573 = vmatprep.mubr.f32.mxu0 %v2107
        %2574 = vmatmul.mubr.f32.gmra.mrb[0].mxu0 %v2105
        %v2575 = vpop.f32.mrb[0].mxu0
        %v2576 = vadd.f32 %v2351, %v2575
        %v2577 = vpop.f32.mrb[0].mxu0
        %2578 = vmatprep.mubr.f32.mxu0 %v2115
        %2579 = vmatmul.mubr.f32.gmra.mrb[0].mxu0 %v2113
        %v2580 = vpop.f32.mrb[0].mxu0
        %v2581 = vadd.f32 %v2356, %v2580
        %v2582 = vpop.f32.mrb[0].mxu0
        %2583 = vmatprep.mubr.f32.mxu0 %v2123
        %2584 = vmatmul.mubr.f32.gmra.mrb[0].mxu0 %v2121
        %v2585 = vpop.f32.mrb[0].mxu0
        %v2586 = vadd.f32 %v2361, %v2585
        %v2587 = vpop.f32.mrb[0].mxu0
        %2588 = vmatprep.mubr.f32.mxu0 %v2131
        %2589 = vmatmul.mubr.f32.gmra.mrb[0].mxu0 %v2129
        %v2590 = vpop.f32.mrb[0].mxu0
        %v2591 = vadd.f32 %v2366, %v2590
        %v2592 = vpop.f32.mrb[0].mxu0
        %2593 = vmatprep.mubr.f32.mxu0 %v2139
        %2594 = vmatmul.mubr.f32.gmra.mrb[0].mxu0 %v2137
        %v2595 = vpop.f32.mrb[0].mxu0
        %v2596 = vadd.f32 %v2371, %v2595
        %v2597 = vpop.f32.mrb[0].mxu0
        %2598 = vmatprep.mubr.f32.mxu0 %v2147
        %2599 = vmatmul.mubr.f32.gmra.mrb[0].mxu0 %v2145
        %v2600 = vpop.f32.mrb[0].mxu0
        %v2601 = vadd.f32 %v2376, %v2600
        %v2602 = vpop.f32.mrb[0].mxu0
        %2603 = vmatprep.mubr.f32.mxu0 %v2155
        %2604 = vmatmul.mubr.f32.gmra.mrb[0].mxu0 %v2153
        %v2605 = vpop.f32.mrb[0].mxu0
        %v2606 = vadd.f32 %v2381, %v2605
        %v2607 = vpop.f32.mrb[0].mxu0
        %2608 = vmatprep.mubr.f32.mxu0 %v2163
        %2609 = vmatmul.mubr.f32.gmra.mrb[0].mxu0 %v2161
        %v2610 = vpop.f32.mrb[0].mxu0
        %v2611 = vadd.f32 %v2386, %v2610
        %v2612 = vpop.f32.mrb[0].mxu0
        %2613 = vdwg.mxu0
        %v2614 = vrcp.pop %v2456
        %v2615 = vrcp.pop %v2461
        %v2616 = vrcp.pop %v2466
        %v2617 = vrcp.pop %v2471
        %v2618 = vrcp.pop %v2476
        %v2619 = vrcp.pop %v2481
        %v2620 = vrcp.pop %v2486
        %v2621 = vrcp.pop %v2491
        %v2622 = vrcp.pop %v2496
        %v2623 = vrcp.pop %v2501
        %v2624 = vrcp.pop %v2506
        %v2625 = vrcp.pop %v2511
        %v2626 = vrcp.pop %v2516
        %v2627 = vrcp.pop %v2521
        %v2628 = vrcp.pop %v2526
        %v2629 = vrcp.pop %v2531
        %v2630 = vrcp.pop %v2536
        %v2631 = vrcp.pop %v2541
        %v2632 = vrcp.pop %v2546
        %v2633 = vrcp.pop %v2551
        %v2634 = vrcp.pop %v2556
        %v2635 = vrcp.pop %v2561
        %v2636 = vrcp.pop %v2566
        %v2637 = vrcp.pop %v2571
        %v2638 = vrcp.pop %v2576
        %v2639 = vrcp.pop %v2581
        %v2640 = vrcp.pop %v2586
        %v2641 = vrcp.pop %v2591
        %v2642 = vrcp.pop %v2596
        %v2643 = vrcp.pop %v2601
        %v2644 = vrcp.pop %v2606
        %v2645 = vrcp.pop %v2611
        %2647 = vset.pattern.permute.xlu0 16
        %2648 = vperm.xlu0 %2647, %v2614
        %v2649 = vpop.permute.xlu0 %2648
        %2652 = vset.pattern.permute.xlu0 16
        %2653 = vperm.xlu0 %2652, %v2615
        %v2654 = vpop.permute.xlu0 %2653
        %2657 = vset.pattern.permute.xlu0 16
        %2658 = vperm.xlu0 %2657, %v2616
        %v2659 = vpop.permute.xlu0 %2658
        %2662 = vset.pattern.permute.xlu0 16
        %2663 = vperm.xlu0 %2662, %v2617
        %v2664 = vpop.permute.xlu0 %2663
        %2667 = vset.pattern.permute.xlu0 16
        %2668 = vperm.xlu0 %2667, %v2618
        %v2669 = vpop.permute.xlu0 %2668
        %2672 = vset.pattern.permute.xlu0 16
        %2673 = vperm.xlu0 %2672, %v2619
        %v2674 = vpop.permute.xlu0 %2673
        %2677 = vset.pattern.permute.xlu0 16
        %2678 = vperm.xlu0 %2677, %v2620
        %v2679 = vpop.permute.xlu0 %2678
        %2682 = vset.pattern.permute.xlu0 16
        %2683 = vperm.xlu0 %2682, %v2621
        %v2684 = vpop.permute.xlu0 %2683
        %2687 = vset.pattern.permute.xlu0 16
        %2688 = vperm.xlu0 %2687, %v2622
        %v2689 = vpop.permute.xlu0 %2688
        %2692 = vset.pattern.permute.xlu0 16
        %2693 = vperm.xlu0 %2692, %v2623
        %v2694 = vpop.permute.xlu0 %2693
        %2697 = vset.pattern.permute.xlu0 16
        %2698 = vperm.xlu0 %2697, %v2624
        %v2699 = vpop.permute.xlu0 %2698
        %2702 = vset.pattern.permute.xlu0 16
        %2703 = vperm.xlu0 %2702, %v2625
        %v2704 = vpop.permute.xlu0 %2703
        %2707 = vset.pattern.permute.xlu0 16
        %2708 = vperm.xlu0 %2707, %v2626
        %v2709 = vpop.permute.xlu0 %2708
        %2712 = vset.pattern.permute.xlu0 16
        %2713 = vperm.xlu0 %2712, %v2627
        %v2714 = vpop.permute.xlu0 %2713
        %2717 = vset.pattern.permute.xlu0 16
        %2718 = vperm.xlu0 %2717, %v2628
        %v2719 = vpop.permute.xlu0 %2718
        %2722 = vset.pattern.permute.xlu0 16
        %2723 = vperm.xlu0 %2722, %v2629
        %v2724 = vpop.permute.xlu0 %2723
        %2727 = vset.pattern.permute.xlu0 16
        %2728 = vperm.xlu0 %2727, %v2630
        %v2729 = vpop.permute.xlu0 %2728
        %2732 = vset.pattern.permute.xlu0 16
        %2733 = vperm.xlu0 %2732, %v2631
        %v2734 = vpop.permute.xlu0 %2733
        %2737 = vset.pattern.permute.xlu0 16
        %2738 = vperm.xlu0 %2737, %v2632
        %v2739 = vpop.permute.xlu0 %2738
        %2742 = vset.pattern.permute.xlu0 16
        %2743 = vperm.xlu0 %2742, %v2633
        %v2744 = vpop.permute.xlu0 %2743
        %2747 = vset.pattern.permute.xlu0 16
        %2748 = vperm.xlu0 %2747, %v2634
        %v2749 = vpop.permute.xlu0 %2748
        %2752 = vset.pattern.permute.xlu0 16
        %2753 = vperm.xlu0 %2752, %v2635
        %v2754 = vpop.permute.xlu0 %2753
        %2757 = vset.pattern.permute.xlu0 16
        %2758 = vperm.xlu0 %2757, %v2636
        %v2759 = vpop.permute.xlu0 %2758
        %2762 = vset.pattern.permute.xlu0 16
        %2763 = vperm.xlu0 %2762, %v2637
        %v2764 = vpop.permute.xlu0 %2763
        %2767 = vset.pattern.permute.xlu0 16
        %2768 = vperm.xlu0 %2767, %v2638
        %v2769 = vpop.permute.xlu0 %2768
        %2772 = vset.pattern.permute.xlu0 16
        %2773 = vperm.xlu0 %2772, %v2639
        %v2774 = vpop.permute.xlu0 %2773
        %2777 = vset.pattern.permute.xlu0 16
        %2778 = vperm.xlu0 %2777, %v2640
        %v2779 = vpop.permute.xlu0 %2778
        %2782 = vset.pattern.permute.xlu0 16
        %2783 = vperm.xlu0 %2782, %v2641
        %v2784 = vpop.permute.xlu0 %2783
        %2787 = vset.pattern.permute.xlu0 16
        %2788 = vperm.xlu0 %2787, %v2642
        %v2789 = vpop.permute.xlu0 %2788
        %2792 = vset.pattern.permute.xlu0 16
        %2793 = vperm.xlu0 %2792, %v2643
        %v2794 = vpop.permute.xlu0 %2793
        %2797 = vset.pattern.permute.xlu0 16
        %2798 = vperm.xlu0 %2797, %v2644
        %v2799 = vpop.permute.xlu0 %2798
        %2802 = vset.pattern.permute.xlu0 16
        %2803 = vperm.xlu0 %2802, %v2645
        %v2804 = vpop.permute.xlu0 %2803
        %v2806 = vmul.f32 %v2456, %v2649
        %v2807 = vmul.f32 %v2461, %v2654
        %v2808 = vmul.f32 %v2466, %v2659
        %v2809 = vmul.f32 %v2471, %v2664
        %v2810 = vmul.f32 %v2476, %v2669
        %v2811 = vmul.f32 %v2481, %v2674
        %v2812 = vmul.f32 %v2486, %v2679
        %v2813 = vmul.f32 %v2491, %v2684
        %v2814 = vmul.f32 %v2496, %v2689
        %v2815 = vmul.f32 %v2501, %v2694
        %v2816 = vmul.f32 %v2506, %v2699
        %v2817 = vmul.f32 %v2511, %v2704
        %v2818 = vmul.f32 %v2516, %v2709
        %v2819 = vmul.f32 %v2521, %v2714
        %v2820 = vmul.f32 %v2526, %v2719
        %v2821 = vmul.f32 %v2531, %v2724
        %v2822 = vmul.f32 %v2536, %v2729
        %v2823 = vmul.f32 %v2541, %v2734
        %v2824 = vmul.f32 %v2546, %v2739
        %v2825 = vmul.f32 %v2551, %v2744
        %v2826 = vmul.f32 %v2556, %v2749
        %v2827 = vmul.f32 %v2561, %v2754
        %v2828 = vmul.f32 %v2566, %v2759
        %v2829 = vmul.f32 %v2571, %v2764
        %v2830 = vmul.f32 %v2576, %v2769
        %v2831 = vmul.f32 %v2581, %v2774
        %v2832 = vmul.f32 %v2586, %v2779
        %v2833 = vmul.f32 %v2591, %v2784
        %v2834 = vmul.f32 %v2596, %v2789
        %v2835 = vmul.f32 %v2601, %v2794
        %v2836 = vmul.f32 %v2606, %v2799
        %v2837 = vmul.f32 %v2611, %v2804
        %v2838 = vstv %s278
        %v2839 = vmul.f32 %v2838, %v2806
        %v2840 = vmul.f32 %v2838, %v2807
        %v2841 = vmul.f32 %v2838, %v2808
        %v2842 = vmul.f32 %v2838, %v2809
        %v2843 = vmul.f32 %v2838, %v2810
        %v2844 = vmul.f32 %v2838, %v2811
        %v2845 = vmul.f32 %v2838, %v2812
        %v2846 = vmul.f32 %v2838, %v2813
        %v2847 = vmul.f32 %v2838, %v2814
        %v2848 = vmul.f32 %v2838, %v2815
        %v2849 = vmul.f32 %v2838, %v2816
        %v2850 = vmul.f32 %v2838, %v2817
        %v2851 = vmul.f32 %v2838, %v2818
        %v2852 = vmul.f32 %v2838, %v2819
        %v2853 = vmul.f32 %v2838, %v2820
        %v2854 = vmul.f32 %v2838, %v2821
        %v2855 = vmul.f32 %v2838, %v2822
        %v2856 = vmul.f32 %v2838, %v2823
        %v2857 = vmul.f32 %v2838, %v2824
        %v2858 = vmul.f32 %v2838, %v2825
        %v2859 = vmul.f32 %v2838, %v2826
        %v2860 = vmul.f32 %v2838, %v2827
        %v2861 = vmul.f32 %v2838, %v2828
        %v2862 = vmul.f32 %v2838, %v2829
        %v2863 = vmul.f32 %v2838, %v2830
        %v2864 = vmul.f32 %v2838, %v2831
        %v2865 = vmul.f32 %v2838, %v2832
        %v2866 = vmul.f32 %v2838, %v2833
        %v2867 = vmul.f32 %v2838, %v2834
        %v2868 = vmul.f32 %v2838, %v2835
        %v2869 = vmul.f32 %v2838, %v2836
        %v2870 = vmul.f32 %v2838, %v2837
        %2871 = vxpose.xlu0.b32.start [1/16] %v2839, 128
        %2872 = vxpose.xlu0.b32.cont [2/16] %v2840, 128
        %2873 = vxpose.xlu0.b32.cont [3/16] %v2841, 128
        %2874 = vxpose.xlu0.b32.cont [4/16] %v2842, 128
        %2875 = vxpose.xlu0.b32.cont [5/16] %v2843, 128
        %2876 = vxpose.xlu0.b32.cont [6/16] %v2844, 128
        %2877 = vxpose.xlu0.b32.cont [7/16] %v2845, 128
        %2878 = vxpose.xlu0.b32.cont [8/16] %v2846, 128
        %2879 = vxpose.xlu0.b32.cont [9/16] %v2847, 128
        %2880 = vxpose.xlu0.b32.cont [10/16] %v2848, 128
        %2881 = vxpose.xlu0.b32.cont [11/16] %v2849, 128
        %2882 = vxpose.xlu0.b32.cont [12/16] %v2850, 128
        %2883 = vxpose.xlu0.b32.cont [13/16] %v2851, 128
        %2884 = vxpose.xlu0.b32.cont [14/16] %v2852, 128
        %2885 = vxpose.xlu0.b32.cont [15/16] %v2853, 128
        %2886 = vxpose.xlu0.b32.end [16/16] %v2854, 128
        %v2887 = vpop.trf.xlu0
        %v2888 = vpop.trf.xlu0
        %v2889 = vpop.trf.xlu0
        %v2890 = vpop.trf.xlu0
        %v2891 = vpop.trf.xlu0
        %v2892 = vpop.trf.xlu0
        %v2893 = vpop.trf.xlu0
        %v2894 = vpop.trf.xlu0
        %v2895 = vpop.trf.xlu0
        %v2896 = vpop.trf.xlu0
        %v2897 = vpop.trf.xlu0
        %v2898 = vpop.trf.xlu0
        %v2899 = vpop.trf.xlu0
        %v2900 = vpop.trf.xlu0
        %v2901 = vpop.trf.xlu0
        %v2902 = vpop.trf.xlu0
        %2903 = vxpose.xlu0.b32.start [1/16] %v2855, 128
        %2904 = vxpose.xlu0.b32.cont [2/16] %v2856, 128
        %2905 = vxpose.xlu0.b32.cont [3/16] %v2857, 128
        %2906 = vxpose.xlu0.b32.cont [4/16] %v2858, 128
        %2907 = vxpose.xlu0.b32.cont [5/16] %v2859, 128
        %2908 = vxpose.xlu0.b32.cont [6/16] %v2860, 128
        %2909 = vxpose.xlu0.b32.cont [7/16] %v2861, 128
        %2910 = vxpose.xlu0.b32.cont [8/16] %v2862, 128
        %2911 = vxpose.xlu0.b32.cont [9/16] %v2863, 128
        %2912 = vxpose.xlu0.b32.cont [10/16] %v2864, 128
        %2913 = vxpose.xlu0.b32.cont [11/16] %v2865, 128
        %2914 = vxpose.xlu0.b32.cont [12/16] %v2866, 128
        %2915 = vxpose.xlu0.b32.cont [13/16] %v2867, 128
        %2916 = vxpose.xlu0.b32.cont [14/16] %v2868, 128
        %2917 = vxpose.xlu0.b32.cont [15/16] %v2869, 128
        %2918 = vxpose.xlu0.b32.end [16/16] %v2870, 128
        %v2919 = vpop.trf.xlu0
        %v2920 = vpop.trf.xlu0
        %v2921 = vpop.trf.xlu0
        %v2922 = vpop.trf.xlu0
        %v2923 = vpop.trf.xlu0
        %v2924 = vpop.trf.xlu0
        %v2925 = vpop.trf.xlu0
        %v2926 = vpop.trf.xlu0
        %v2927 = vpop.trf.xlu0
        %v2928 = vpop.trf.xlu0
        %v2929 = vpop.trf.xlu0
        %v2930 = vpop.trf.xlu0
        %v2931 = vpop.trf.xlu0
        %v2932 = vpop.trf.xlu0
        %v2933 = vpop.trf.xlu0
        %v2934 = vpop.trf.xlu0
        %v2935 = vadd.f32 %v2887, %v636
        %v2936 = vadd.f32 %v2919, %v637
        %v2937 = vadd.f32 %v2888, %v640
        %v2938 = vadd.f32 %v2920, %v641
        %2939 = vst [vmem:[%s272] sm:$0xff] %v2935
        %2940 = vst [vmem:[%s272 + $0x8] sm:$0xff] %v2936
        %2941 = vst [vmem:[%s272 + $0x20] sm:$0xff] %v2937
        %2942 = vst [vmem:[%s272 + $0x28] sm:$0xff] %v2938
        %v2944 = vsel %vm1000, %v907, 0
        %v2947 = vsel %vm1000, %v908, 0
        %v2950 = vsel %vm1000, %v909, 0
        %v2953 = vsel %vm1000, %v910, 0
        %v2956 = vsel %vm1000, %v911, 0
        %v2959 = vsel %vm1000, %v912, 0
        %v2962 = vsel %vm1000, %v913, 0
        %v2965 = vsel %vm1000, %v914, 0
        %v2968 = vsel %vm1000, %v915, 0
        %v2971 = vsel %vm1000, %v916, 0
        %v2974 = vsel %vm1000, %v917, 0
        %v2977 = vsel %vm1000, %v918, 0
        %v2980 = vsel %vm1000, %v919, 0
        %v2983 = vsel %vm1000, %v920, 0
        %v2986 = vsel %vm1000, %v921, 0
        %v2989 = vsel %vm1000, %v922, 0
        %v2992 = vsel %vm1000, %v939, 0
        %v2995 = vsel %vm1000, %v940, 0
        %v2998 = vsel %vm1000, %v941, 0
        %v3001 = vsel %vm1000, %v942, 0
        %v3004 = vsel %vm1000, %v943, 0
        %v3007 = vsel %vm1000, %v944, 0
        %v3010 = vsel %vm1000, %v945, 0
        %v3013 = vsel %vm1000, %v946, 0
        %v3016 = vsel %vm1000, %v947, 0
        %v3019 = vsel %vm1000, %v948, 0
        %v3022 = vsel %vm1000, %v949, 0
        %v3025 = vsel %vm1000, %v950, 0
        %v3028 = vsel %vm1000, %v951, 0
        %v3031 = vsel %vm1000, %v952, 0
        %v3034 = vsel %vm1000, %v953, 0
        %v3037 = vsel %vm1000, %v954, 0
        %3039 = vmatprep.subr.mxu0 %v1100
        %3040 = vmatpush1.msra.mxu0 %v1098
        %3041 = vmatprep.subr.mxu0 0.0
        %3042 = vmatpush1.msra.mxu0 0.0
        %3043 = vmatprep.subr.mxu0 0.0
        %3044 = vmatpush1.msra.mxu0 0.0
        %3045 = vmatprep.subr.mxu0 0.0
        %3046 = vmatpush1.msra.mxu0 0.0
        %3047 = vmatprep.subr.mxu0 0.0
        %3048 = vmatpush1.msra.mxu0 0.0
        %3049 = vmatprep.subr.mxu0 0.0
        %3050 = vmatpush1.msra.mxu0 0.0
        %3051 = vmatprep.subr.mxu0 0.0
        %3052 = vmatpush1.msra.mxu0 0.0
        %3053 = vmatprep.subr.mxu0 0.0
        %3054 = vmatpush1.msra.mxu0 0.0
        %3055 = vmatprep.subr.mxu0 0.0
        %3056 = vmatpush1.msra.mxu0 0.0
        %3057 = vmatprep.subr.mxu0 0.0
        %3058 = vmatpush1.msra.mxu0 0.0
        %3059 = vmatprep.subr.mxu0 0.0
        %3060 = vmatpush1.msra.mxu0 0.0
        %3061 = vmatprep.subr.mxu0 0.0
        %3062 = vmatpush1.msra.mxu0 0.0
        %3063 = vmatprep.subr.mxu0 0.0
        %3064 = vmatpush1.msra.mxu0 0.0
        %3065 = vmatprep.subr.mxu0 0.0
        %3066 = vmatpush1.msra.mxu0 0.0
        %3067 = vmatprep.subr.mxu0 0.0
        %3068 = vmatpush1.msra.mxu0 0.0
        %3069 = vmatprep.subr.mxu0 0.0
        %3070 = vmatpush1.msra.mxu0 0.0
        %3071 = vmatprep.subr.mxu0 0.0
        %3072 = vmatpush1.msra.mxu0 0.0
        %3073 = vmatprep.subr.mxu0 0.0
        %3074 = vmatpush1.msra.mxu0 0.0
        %3075 = vmatprep.subr.mxu0 0.0
        %3076 = vmatpush1.msra.mxu0 0.0
        %3077 = vmatprep.subr.mxu0 0.0
        %3078 = vmatpush1.msra.mxu0 0.0
        %3079 = vmatprep.subr.mxu0 0.0
        %3080 = vmatpush1.msra.mxu0 0.0
        %3081 = vmatprep.subr.mxu0 0.0
        %3082 = vmatpush1.msra.mxu0 0.0
        %3083 = vmatprep.subr.mxu0 0.0
        %3084 = vmatpush1.msra.mxu0 0.0
        %3085 = vmatprep.subr.mxu0 0.0
        %3086 = vmatpush1.msra.mxu0 0.0
        %3087 = vmatprep.subr.mxu0 0.0
        %3088 = vmatpush1.msra.mxu0 0.0
        %3089 = vmatprep.subr.mxu0 0.0
        %3090 = vmatpush1.msra.mxu0 0.0
        %3091 = vmatprep.subr.mxu0 0.0
        %3092 = vmatpush1.msra.mxu0 0.0
        %3093 = vmatprep.subr.mxu0 0.0
        %3094 = vmatpush1.msra.mxu0 0.0
        %3095 = vmatprep.subr.mxu0 0.0
        %3096 = vmatpush1.msra.mxu0 0.0
        %3097 = vmatprep.subr.mxu0 0.0
        %3098 = vmatpush1.msra.mxu0 0.0
        %3099 = vmatprep.subr.mxu0 0.0
        %3100 = vmatpush1.msra.mxu0 0.0
        %3101 = vmatprep.subr.mxu0 0.0
        %3102 = vmatpush1.msra.mxu0 0.0
        %3103 = vmatprep.mubr.f32.mxu0 0.0
        %3104 = vmatmul.mubr.f32.gmra.mrb[0].mxu0 %v2944
        %v3105 = vpop.f32.mrb[0].mxu0
        %v3106 = vadd.f32 0.0, %v3105
        %v3107 = vpop.f32.mrb[0].mxu0
        %v3108 = vadd.f32 0.0, %v3107
        %3109 = vmatprep.mubr.f32.mxu0 0.0
        %3110 = vmatmul.mubr.f32.gmra.mrb[0].mxu0 %v2947
        %v3111 = vpop.f32.mrb[0].mxu0
        %v3112 = vadd.f32 0.0, %v3111
        %v3113 = vpop.f32.mrb[0].mxu0
        %v3114 = vadd.f32 0.0, %v3113
        %3115 = vmatprep.mubr.f32.mxu0 0.0
        %3116 = vmatmul.mubr.f32.gmra.mrb[0].mxu0 %v2950
        %v3117 = vpop.f32.mrb[0].mxu0
        %v3118 = vadd.f32 0.0, %v3117
        %v3119 = vpop.f32.mrb[0].mxu0
        %v3120 = vadd.f32 0.0, %v3119
        %3121 = vmatprep.mubr.f32.mxu0 0.0
        %3122 = vmatmul.mubr.f32.gmra.mrb[0].mxu0 %v2953
        %v3123 = vpop.f32.mrb[0].mxu0
        %v3124 = vadd.f32 0.0, %v3123
        %v3125 = vpop.f32.mrb[0].mxu0
        %v3126 = vadd.f32 0.0, %v3125
        %3127 = vmatprep.mubr.f32.mxu0 0.0
        %3128 = vmatmul.mubr.f32.gmra.mrb[0].mxu0 %v2956
        %v3129 = vpop.f32.mrb[0].mxu0
        %v3130 = vadd.f32 0.0, %v3129
        %v3131 = vpop.f32.mrb[0].mxu0
        %v3132 = vadd.f32 0.0, %v3131
        %3133 = vmatprep.mubr.f32.mxu0 0.0
        %3134 = vmatmul.mubr.f32.gmra.mrb[0].mxu0 %v2959
        %v3135 = vpop.f32.mrb[0].mxu0
        %v3136 = vadd.f32 0.0, %v3135
        %v3137 = vpop.f32.mrb[0].mxu0
        %v3138 = vadd.f32 0.0, %v3137
        %3139 = vmatprep.mubr.f32.mxu0 0.0
        %3140 = vmatmul.mubr.f32.gmra.mrb[0].mxu0 %v2962
        %v3141 = vpop.f32.mrb[0].mxu0
        %v3142 = vadd.f32 0.0, %v3141
        %v3143 = vpop.f32.mrb[0].mxu0
        %v3144 = vadd.f32 0.0, %v3143
        %3145 = vmatprep.mubr.f32.mxu0 0.0
        %3146 = vmatmul.mubr.f32.gmra.mrb[0].mxu0 %v2965
        %v3147 = vpop.f32.mrb[0].mxu0
        %v3148 = vadd.f32 0.0, %v3147
        %v3149 = vpop.f32.mrb[0].mxu0
        %v3150 = vadd.f32 0.0, %v3149
        %3151 = vmatprep.mubr.f32.mxu0 0.0
        %3152 = vmatmul.mubr.f32.gmra.mrb[0].mxu0 %v2968
        %v3153 = vpop.f32.mrb[0].mxu0
        %v3154 = vadd.f32 0.0, %v3153
        %v3155 = vpop.f32.mrb[0].mxu0
        %v3156 = vadd.f32 0.0, %v3155
        %3157 = vmatprep.mubr.f32.mxu0 0.0
        %3158 = vmatmul.mubr.f32.gmra.mrb[0].mxu0 %v2971
        %v3159 = vpop.f32.mrb[0].mxu0
        %v3160 = vadd.f32 0.0, %v3159
        %v3161 = vpop.f32.mrb[0].mxu0
        %v3162 = vadd.f32 0.0, %v3161
        %3163 = vmatprep.mubr.f32.mxu0 0.0
        %3164 = vmatmul.mubr.f32.gmra.mrb[0].mxu0 %v2974
        %v3165 = vpop.f32.mrb[0].mxu0
        %v3166 = vadd.f32 0.0, %v3165
        %v3167 = vpop.f32.mrb[0].mxu0
        %v3168 = vadd.f32 0.0, %v3167
        %3169 = vmatprep.mubr.f32.mxu0 0.0
        %3170 = vmatmul.mubr.f32.gmra.mrb[0].mxu0 %v2977
        %v3171 = vpop.f32.mrb[0].mxu0
        %v3172 = vadd.f32 0.0, %v3171
        %v3173 = vpop.f32.mrb[0].mxu0
        %v3174 = vadd.f32 0.0, %v3173
        %3175 = vmatprep.mubr.f32.mxu0 0.0
        %3176 = vmatmul.mubr.f32.gmra.mrb[0].mxu0 %v2980
        %v3177 = vpop.f32.mrb[0].mxu0
        %v3178 = vadd.f32 0.0, %v3177
        %v3179 = vpop.f32.mrb[0].mxu0
        %v3180 = vadd.f32 0.0, %v3179
        %3181 = vmatprep.mubr.f32.mxu0 0.0
        %3182 = vmatmul.mubr.f32.gmra.mrb[0].mxu0 %v2983
        %v3183 = vpop.f32.mrb[0].mxu0
        %v3184 = vadd.f32 0.0, %v3183
        %v3185 = vpop.f32.mrb[0].mxu0
        %v3186 = vadd.f32 0.0, %v3185
        %3187 = vmatprep.mubr.f32.mxu0 0.0
        %3188 = vmatmul.mubr.f32.gmra.mrb[0].mxu0 %v2986
        %v3189 = vpop.f32.mrb[0].mxu0
        %v3190 = vadd.f32 0.0, %v3189
        %v3191 = vpop.f32.mrb[0].mxu0
        %v3192 = vadd.f32 0.0, %v3191
        %3193 = vmatprep.mubr.f32.mxu0 0.0
        %3194 = vmatmul.mubr.f32.gmra.mrb[0].mxu0 %v2989
        %v3195 = vpop.f32.mrb[0].mxu0
        %v3196 = vadd.f32 0.0, %v3195
        %v3197 = vpop.f32.mrb[0].mxu0
        %v3198 = vadd.f32 0.0, %v3197
        %3199 = vmatprep.mubr.f32.mxu0 0.0
        %3200 = vmatmul.mubr.f32.gmra.mrb[0].mxu0 %v2992
        %v3201 = vpop.f32.mrb[0].mxu0
        %v3202 = vadd.f32 0.0, %v3201
        %v3203 = vpop.f32.mrb[0].mxu0
        %v3204 = vadd.f32 0.0, %v3203
        %3205 = vmatprep.mubr.f32.mxu0 0.0
        %3206 = vmatmul.mubr.f32.gmra.mrb[0].mxu0 %v2995
        %v3207 = vpop.f32.mrb[0].mxu0
        %v3208 = vadd.f32 0.0, %v3207
        %v3209 = vpop.f32.mrb[0].mxu0
        %v3210 = vadd.f32 0.0, %v3209
        %3211 = vmatprep.mubr.f32.mxu0 0.0
        %3212 = vmatmul.mubr.f32.gmra.mrb[0].mxu0 %v2998
        %v3213 = vpop.f32.mrb[0].mxu0
        %v3214 = vadd.f32 0.0, %v3213
        %v3215 = vpop.f32.mrb[0].mxu0
        %v3216 = vadd.f32 0.0, %v3215
        %3217 = vmatprep.mubr.f32.mxu0 0.0
        %3218 = vmatmul.mubr.f32.gmra.mrb[0].mxu0 %v3001
        %v3219 = vpop.f32.mrb[0].mxu0
        %v3220 = vadd.f32 0.0, %v3219
        %v3221 = vpop.f32.mrb[0].mxu0
        %v3222 = vadd.f32 0.0, %v3221
        %3223 = vmatprep.mubr.f32.mxu0 0.0
        %3224 = vmatmul.mubr.f32.gmra.mrb[0].mxu0 %v3004
        %v3225 = vpop.f32.mrb[0].mxu0
        %v3226 = vadd.f32 0.0, %v3225
        %v3227 = vpop.f32.mrb[0].mxu0
        %v3228 = vadd.f32 0.0, %v3227
        %3229 = vmatprep.mubr.f32.mxu0 0.0
        %3230 = vmatmul.mubr.f32.gmra.mrb[0].mxu0 %v3007
        %v3231 = vpop.f32.mrb[0].mxu0
        %v3232 = vadd.f32 0.0, %v3231
        %v3233 = vpop.f32.mrb[0].mxu0
        %v3234 = vadd.f32 0.0, %v3233
        %3235 = vmatprep.mubr.f32.mxu0 0.0
        %3236 = vmatmul.mubr.f32.gmra.mrb[0].mxu0 %v3010
        %v3237 = vpop.f32.mrb[0].mxu0
        %v3238 = vadd.f32 0.0, %v3237
        %v3239 = vpop.f32.mrb[0].mxu0
        %v3240 = vadd.f32 0.0, %v3239
        %3241 = vmatprep.mubr.f32.mxu0 0.0
        %3242 = vmatmul.mubr.f32.gmra.mrb[0].mxu0 %v3013
        %v3243 = vpop.f32.mrb[0].mxu0
        %v3244 = vadd.f32 0.0, %v3243
        %v3245 = vpop.f32.mrb[0].mxu0
        %v3246 = vadd.f32 0.0, %v3245
        %3247 = vmatprep.mubr.f32.mxu0 0.0
        %3248 = vmatmul.mubr.f32.gmra.mrb[0].mxu0 %v3016
        %v3249 = vpop.f32.mrb[0].mxu0
        %v3250 = vadd.f32 0.0, %v3249
        %v3251 = vpop.f32.mrb[0].mxu0
        %v3252 = vadd.f32 0.0, %v3251
        %3253 = vmatprep.mubr.f32.mxu0 0.0
        %3254 = vmatmul.mubr.f32.gmra.mrb[0].mxu0 %v3019
        %v3255 = vpop.f32.mrb[0].mxu0
        %v3256 = vadd.f32 0.0, %v3255
        %v3257 = vpop.f32.mrb[0].mxu0
        %v3258 = vadd.f32 0.0, %v3257
        %3259 = vmatprep.mubr.f32.mxu0 0.0
        %3260 = vmatmul.mubr.f32.gmra.mrb[0].mxu0 %v3022
        %v3261 = vpop.f32.mrb[0].mxu0
        %v3262 = vadd.f32 0.0, %v3261
        %v3263 = vpop.f32.mrb[0].mxu0
        %v3264 = vadd.f32 0.0, %v3263
        %3265 = vmatprep.mubr.f32.mxu0 0.0
        %3266 = vmatmul.mubr.f32.gmra.mrb[0].mxu0 %v3025
        %v3267 = vpop.f32.mrb[0].mxu0
        %v3268 = vadd.f32 0.0, %v3267
        %v3269 = vpop.f32.mrb[0].mxu0
        %v3270 = vadd.f32 0.0, %v3269
        %3271 = vmatprep.mubr.f32.mxu0 0.0
        %3272 = vmatmul.mubr.f32.gmra.mrb[0].mxu0 %v3028
        %v3273 = vpop.f32.mrb[0].mxu0
        %v3274 = vadd.f32 0.0, %v3273
        %v3275 = vpop.f32.mrb[0].mxu0
        %v3276 = vadd.f32 0.0, %v3275
        %3277 = vmatprep.mubr.f32.mxu0 0.0
        %3278 = vmatmul.mubr.f32.gmra.mrb[0].mxu0 %v3031
        %v3279 = vpop.f32.mrb[0].mxu0
        %v3280 = vadd.f32 0.0, %v3279
        %v3281 = vpop.f32.mrb[0].mxu0
        %v3282 = vadd.f32 0.0, %v3281
        %3283 = vmatprep.mubr.f32.mxu0 0.0
        %3284 = vmatmul.mubr.f32.gmra.mrb[0].mxu0 %v3034
        %v3285 = vpop.f32.mrb[0].mxu0
        %v3286 = vadd.f32 0.0, %v3285
        %v3287 = vpop.f32.mrb[0].mxu0
        %v3288 = vadd.f32 0.0, %v3287
        %3289 = vmatprep.mubr.f32.mxu0 0.0
        %3290 = vmatmul.mubr.f32.gmra.mrb[0].mxu0 %v3037
        %v3291 = vpop.f32.mrb[0].mxu0
        %v3292 = vadd.f32 0.0, %v3291
        %v3293 = vpop.f32.mrb[0].mxu0
        %v3294 = vadd.f32 0.0, %v3293
        %3295 = vdwg.mxu0
        %3296 = vmatprep.subr.mxu0 %v1104
        %3297 = vmatpush1.msra.mxu0 %v1102
        %3298 = vmatprep.subr.mxu0 0.0
        %3299 = vmatpush1.msra.mxu0 0.0
        %3300 = vmatprep.subr.mxu0 0.0
        %3301 = vmatpush1.msra.mxu0 0.0
        %3302 = vmatprep.subr.mxu0 0.0
        %3303 = vmatpush1.msra.mxu0 0.0
        %3304 = vmatprep.subr.mxu0 0.0
        %3305 = vmatpush1.msra.mxu0 0.0
        %3306 = vmatprep.subr.mxu0 0.0
        %3307 = vmatpush1.msra.mxu0 0.0
        %3308 = vmatprep.subr.mxu0 0.0
        %3309 = vmatpush1.msra.mxu0 0.0
        %3310 = vmatprep.subr.mxu0 0.0
        %3311 = vmatpush1.msra.mxu0 0.0
        %3312 = vmatprep.subr.mxu0 0.0
        %3313 = vmatpush1.msra.mxu0 0.0
        %3314 = vmatprep.subr.mxu0 0.0
        %3315 = vmatpush1.msra.mxu0 0.0
        %3316 = vmatprep.subr.mxu0 0.0
        %3317 = vmatpush1.msra.mxu0 0.0
        %3318 = vmatprep.subr.mxu0 0.0
        %3319 = vmatpush1.msra.mxu0 0.0
        %3320 = vmatprep.subr.mxu0 0.0
        %3321 = vmatpush1.msra.mxu0 0.0
        %3322 = vmatprep.subr.mxu0 0.0
        %3323 = vmatpush1.msra.mxu0 0.0
        %3324 = vmatprep.subr.mxu0 0.0
        %3325 = vmatpush1.msra.mxu0 0.0
        %3326 = vmatprep.subr.mxu0 0.0
        %3327 = vmatpush1.msra.mxu0 0.0
        %3328 = vmatprep.subr.mxu0 0.0
        %3329 = vmatpush1.msra.mxu0 0.0
        %3330 = vmatprep.subr.mxu0 0.0
        %3331 = vmatpush1.msra.mxu0 0.0
        %3332 = vmatprep.subr.mxu0 0.0
        %3333 = vmatpush1.msra.mxu0 0.0
        %3334 = vmatprep.subr.mxu0 0.0
        %3335 = vmatpush1.msra.mxu0 0.0
        %3336 = vmatprep.subr.mxu0 0.0
        %3337 = vmatpush1.msra.mxu0 0.0
        %3338 = vmatprep.subr.mxu0 0.0
        %3339 = vmatpush1.msra.mxu0 0.0
        %3340 = vmatprep.subr.mxu0 0.0
        %3341 = vmatpush1.msra.mxu0 0.0
        %3342 = vmatprep.subr.mxu0 0.0
        %3343 = vmatpush1.msra.mxu0 0.0
        %3344 = vmatprep.subr.mxu0 0.0
        %3345 = vmatpush1.msra.mxu0 0.0
        %3346 = vmatprep.subr.mxu0 0.0
        %3347 = vmatpush1.msra.mxu0 0.0
        %3348 = vmatprep.subr.mxu0 0.0
        %3349 = vmatpush1.msra.mxu0 0.0
        %3350 = vmatprep.subr.mxu0 0.0
        %3351 = vmatpush1.msra.mxu0 0.0
        %3352 = vmatprep.subr.mxu0 0.0
        %3353 = vmatpush1.msra.mxu0 0.0
        %3354 = vmatprep.subr.mxu0 0.0
        %3355 = vmatpush1.msra.mxu0 0.0
        %3356 = vmatprep.subr.mxu0 0.0
        %3357 = vmatpush1.msra.mxu0 0.0
        %3358 = vmatprep.subr.mxu0 0.0
        %3359 = vmatpush1.msra.mxu0 0.0
        %3360 = vmatprep.mubr.f32.mxu0 0.0
        %3361 = vmatmul.mubr.f32.gmra.mrb[0].mxu0 %v2944
        %v3362 = vpop.f32.mrb[0].mxu0
        %v3363 = vadd.f32 0.0, %v3362
        %v3364 = vpop.f32.mrb[0].mxu0
        %v3365 = vadd.f32 0.0, %v3364
        %3366 = vmatprep.mubr.f32.mxu0 0.0
        %3367 = vmatmul.mubr.f32.gmra.mrb[0].mxu0 %v2947
        %v3368 = vpop.f32.mrb[0].mxu0
        %v3369 = vadd.f32 0.0, %v3368
        %v3370 = vpop.f32.mrb[0].mxu0
        %v3371 = vadd.f32 0.0, %v3370
        %3372 = vmatprep.mubr.f32.mxu0 0.0
        %3373 = vmatmul.mubr.f32.gmra.mrb[0].mxu0 %v2950
        %v3374 = vpop.f32.mrb[0].mxu0
        %v3375 = vadd.f32 0.0, %v3374
        %v3376 = vpop.f32.mrb[0].mxu0
        %v3377 = vadd.f32 0.0, %v3376
        %3378 = vmatprep.mubr.f32.mxu0 0.0
        %3379 = vmatmul.mubr.f32.gmra.mrb[0].mxu0 %v2953
        %v3380 = vpop.f32.mrb[0].mxu0
        %v3381 = vadd.f32 0.0, %v3380
        %v3382 = vpop.f32.mrb[0].mxu0
        %v3383 = vadd.f32 0.0, %v3382
        %3384 = vmatprep.mubr.f32.mxu0 0.0
        %3385 = vmatmul.mubr.f32.gmra.mrb[0].mxu0 %v2956
        %v3386 = vpop.f32.mrb[0].mxu0
        %v3387 = vadd.f32 0.0, %v3386
        %v3388 = vpop.f32.mrb[0].mxu0
        %v3389 = vadd.f32 0.0, %v3388
        %3390 = vmatprep.mubr.f32.mxu0 0.0
        %3391 = vmatmul.mubr.f32.gmra.mrb[0].mxu0 %v2959
        %v3392 = vpop.f32.mrb[0].mxu0
        %v3393 = vadd.f32 0.0, %v3392
        %v3394 = vpop.f32.mrb[0].mxu0
        %v3395 = vadd.f32 0.0, %v3394
        %3396 = vmatprep.mubr.f32.mxu0 0.0
        %3397 = vmatmul.mubr.f32.gmra.mrb[0].mxu0 %v2962
        %v3398 = vpop.f32.mrb[0].mxu0
        %v3399 = vadd.f32 0.0, %v3398
        %v3400 = vpop.f32.mrb[0].mxu0
        %v3401 = vadd.f32 0.0, %v3400
        %3402 = vmatprep.mubr.f32.mxu0 0.0
        %3403 = vmatmul.mubr.f32.gmra.mrb[0].mxu0 %v2965
        %v3404 = vpop.f32.mrb[0].mxu0
        %v3405 = vadd.f32 0.0, %v3404
        %v3406 = vpop.f32.mrb[0].mxu0
        %v3407 = vadd.f32 0.0, %v3406
        %3408 = vmatprep.mubr.f32.mxu0 0.0
        %3409 = vmatmul.mubr.f32.gmra.mrb[0].mxu0 %v2968
        %v3410 = vpop.f32.mrb[0].mxu0
        %v3411 = vadd.f32 0.0, %v3410
        %v3412 = vpop.f32.mrb[0].mxu0
        %v3413 = vadd.f32 0.0, %v3412
        %3414 = vmatprep.mubr.f32.mxu0 0.0
        %3415 = vmatmul.mubr.f32.gmra.mrb[0].mxu0 %v2971
        %v3416 = vpop.f32.mrb[0].mxu0
        %v3417 = vadd.f32 0.0, %v3416
        %v3418 = vpop.f32.mrb[0].mxu0
        %v3419 = vadd.f32 0.0, %v3418
        %3420 = vmatprep.mubr.f32.mxu0 0.0
        %3421 = vmatmul.mubr.f32.gmra.mrb[0].mxu0 %v2974
        %v3422 = vpop.f32.mrb[0].mxu0
        %v3423 = vadd.f32 0.0, %v3422
        %v3424 = vpop.f32.mrb[0].mxu0
        %v3425 = vadd.f32 0.0, %v3424
        %3426 = vmatprep.mubr.f32.mxu0 0.0
        %3427 = vmatmul.mubr.f32.gmra.mrb[0].mxu0 %v2977
        %v3428 = vpop.f32.mrb[0].mxu0
        %v3429 = vadd.f32 0.0, %v3428
        %v3430 = vpop.f32.mrb[0].mxu0
        %v3431 = vadd.f32 0.0, %v3430
        %3432 = vmatprep.mubr.f32.mxu0 0.0
        %3433 = vmatmul.mubr.f32.gmra.mrb[0].mxu0 %v2980
        %v3434 = vpop.f32.mrb[0].mxu0
        %v3435 = vadd.f32 0.0, %v3434
        %v3436 = vpop.f32.mrb[0].mxu0
        %v3437 = vadd.f32 0.0, %v3436
        %3438 = vmatprep.mubr.f32.mxu0 0.0
        %3439 = vmatmul.mubr.f32.gmra.mrb[0].mxu0 %v2983
        %v3440 = vpop.f32.mrb[0].mxu0
        %v3441 = vadd.f32 0.0, %v3440
        %v3442 = vpop.f32.mrb[0].mxu0
        %v3443 = vadd.f32 0.0, %v3442
        %3444 = vmatprep.mubr.f32.mxu0 0.0
        %3445 = vmatmul.mubr.f32.gmra.mrb[0].mxu0 %v2986
        %v3446 = vpop.f32.mrb[0].mxu0
        %v3447 = vadd.f32 0.0, %v3446
        %v3448 = vpop.f32.mrb[0].mxu0
        %v3449 = vadd.f32 0.0, %v3448
        %3450 = vmatprep.mubr.f32.mxu0 0.0
        %3451 = vmatmul.mubr.f32.gmra.mrb[0].mxu0 %v2989
        %v3452 = vpop.f32.mrb[0].mxu0
        %v3453 = vadd.f32 0.0, %v3452
        %v3454 = vpop.f32.mrb[0].mxu0
        %v3455 = vadd.f32 0.0, %v3454
        %3456 = vmatprep.mubr.f32.mxu0 0.0
        %3457 = vmatmul.mubr.f32.gmra.mrb[0].mxu0 %v2992
        %v3458 = vpop.f32.mrb[0].mxu0
        %v3459 = vadd.f32 0.0, %v3458
        %v3460 = vpop.f32.mrb[0].mxu0
        %v3461 = vadd.f32 0.0, %v3460
        %3462 = vmatprep.mubr.f32.mxu0 0.0
        %3463 = vmatmul.mubr.f32.gmra.mrb[0].mxu0 %v2995
        %v3464 = vpop.f32.mrb[0].mxu0
        %v3465 = vadd.f32 0.0, %v3464
        %v3466 = vpop.f32.mrb[0].mxu0
        %v3467 = vadd.f32 0.0, %v3466
        %3468 = vmatprep.mubr.f32.mxu0 0.0
        %3469 = vmatmul.mubr.f32.gmra.mrb[0].mxu0 %v2998
        %v3470 = vpop.f32.mrb[0].mxu0
        %v3471 = vadd.f32 0.0, %v3470
        %v3472 = vpop.f32.mrb[0].mxu0
        %v3473 = vadd.f32 0.0, %v3472
        %3474 = vmatprep.mubr.f32.mxu0 0.0
        %3475 = vmatmul.mubr.f32.gmra.mrb[0].mxu0 %v3001
        %v3476 = vpop.f32.mrb[0].mxu0
        %v3477 = vadd.f32 0.0, %v3476
        %v3478 = vpop.f32.mrb[0].mxu0
        %v3479 = vadd.f32 0.0, %v3478
        %3480 = vmatprep.mubr.f32.mxu0 0.0
        %3481 = vmatmul.mubr.f32.gmra.mrb[0].mxu0 %v3004
        %v3482 = vpop.f32.mrb[0].mxu0
        %v3483 = vadd.f32 0.0, %v3482
        %v3484 = vpop.f32.mrb[0].mxu0
        %v3485 = vadd.f32 0.0, %v3484
        %3486 = vmatprep.mubr.f32.mxu0 0.0
        %3487 = vmatmul.mubr.f32.gmra.mrb[0].mxu0 %v3007
        %v3488 = vpop.f32.mrb[0].mxu0
        %v3489 = vadd.f32 0.0, %v3488
        %v3490 = vpop.f32.mrb[0].mxu0
        %v3491 = vadd.f32 0.0, %v3490
        %3492 = vmatprep.mubr.f32.mxu0 0.0
        %3493 = vmatmul.mubr.f32.gmra.mrb[0].mxu0 %v3010
        %v3494 = vpop.f32.mrb[0].mxu0
        %v3495 = vadd.f32 0.0, %v3494
        %v3496 = vpop.f32.mrb[0].mxu0
        %v3497 = vadd.f32 0.0, %v3496
        %3498 = vmatprep.mubr.f32.mxu0 0.0
        %3499 = vmatmul.mubr.f32.gmra.mrb[0].mxu0 %v3013
        %v3500 = vpop.f32.mrb[0].mxu0
        %v3501 = vadd.f32 0.0, %v3500
        %v3502 = vpop.f32.mrb[0].mxu0
        %v3503 = vadd.f32 0.0, %v3502
        %3504 = vmatprep.mubr.f32.mxu0 0.0
        %3505 = vmatmul.mubr.f32.gmra.mrb[0].mxu0 %v3016
        %v3506 = vpop.f32.mrb[0].mxu0
        %v3507 = vadd.f32 0.0, %v3506
        %v3508 = vpop.f32.mrb[0].mxu0
        %v3509 = vadd.f32 0.0, %v3508
        %3510 = vmatprep.mubr.f32.mxu0 0.0
        %3511 = vmatmul.mubr.f32.gmra.mrb[0].mxu0 %v3019
        %v3512 = vpop.f32.mrb[0].mxu0
        %v3513 = vadd.f32 0.0, %v3512
        %v3514 = vpop.f32.mrb[0].mxu0
        %v3515 = vadd.f32 0.0, %v3514
        %3516 = vmatprep.mubr.f32.mxu0 0.0
        %3517 = vmatmul.mubr.f32.gmra.mrb[0].mxu0 %v3022
        %v3518 = vpop.f32.mrb[0].mxu0
        %v3519 = vadd.f32 0.0, %v3518
        %v3520 = vpop.f32.mrb[0].mxu0
        %v3521 = vadd.f32 0.0, %v3520
        %3522 = vmatprep.mubr.f32.mxu0 0.0
        %3523 = vmatmul.mubr.f32.gmra.mrb[0].mxu0 %v3025
        %v3524 = vpop.f32.mrb[0].mxu0
        %v3525 = vadd.f32 0.0, %v3524
        %v3526 = vpop.f32.mrb[0].mxu0
        %v3527 = vadd.f32 0.0, %v3526
        %3528 = vmatprep.mubr.f32.mxu0 0.0
        %3529 = vmatmul.mubr.f32.gmra.mrb[0].mxu0 %v3028
        %v3530 = vpop.f32.mrb[0].mxu0
        %v3531 = vadd.f32 0.0, %v3530
        %v3532 = vpop.f32.mrb[0].mxu0
        %v3533 = vadd.f32 0.0, %v3532
        %3534 = vmatprep.mubr.f32.mxu0 0.0
        %3535 = vmatmul.mubr.f32.gmra.mrb[0].mxu0 %v3031
        %v3536 = vpop.f32.mrb[0].mxu0
        %v3537 = vadd.f32 0.0, %v3536
        %v3538 = vpop.f32.mrb[0].mxu0
        %v3539 = vadd.f32 0.0, %v3538
        %3540 = vmatprep.mubr.f32.mxu0 0.0
        %3541 = vmatmul.mubr.f32.gmra.mrb[0].mxu0 %v3034
        %v3542 = vpop.f32.mrb[0].mxu0
        %v3543 = vadd.f32 0.0, %v3542
        %v3544 = vpop.f32.mrb[0].mxu0
        %v3545 = vadd.f32 0.0, %v3544
        %3546 = vmatprep.mubr.f32.mxu0 0.0
        %3547 = vmatmul.mubr.f32.gmra.mrb[0].mxu0 %v3037
        %v3548 = vpop.f32.mrb[0].mxu0
        %v3549 = vadd.f32 0.0, %v3548
        %v3550 = vpop.f32.mrb[0].mxu0
        %v3551 = vadd.f32 0.0, %v3550
        %3552 = vdwg.mxu0
        %v3553 = vmax.f32 %v3106, %v3108
        %v3554 = vmax.f32 %v3553, %v3363
        %v3555 = vmax.f32 %v3554, %v3365
        %3556 = vmax.xlane.f32.xlu0 %v3555
        %v3557 = vpop.xlane.xlu0 %3556
        %v3558 = vmax.f32 %v3112, %v3114
        %v3559 = vmax.f32 %v3558, %v3369
        %v3560 = vmax.f32 %v3559, %v3371
        %3561 = vmax.xlane.f32.xlu0 %v3560
        %v3562 = vpop.xlane.xlu0 %3561
        %v3563 = vmax.f32 %v3118, %v3120
        %v3564 = vmax.f32 %v3563, %v3375
        %v3565 = vmax.f32 %v3564, %v3377
        %3566 = vmax.xlane.f32.xlu0 %v3565
        %v3567 = vpop.xlane.xlu0 %3566
        %v3568 = vmax.f32 %v3124, %v3126
        %v3569 = vmax.f32 %v3568, %v3381
        %v3570 = vmax.f32 %v3569, %v3383
        %3571 = vmax.xlane.f32.xlu0 %v3570
        %v3572 = vpop.xlane.xlu0 %3571
        %v3573 = vmax.f32 %v3130, %v3132
        %v3574 = vmax.f32 %v3573, %v3387
        %v3575 = vmax.f32 %v3574, %v3389
        %3576 = vmax.xlane.f32.xlu0 %v3575
        %v3577 = vpop.xlane.xlu0 %3576
        %v3578 = vmax.f32 %v3136, %v3138
        %v3579 = vmax.f32 %v3578, %v3393
        %v3580 = vmax.f32 %v3579, %v3395
        %3581 = vmax.xlane.f32.xlu0 %v3580
        %v3582 = vpop.xlane.xlu0 %3581
        %v3583 = vmax.f32 %v3142, %v3144
        %v3584 = vmax.f32 %v3583, %v3399
        %v3585 = vmax.f32 %v3584, %v3401
        %3586 = vmax.xlane.f32.xlu0 %v3585
        %v3587 = vpop.xlane.xlu0 %3586
        %v3588 = vmax.f32 %v3148, %v3150
        %v3589 = vmax.f32 %v3588, %v3405
        %v3590 = vmax.f32 %v3589, %v3407
        %3591 = vmax.xlane.f32.xlu0 %v3590
        %v3592 = vpop.xlane.xlu0 %3591
        %v3593 = vmax.f32 %v3154, %v3156
        %v3594 = vmax.f32 %v3593, %v3411
        %v3595 = vmax.f32 %v3594, %v3413
        %3596 = vmax.xlane.f32.xlu0 %v3595
        %v3597 = vpop.xlane.xlu0 %3596
        %v3598 = vmax.f32 %v3160, %v3162
        %v3599 = vmax.f32 %v3598, %v3417
        %v3600 = vmax.f32 %v3599, %v3419
        %3601 = vmax.xlane.f32.xlu0 %v3600
        %v3602 = vpop.xlane.xlu0 %3601
        %v3603 = vmax.f32 %v3166, %v3168
        %v3604 = vmax.f32 %v3603, %v3423
        %v3605 = vmax.f32 %v3604, %v3425
        %3606 = vmax.xlane.f32.xlu0 %v3605
        %v3607 = vpop.xlane.xlu0 %3606
        %v3608 = vmax.f32 %v3172, %v3174
        %v3609 = vmax.f32 %v3608, %v3429
        %v3610 = vmax.f32 %v3609, %v3431
        %3611 = vmax.xlane.f32.xlu0 %v3610
        %v3612 = vpop.xlane.xlu0 %3611
        %v3613 = vmax.f32 %v3178, %v3180
        %v3614 = vmax.f32 %v3613, %v3435
        %v3615 = vmax.f32 %v3614, %v3437
        %3616 = vmax.xlane.f32.xlu0 %v3615
        %v3617 = vpop.xlane.xlu0 %3616
        %v3618 = vmax.f32 %v3184, %v3186
        %v3619 = vmax.f32 %v3618, %v3441
        %v3620 = vmax.f32 %v3619, %v3443
        %3621 = vmax.xlane.f32.xlu0 %v3620
        %v3622 = vpop.xlane.xlu0 %3621
        %v3623 = vmax.f32 %v3190, %v3192
        %v3624 = vmax.f32 %v3623, %v3447
        %v3625 = vmax.f32 %v3624, %v3449
        %3626 = vmax.xlane.f32.xlu0 %v3625
        %v3627 = vpop.xlane.xlu0 %3626
        %v3628 = vmax.f32 %v3196, %v3198
        %v3629 = vmax.f32 %v3628, %v3453
        %v3630 = vmax.f32 %v3629, %v3455
        %3631 = vmax.xlane.f32.xlu0 %v3630
        %v3632 = vpop.xlane.xlu0 %3631
        %v3633 = vmax.f32 %v3202, %v3204
        %v3634 = vmax.f32 %v3633, %v3459
        %v3635 = vmax.f32 %v3634, %v3461
        %3636 = vmax.xlane.f32.xlu0 %v3635
        %v3637 = vpop.xlane.xlu0 %3636
        %v3638 = vmax.f32 %v3208, %v3210
        %v3639 = vmax.f32 %v3638, %v3465
        %v3640 = vmax.f32 %v3639, %v3467
        %3641 = vmax.xlane.f32.xlu0 %v3640
        %v3642 = vpop.xlane.xlu0 %3641
        %v3643 = vmax.f32 %v3214, %v3216
        %v3644 = vmax.f32 %v3643, %v3471
        %v3645 = vmax.f32 %v3644, %v3473
        %3646 = vmax.xlane.f32.xlu0 %v3645
        %v3647 = vpop.xlane.xlu0 %3646
        %v3648 = vmax.f32 %v3220, %v3222
        %v3649 = vmax.f32 %v3648, %v3477
        %v3650 = vmax.f32 %v3649, %v3479
        %3651 = vmax.xlane.f32.xlu0 %v3650
        %v3652 = vpop.xlane.xlu0 %3651
        %v3653 = vmax.f32 %v3226, %v3228
        %v3654 = vmax.f32 %v3653, %v3483
        %v3655 = vmax.f32 %v3654, %v3485
        %3656 = vmax.xlane.f32.xlu0 %v3655
        %v3657 = vpop.xlane.xlu0 %3656
        %v3658 = vmax.f32 %v3232, %v3234
        %v3659 = vmax.f32 %v3658, %v3489
        %v3660 = vmax.f32 %v3659, %v3491
        %3661 = vmax.xlane.f32.xlu0 %v3660
        %v3662 = vpop.xlane.xlu0 %3661
        %v3663 = vmax.f32 %v3238, %v3240
        %v3664 = vmax.f32 %v3663, %v3495
        %v3665 = vmax.f32 %v3664, %v3497
        %3666 = vmax.xlane.f32.xlu0 %v3665
        %v3667 = vpop.xlane.xlu0 %3666
        %v3668 = vmax.f32 %v3244, %v3246
        %v3669 = vmax.f32 %v3668, %v3501
        %v3670 = vmax.f32 %v3669, %v3503
        %3671 = vmax.xlane.f32.xlu0 %v3670
        %v3672 = vpop.xlane.xlu0 %3671
        %v3673 = vmax.f32 %v3250, %v3252
        %v3674 = vmax.f32 %v3673, %v3507
        %v3675 = vmax.f32 %v3674, %v3509
        %3676 = vmax.xlane.f32.xlu0 %v3675
        %v3677 = vpop.xlane.xlu0 %3676
        %v3678 = vmax.f32 %v3256, %v3258
        %v3679 = vmax.f32 %v3678, %v3513
        %v3680 = vmax.f32 %v3679, %v3515
        %3681 = vmax.xlane.f32.xlu0 %v3680
        %v3682 = vpop.xlane.xlu0 %3681
        %v3683 = vmax.f32 %v3262, %v3264
        %v3684 = vmax.f32 %v3683, %v3519
        %v3685 = vmax.f32 %v3684, %v3521
        %3686 = vmax.xlane.f32.xlu0 %v3685
        %v3687 = vpop.xlane.xlu0 %3686
        %v3688 = vmax.f32 %v3268, %v3270
        %v3689 = vmax.f32 %v3688, %v3525
        %v3690 = vmax.f32 %v3689, %v3527
        %3691 = vmax.xlane.f32.xlu0 %v3690
        %v3692 = vpop.xlane.xlu0 %3691
        %v3693 = vmax.f32 %v3274, %v3276
        %v3694 = vmax.f32 %v3693, %v3531
        %v3695 = vmax.f32 %v3694, %v3533
        %3696 = vmax.xlane.f32.xlu0 %v3695
        %v3697 = vpop.xlane.xlu0 %3696
        %v3698 = vmax.f32 %v3280, %v3282
        %v3699 = vmax.f32 %v3698, %v3537
        %v3700 = vmax.f32 %v3699, %v3539
        %3701 = vmax.xlane.f32.xlu0 %v3700
        %v3702 = vpop.xlane.xlu0 %3701
        %v3703 = vmax.f32 %v3286, %v3288
        %v3704 = vmax.f32 %v3703, %v3543
        %v3705 = vmax.f32 %v3704, %v3545
        %3706 = vmax.xlane.f32.xlu0 %v3705
        %v3707 = vpop.xlane.xlu0 %3706
        %v3708 = vmax.f32 %v3292, %v3294
        %v3709 = vmax.f32 %v3708, %v3549
        %v3710 = vmax.f32 %v3709, %v3551
        %3711 = vmax.xlane.f32.xlu0 %v3710
        %v3712 = vpop.xlane.xlu0 %3711
        %v3713 = vsub.f32 %v3106, %v3557
        %v3714 = vsub.f32 %v3108, %v3557
        %v3715 = vsub.f32 %v3363, %v3557
        %v3716 = vsub.f32 %v3365, %v3557
        %v3717 = vsub.f32 %v3112, %v3562
        %v3718 = vsub.f32 %v3114, %v3562
        %v3719 = vsub.f32 %v3369, %v3562
        %v3720 = vsub.f32 %v3371, %v3562
        %v3721 = vsub.f32 %v3118, %v3567
        %v3722 = vsub.f32 %v3120, %v3567
        %v3723 = vsub.f32 %v3375, %v3567
        %v3724 = vsub.f32 %v3377, %v3567
        %v3725 = vsub.f32 %v3124, %v3572
        %v3726 = vsub.f32 %v3126, %v3572
        %v3727 = vsub.f32 %v3381, %v3572
        %v3728 = vsub.f32 %v3383, %v3572
        %v3729 = vsub.f32 %v3130, %v3577
        %v3730 = vsub.f32 %v3132, %v3577
        %v3731 = vsub.f32 %v3387, %v3577
        %v3732 = vsub.f32 %v3389, %v3577
        %v3733 = vsub.f32 %v3136, %v3582
        %v3734 = vsub.f32 %v3138, %v3582
        %v3735 = vsub.f32 %v3393, %v3582
        %v3736 = vsub.f32 %v3395, %v3582
        %v3737 = vsub.f32 %v3142, %v3587
        %v3738 = vsub.f32 %v3144, %v3587
        %v3739 = vsub.f32 %v3399, %v3587
        %v3740 = vsub.f32 %v3401, %v3587
        %v3741 = vsub.f32 %v3148, %v3592
        %v3742 = vsub.f32 %v3150, %v3592
        %v3743 = vsub.f32 %v3405, %v3592
        %v3744 = vsub.f32 %v3407, %v3592
        %v3745 = vsub.f32 %v3154, %v3597
        %v3746 = vsub.f32 %v3156, %v3597
        %v3747 = vsub.f32 %v3411, %v3597
        %v3748 = vsub.f32 %v3413, %v3597
        %v3749 = vsub.f32 %v3160, %v3602
        %v3750 = vsub.f32 %v3162, %v3602
        %v3751 = vsub.f32 %v3417, %v3602
        %v3752 = vsub.f32 %v3419, %v3602
        %v3753 = vsub.f32 %v3166, %v3607
        %v3754 = vsub.f32 %v3168, %v3607
        %v3755 = vsub.f32 %v3423, %v3607
        %v3756 = vsub.f32 %v3425, %v3607
        %v3757 = vsub.f32 %v3172, %v3612
        %v3758 = vsub.f32 %v3174, %v3612
        %v3759 = vsub.f32 %v3429, %v3612
        %v3760 = vsub.f32 %v3431, %v3612
        %v3761 = vsub.f32 %v3178, %v3617
        %v3762 = vsub.f32 %v3180, %v3617
        %v3763 = vsub.f32 %v3435, %v3617
        %v3764 = vsub.f32 %v3437, %v3617
        %v3765 = vsub.f32 %v3184, %v3622
        %v3766 = vsub.f32 %v3186, %v3622
        %v3767 = vsub.f32 %v3441, %v3622
        %v3768 = vsub.f32 %v3443, %v3622
        %v3769 = vsub.f32 %v3190, %v3627
        %v3770 = vsub.f32 %v3192, %v3627
        %v3771 = vsub.f32 %v3447, %v3627
        %v3772 = vsub.f32 %v3449, %v3627
        %v3773 = vsub.f32 %v3196, %v3632
        %v3774 = vsub.f32 %v3198, %v3632
        %v3775 = vsub.f32 %v3453, %v3632
        %v3776 = vsub.f32 %v3455, %v3632
        %v3777 = vsub.f32 %v3202, %v3637
        %v3778 = vsub.f32 %v3204, %v3637
        %v3779 = vsub.f32 %v3459, %v3637
        %v3780 = vsub.f32 %v3461, %v3637
        %v3781 = vsub.f32 %v3208, %v3642
        %v3782 = vsub.f32 %v3210, %v3642
        %v3783 = vsub.f32 %v3465, %v3642
        %v3784 = vsub.f32 %v3467, %v3642
        %v3785 = vsub.f32 %v3214, %v3647
        %v3786 = vsub.f32 %v3216, %v3647
        %v3787 = vsub.f32 %v3471, %v3647
        %v3788 = vsub.f32 %v3473, %v3647
        %v3789 = vsub.f32 %v3220, %v3652
        %v3790 = vsub.f32 %v3222, %v3652
        %v3791 = vsub.f32 %v3477, %v3652
        %v3792 = vsub.f32 %v3479, %v3652
        %v3793 = vsub.f32 %v3226, %v3657
        %v3794 = vsub.f32 %v3228, %v3657
        %v3795 = vsub.f32 %v3483, %v3657
        %v3796 = vsub.f32 %v3485, %v3657
        %v3797 = vsub.f32 %v3232, %v3662
        %v3798 = vsub.f32 %v3234, %v3662
        %v3799 = vsub.f32 %v3489, %v3662
        %v3800 = vsub.f32 %v3491, %v3662
        %v3801 = vsub.f32 %v3238, %v3667
        %v3802 = vsub.f32 %v3240, %v3667
        %v3803 = vsub.f32 %v3495, %v3667
        %v3804 = vsub.f32 %v3497, %v3667
        %v3805 = vsub.f32 %v3244, %v3672
        %v3806 = vsub.f32 %v3246, %v3672
        %v3807 = vsub.f32 %v3501, %v3672
        %v3808 = vsub.f32 %v3503, %v3672
        %v3809 = vsub.f32 %v3250, %v3677
        %v3810 = vsub.f32 %v3252, %v3677
        %v3811 = vsub.f32 %v3507, %v3677
        %v3812 = vsub.f32 %v3509, %v3677
        %v3813 = vsub.f32 %v3256, %v3682
        %v3814 = vsub.f32 %v3258, %v3682
        %v3815 = vsub.f32 %v3513, %v3682
        %v3816 = vsub.f32 %v3515, %v3682
        %v3817 = vsub.f32 %v3262, %v3687
        %v3818 = vsub.f32 %v3264, %v3687
        %v3819 = vsub.f32 %v3519, %v3687
        %v3820 = vsub.f32 %v3521, %v3687
        %v3821 = vsub.f32 %v3268, %v3692
        %v3822 = vsub.f32 %v3270, %v3692
        %v3823 = vsub.f32 %v3525, %v3692
        %v3824 = vsub.f32 %v3527, %v3692
        %v3825 = vsub.f32 %v3274, %v3697
        %v3826 = vsub.f32 %v3276, %v3697
        %v3827 = vsub.f32 %v3531, %v3697
        %v3828 = vsub.f32 %v3533, %v3697
        %v3829 = vsub.f32 %v3280, %v3702
        %v3830 = vsub.f32 %v3282, %v3702
        %v3831 = vsub.f32 %v3537, %v3702
        %v3832 = vsub.f32 %v3539, %v3702
        %v3833 = vsub.f32 %v3286, %v3707
        %v3834 = vsub.f32 %v3288, %v3707
        %v3835 = vsub.f32 %v3543, %v3707
        %v3836 = vsub.f32 %v3545, %v3707
        %v3837 = vsub.f32 %v3292, %v3712
        %v3838 = vsub.f32 %v3294, %v3712
        %v3839 = vsub.f32 %v3549, %v3712
        %v3840 = vsub.f32 %v3551, %v3712
        %v3841 = vmul.f32 %v3713, 1.442695
        %v3842 = vpow.pop %v3841
        %v3843 = vmul.f32 %v3714, 1.442695
        %v3844 = vpow.pop %v3843
        %v3845 = vmul.f32 %v3715, 1.442695
        %v3846 = vpow.pop %v3845
        %v3847 = vmul.f32 %v3716, 1.442695
        %v3848 = vpow.pop %v3847
        %v3849 = vmul.f32 %v3717, 1.442695
        %v3850 = vpow.pop %v3849
        %v3851 = vmul.f32 %v3718, 1.442695
        %v3852 = vpow.pop %v3851
        %v3853 = vmul.f32 %v3719, 1.442695
        %v3854 = vpow.pop %v3853
        %v3855 = vmul.f32 %v3720, 1.442695
        %v3856 = vpow.pop %v3855
        %v3857 = vmul.f32 %v3721, 1.442695
        %v3858 = vpow.pop %v3857
        %v3859 = vmul.f32 %v3722, 1.442695
        %v3860 = vpow.pop %v3859
        %v3861 = vmul.f32 %v3723, 1.442695
        %v3862 = vpow.pop %v3861
        %v3863 = vmul.f32 %v3724, 1.442695
        %v3864 = vpow.pop %v3863
        %v3865 = vmul.f32 %v3725, 1.442695
        %v3866 = vpow.pop %v3865
        %v3867 = vmul.f32 %v3726, 1.442695
        %v3868 = vpow.pop %v3867
        %v3869 = vmul.f32 %v3727, 1.442695
        %v3870 = vpow.pop %v3869
        %v3871 = vmul.f32 %v3728, 1.442695
        %v3872 = vpow.pop %v3871
        %v3873 = vmul.f32 %v3729, 1.442695
        %v3874 = vpow.pop %v3873
        %v3875 = vmul.f32 %v3730, 1.442695
        %v3876 = vpow.pop %v3875
        %v3877 = vmul.f32 %v3731, 1.442695
        %v3878 = vpow.pop %v3877
        %v3879 = vmul.f32 %v3732, 1.442695
        %v3880 = vpow.pop %v3879
        %v3881 = vmul.f32 %v3733, 1.442695
        %v3882 = vpow.pop %v3881
        %v3883 = vmul.f32 %v3734, 1.442695
        %v3884 = vpow.pop %v3883
        %v3885 = vmul.f32 %v3735, 1.442695
        %v3886 = vpow.pop %v3885
        %v3887 = vmul.f32 %v3736, 1.442695
        %v3888 = vpow.pop %v3887
        %v3889 = vmul.f32 %v3737, 1.442695
        %v3890 = vpow.pop %v3889
        %v3891 = vmul.f32 %v3738, 1.442695
        %v3892 = vpow.pop %v3891
        %v3893 = vmul.f32 %v3739, 1.442695
        %v3894 = vpow.pop %v3893
        %v3895 = vmul.f32 %v3740, 1.442695
        %v3896 = vpow.pop %v3895
        %v3897 = vmul.f32 %v3741, 1.442695
        %v3898 = vpow.pop %v3897
        %v3899 = vmul.f32 %v3742, 1.442695
        %v3900 = vpow.pop %v3899
        %v3901 = vmul.f32 %v3743, 1.442695
        %v3902 = vpow.pop %v3901
        %v3903 = vmul.f32 %v3744, 1.442695
        %v3904 = vpow.pop %v3903
        %v3905 = vmul.f32 %v3745, 1.442695
        %v3906 = vpow.pop %v3905
        %v3907 = vmul.f32 %v3746, 1.442695
        %v3908 = vpow.pop %v3907
        %v3909 = vmul.f32 %v3747, 1.442695
        %v3910 = vpow.pop %v3909
        %v3911 = vmul.f32 %v3748, 1.442695
        %v3912 = vpow.pop %v3911
        %v3913 = vmul.f32 %v3749, 1.442695
        %v3914 = vpow.pop %v3913
        %v3915 = vmul.f32 %v3750, 1.442695
        %v3916 = vpow.pop %v3915
        %v3917 = vmul.f32 %v3751, 1.442695
        %v3918 = vpow.pop %v3917
        %v3919 = vmul.f32 %v3752, 1.442695
        %v3920 = vpow.pop %v3919
        %v3921 = vmul.f32 %v3753, 1.442695
        %v3922 = vpow.pop %v3921
        %v3923 = vmul.f32 %v3754, 1.442695
        %v3924 = vpow.pop %v3923
        %v3925 = vmul.f32 %v3755, 1.442695
        %v3926 = vpow.pop %v3925
        %v3927 = vmul.f32 %v3756, 1.442695
        %v3928 = vpow.pop %v3927
        %v3929 = vmul.f32 %v3757, 1.442695
        %v3930 = vpow.pop %v3929
        %v3931 = vmul.f32 %v3758, 1.442695
        %v3932 = vpow.pop %v3931
        %v3933 = vmul.f32 %v3759, 1.442695
        %v3934 = vpow.pop %v3933
        %v3935 = vmul.f32 %v3760, 1.442695
        %v3936 = vpow.pop %v3935
        %v3937 = vmul.f32 %v3761, 1.442695
        %v3938 = vpow.pop %v3937
        %v3939 = vmul.f32 %v3762, 1.442695
        %v3940 = vpow.pop %v3939
        %v3941 = vmul.f32 %v3763, 1.442695
        %v3942 = vpow.pop %v3941
        %v3943 = vmul.f32 %v3764, 1.442695
        %v3944 = vpow.pop %v3943
        %v3945 = vmul.f32 %v3765, 1.442695
        %v3946 = vpow.pop %v3945
        %v3947 = vmul.f32 %v3766, 1.442695
        %v3948 = vpow.pop %v3947
        %v3949 = vmul.f32 %v3767, 1.442695
        %v3950 = vpow.pop %v3949
        %v3951 = vmul.f32 %v3768, 1.442695
        %v3952 = vpow.pop %v3951
        %v3953 = vmul.f32 %v3769, 1.442695
        %v3954 = vpow.pop %v3953
        %v3955 = vmul.f32 %v3770, 1.442695
        %v3956 = vpow.pop %v3955
        %v3957 = vmul.f32 %v3771, 1.442695
        %v3958 = vpow.pop %v3957
        %v3959 = vmul.f32 %v3772, 1.442695
        %v3960 = vpow.pop %v3959
        %v3961 = vmul.f32 %v3773, 1.442695
        %v3962 = vpow.pop %v3961
        %v3963 = vmul.f32 %v3774, 1.442695
        %v3964 = vpow.pop %v3963
        %v3965 = vmul.f32 %v3775, 1.442695
        %v3966 = vpow.pop %v3965
        %v3967 = vmul.f32 %v3776, 1.442695
        %v3968 = vpow.pop %v3967
        %v3969 = vmul.f32 %v3777, 1.442695
        %v3970 = vpow.pop %v3969
        %v3971 = vmul.f32 %v3778, 1.442695
        %v3972 = vpow.pop %v3971
        %v3973 = vmul.f32 %v3779, 1.442695
        %v3974 = vpow.pop %v3973
        %v3975 = vmul.f32 %v3780, 1.442695
        %v3976 = vpow.pop %v3975
        %v3977 = vmul.f32 %v3781, 1.442695
        %v3978 = vpow.pop %v3977
        %v3979 = vmul.f32 %v3782, 1.442695
        %v3980 = vpow.pop %v3979
        %v3981 = vmul.f32 %v3783, 1.442695
        %v3982 = vpow.pop %v3981
        %v3983 = vmul.f32 %v3784, 1.442695
        %v3984 = vpow.pop %v3983
        %v3985 = vmul.f32 %v3785, 1.442695
        %v3986 = vpow.pop %v3985
        %v3987 = vmul.f32 %v3786, 1.442695
        %v3988 = vpow.pop %v3987
        %v3989 = vmul.f32 %v3787, 1.442695
        %v3990 = vpow.pop %v3989
        %v3991 = vmul.f32 %v3788, 1.442695
        %v3992 = vpow.pop %v3991
        %v3993 = vmul.f32 %v3789, 1.442695
        %v3994 = vpow.pop %v3993
        %v3995 = vmul.f32 %v3790, 1.442695
        %v3996 = vpow.pop %v3995
        %v3997 = vmul.f32 %v3791, 1.442695
        %v3998 = vpow.pop %v3997
        %v3999 = vmul.f32 %v3792, 1.442695
        %v4000 = vpow.pop %v3999
        %v4001 = vmul.f32 %v3793, 1.442695
        %v4002 = vpow.pop %v4001
        %v4003 = vmul.f32 %v3794, 1.442695
        %v4004 = vpow.pop %v4003
        %v4005 = vmul.f32 %v3795, 1.442695
        %v4006 = vpow.pop %v4005
        %v4007 = vmul.f32 %v3796, 1.442695
        %v4008 = vpow.pop %v4007
        %v4009 = vmul.f32 %v3797, 1.442695
        %v4010 = vpow.pop %v4009
        %v4011 = vmul.f32 %v3798, 1.442695
        %v4012 = vpow.pop %v4011
        %v4013 = vmul.f32 %v3799, 1.442695
        %v4014 = vpow.pop %v4013
        %v4015 = vmul.f32 %v3800, 1.442695
        %v4016 = vpow.pop %v4015
        %v4017 = vmul.f32 %v3801, 1.442695
        %v4018 = vpow.pop %v4017
        %v4019 = vmul.f32 %v3802, 1.442695
        %v4020 = vpow.pop %v4019
        %v4021 = vmul.f32 %v3803, 1.442695
        %v4022 = vpow.pop %v4021
        %v4023 = vmul.f32 %v3804, 1.442695
        %v4024 = vpow.pop %v4023
        %v4025 = vmul.f32 %v3805, 1.442695
        %v4026 = vpow.pop %v4025
        %v4027 = vmul.f32 %v3806, 1.442695
        %v4028 = vpow.pop %v4027
        %v4029 = vmul.f32 %v3807, 1.442695
        %v4030 = vpow.pop %v4029
        %v4031 = vmul.f32 %v3808, 1.442695
        %v4032 = vpow.pop %v4031
        %v4033 = vmul.f32 %v3809, 1.442695
        %v4034 = vpow.pop %v4033
        %v4035 = vmul.f32 %v3810, 1.442695
        %v4036 = vpow.pop %v4035
        %v4037 = vmul.f32 %v3811, 1.442695
        %v4038 = vpow.pop %v4037
        %v4039 = vmul.f32 %v3812, 1.442695
        %v4040 = vpow.pop %v4039
        %v4041 = vmul.f32 %v3813, 1.442695
        %v4042 = vpow.pop %v4041
        %v4043 = vmul.f32 %v3814, 1.442695
        %v4044 = vpow.pop %v4043
        %v4045 = vmul.f32 %v3815, 1.442695
        %v4046 = vpow.pop %v4045
        %v4047 = vmul.f32 %v3816, 1.442695
        %v4048 = vpow.pop %v4047
        %v4049 = vmul.f32 %v3817, 1.442695
        %v4050 = vpow.pop %v4049
        %v4051 = vmul.f32 %v3818, 1.442695
        %v4052 = vpow.pop %v4051
        %v4053 = vmul.f32 %v3819, 1.442695
        %v4054 = vpow.pop %v4053
        %v4055 = vmul.f32 %v3820, 1.442695
        %v4056 = vpow.pop %v4055
        %v4057 = vmul.f32 %v3821, 1.442695
        %v4058 = vpow.pop %v4057
        %v4059 = vmul.f32 %v3822, 1.442695
        %v4060 = vpow.pop %v4059
        %v4061 = vmul.f32 %v3823, 1.442695
        %v4062 = vpow.pop %v4061
        %v4063 = vmul.f32 %v3824, 1.442695
        %v4064 = vpow.pop %v4063
        %v4065 = vmul.f32 %v3825, 1.442695
        %v4066 = vpow.pop %v4065
        %v4067 = vmul.f32 %v3826, 1.442695
        %v4068 = vpow.pop %v4067
        %v4069 = vmul.f32 %v3827, 1.442695
        %v4070 = vpow.pop %v4069
        %v4071 = vmul.f32 %v3828, 1.442695
        %v4072 = vpow.pop %v4071
        %v4073 = vmul.f32 %v3829, 1.442695
        %v4074 = vpow.pop %v4073
        %v4075 = vmul.f32 %v3830, 1.442695
        %v4076 = vpow.pop %v4075
        %v4077 = vmul.f32 %v3831, 1.442695
        %v4078 = vpow.pop %v4077
        %v4079 = vmul.f32 %v3832, 1.442695
        %v4080 = vpow.pop %v4079
        %v4081 = vmul.f32 %v3833, 1.442695
        %v4082 = vpow.pop %v4081
        %v4083 = vmul.f32 %v3834, 1.442695
        %v4084 = vpow.pop %v4083
        %v4085 = vmul.f32 %v3835, 1.442695
        %v4086 = vpow.pop %v4085
        %v4087 = vmul.f32 %v3836, 1.442695
        %v4088 = vpow.pop %v4087
        %v4089 = vmul.f32 %v3837, 1.442695
        %v4090 = vpow.pop %v4089
        %v4091 = vmul.f32 %v3838, 1.442695
        %v4092 = vpow.pop %v4091
        %v4093 = vmul.f32 %v3839, 1.442695
        %v4094 = vpow.pop %v4093
        %v4095 = vmul.f32 %v3840, 1.442695
        %v4096 = vpow.pop %v4095
        %4097 = vmatprep.subr.mxu0 %v973
        %4098 = vmatpush1.xpose.msra.mxu0 %v970
        %4099 = vmatprep.subr.mxu0 %v983
        %4100 = vmatpush1.xpose.msra.mxu0 %v981
        %4101 = vmatprep.subr.mxu0 1.0
        %4102 = vmatpush1.xpose.msra.mxu0 1.0
        %4103 = vmatprep.subr.mxu0 0.0
        %4104 = vmatpush1.xpose.msra.mxu0 0.0
        %4105 = vmatprep.subr.mxu0 0.0
        %4106 = vmatpush1.xpose.msra.mxu0 0.0
        %4107 = vmatprep.subr.mxu0 0.0
        %4108 = vmatpush1.xpose.msra.mxu0 0.0
        %4109 = vmatprep.subr.mxu0 0.0
        %4110 = vmatpush1.xpose.msra.mxu0 0.0
        %4111 = vmatprep.subr.mxu0 0.0
        %4112 = vmatpush1.xpose.msra.mxu0 0.0
        %4113 = vmatprep.subr.mxu0 0.0
        %4114 = vmatpush1.xpose.msra.mxu0 0.0
        %4115 = vmatprep.subr.mxu0 0.0
        %4116 = vmatpush1.xpose.msra.mxu0 0.0
        %4117 = vmatprep.subr.mxu0 0.0
        %4118 = vmatpush1.xpose.msra.mxu0 0.0
        %4119 = vmatprep.subr.mxu0 0.0
        %4120 = vmatpush1.xpose.msra.mxu0 0.0
        %4121 = vmatprep.subr.mxu0 0.0
        %4122 = vmatpush1.xpose.msra.mxu0 0.0
        %4123 = vmatprep.subr.mxu0 0.0
        %4124 = vmatpush1.xpose.msra.mxu0 0.0
        %4125 = vmatprep.subr.mxu0 0.0
        %4126 = vmatpush1.xpose.msra.mxu0 0.0
        %4127 = vmatprep.subr.mxu0 0.0
        %4128 = vmatpush1.xpose.msra.mxu0 0.0
        %4129 = vmatprep.subr.mxu0 0.0
        %4130 = vmatpush1.xpose.msra.mxu0 0.0
        %4131 = vmatprep.subr.mxu0 0.0
        %4132 = vmatpush1.xpose.msra.mxu0 0.0
        %4133 = vmatprep.subr.mxu0 0.0
        %4134 = vmatpush1.xpose.msra.mxu0 0.0
        %4135 = vmatprep.subr.mxu0 0.0
        %4136 = vmatpush1.xpose.msra.mxu0 0.0
        %4137 = vmatprep.subr.mxu0 0.0
        %4138 = vmatpush1.xpose.msra.mxu0 0.0
        %4139 = vmatprep.subr.mxu0 0.0
        %4140 = vmatpush1.xpose.msra.mxu0 0.0
        %4141 = vmatprep.subr.mxu0 0.0
        %4142 = vmatpush1.xpose.msra.mxu0 0.0
        %4143 = vmatprep.subr.mxu0 0.0
        %4144 = vmatpush1.xpose.msra.mxu0 0.0
        %4145 = vmatprep.subr.mxu0 0.0
        %4146 = vmatpush1.xpose.msra.mxu0 0.0
        %4147 = vmatprep.subr.mxu0 0.0
        %4148 = vmatpush1.xpose.msra.mxu0 0.0
        %4149 = vmatprep.subr.mxu0 0.0
        %4150 = vmatpush1.xpose.msra.mxu0 0.0
        %4151 = vmatprep.subr.mxu0 0.0
        %4152 = vmatpush1.xpose.msra.mxu0 0.0
        %4153 = vmatprep.subr.mxu0 0.0
        %4154 = vmatpush1.xpose.msra.mxu0 0.0
        %4155 = vmatprep.subr.mxu0 0.0
        %4156 = vmatpush1.xpose.msra.mxu0 0.0
        %4157 = vmatprep.subr.mxu0 0.0
        %4158 = vmatpush1.xpose.msra.mxu0 0.0
        %4159 = vmatprep.subr.mxu0 0.0
        %4160 = vmatpush1.xpose.msra.mxu0 0.0
        %4161 = vmatprep.mubr.f32.mxu0 %v3844
        %4162 = vmatmul.mubr.f32.gmra.mrb[0].mxu0 %v3842
        %v4163 = vpop.f32.mrb[0].mxu0
        %v4164 = vadd.f32 0.0, %v4163
        %v4165 = vpop.f32.mrb[0].mxu0
        %4166 = vmatprep.mubr.f32.mxu0 %v3852
        %4167 = vmatmul.mubr.f32.gmra.mrb[0].mxu0 %v3850
        %v4168 = vpop.f32.mrb[0].mxu0
        %v4169 = vadd.f32 0.0, %v4168
        %v4170 = vpop.f32.mrb[0].mxu0
        %4171 = vmatprep.mubr.f32.mxu0 %v3860
        %4172 = vmatmul.mubr.f32.gmra.mrb[0].mxu0 %v3858
        %v4173 = vpop.f32.mrb[0].mxu0
        %v4174 = vadd.f32 0.0, %v4173
        %v4175 = vpop.f32.mrb[0].mxu0
        %4176 = vmatprep.mubr.f32.mxu0 %v3868
        %4177 = vmatmul.mubr.f32.gmra.mrb[0].mxu0 %v3866
        %v4178 = vpop.f32.mrb[0].mxu0
        %v4179 = vadd.f32 0.0, %v4178
        %v4180 = vpop.f32.mrb[0].mxu0
        %4181 = vmatprep.mubr.f32.mxu0 %v3876
        %4182 = vmatmul.mubr.f32.gmra.mrb[0].mxu0 %v3874
        %v4183 = vpop.f32.mrb[0].mxu0
        %v4184 = vadd.f32 0.0, %v4183
        %v4185 = vpop.f32.mrb[0].mxu0
        %4186 = vmatprep.mubr.f32.mxu0 %v3884
        %4187 = vmatmul.mubr.f32.gmra.mrb[0].mxu0 %v3882
        %v4188 = vpop.f32.mrb[0].mxu0
        %v4189 = vadd.f32 0.0, %v4188
        %v4190 = vpop.f32.mrb[0].mxu0
        %4191 = vmatprep.mubr.f32.mxu0 %v3892
        %4192 = vmatmul.mubr.f32.gmra.mrb[0].mxu0 %v3890
        %v4193 = vpop.f32.mrb[0].mxu0
        %v4194 = vadd.f32 0.0, %v4193
        %v4195 = vpop.f32.mrb[0].mxu0
        %4196 = vmatprep.mubr.f32.mxu0 %v3900
        %4197 = vmatmul.mubr.f32.gmra.mrb[0].mxu0 %v3898
        %v4198 = vpop.f32.mrb[0].mxu0
        %v4199 = vadd.f32 0.0, %v4198
        %v4200 = vpop.f32.mrb[0].mxu0
        %4201 = vmatprep.mubr.f32.mxu0 %v3908
        %4202 = vmatmul.mubr.f32.gmra.mrb[0].mxu0 %v3906
        %v4203 = vpop.f32.mrb[0].mxu0
        %v4204 = vadd.f32 0.0, %v4203
        %v4205 = vpop.f32.mrb[0].mxu0
        %4206 = vmatprep.mubr.f32.mxu0 %v3916
        %4207 = vmatmul.mubr.f32.gmra.mrb[0].mxu0 %v3914
        %v4208 = vpop.f32.mrb[0].mxu0
        %v4209 = vadd.f32 0.0, %v4208
        %v4210 = vpop.f32.mrb[0].mxu0
        %4211 = vmatprep.mubr.f32.mxu0 %v3924
        %4212 = vmatmul.mubr.f32.gmra.mrb[0].mxu0 %v3922
        %v4213 = vpop.f32.mrb[0].mxu0
        %v4214 = vadd.f32 0.0, %v4213
        %v4215 = vpop.f32.mrb[0].mxu0
        %4216 = vmatprep.mubr.f32.mxu0 %v3932
        %4217 = vmatmul.mubr.f32.gmra.mrb[0].mxu0 %v3930
        %v4218 = vpop.f32.mrb[0].mxu0
        %v4219 = vadd.f32 0.0, %v4218
        %v4220 = vpop.f32.mrb[0].mxu0
        %4221 = vmatprep.mubr.f32.mxu0 %v3940
        %4222 = vmatmul.mubr.f32.gmra.mrb[0].mxu0 %v3938
        %v4223 = vpop.f32.mrb[0].mxu0
        %v4224 = vadd.f32 0.0, %v4223
        %v4225 = vpop.f32.mrb[0].mxu0
        %4226 = vmatprep.mubr.f32.mxu0 %v3948
        %4227 = vmatmul.mubr.f32.gmra.mrb[0].mxu0 %v3946
        %v4228 = vpop.f32.mrb[0].mxu0
        %v4229 = vadd.f32 0.0, %v4228
        %v4230 = vpop.f32.mrb[0].mxu0
        %4231 = vmatprep.mubr.f32.mxu0 %v3956
        %4232 = vmatmul.mubr.f32.gmra.mrb[0].mxu0 %v3954
        %v4233 = vpop.f32.mrb[0].mxu0
        %v4234 = vadd.f32 0.0, %v4233
        %v4235 = vpop.f32.mrb[0].mxu0
        %4236 = vmatprep.mubr.f32.mxu0 %v3964
        %4237 = vmatmul.mubr.f32.gmra.mrb[0].mxu0 %v3962
        %v4238 = vpop.f32.mrb[0].mxu0
        %v4239 = vadd.f32 0.0, %v4238
        %v4240 = vpop.f32.mrb[0].mxu0
        %4241 = vmatprep.mubr.f32.mxu0 %v3972
        %4242 = vmatmul.mubr.f32.gmra.mrb[0].mxu0 %v3970
        %v4243 = vpop.f32.mrb[0].mxu0
        %v4244 = vadd.f32 0.0, %v4243
        %v4245 = vpop.f32.mrb[0].mxu0
        %4246 = vmatprep.mubr.f32.mxu0 %v3980
        %4247 = vmatmul.mubr.f32.gmra.mrb[0].mxu0 %v3978
        %v4248 = vpop.f32.mrb[0].mxu0
        %v4249 = vadd.f32 0.0, %v4248
        %v4250 = vpop.f32.mrb[0].mxu0
        %4251 = vmatprep.mubr.f32.mxu0 %v3988
        %4252 = vmatmul.mubr.f32.gmra.mrb[0].mxu0 %v3986
        %v4253 = vpop.f32.mrb[0].mxu0
        %v4254 = vadd.f32 0.0, %v4253
        %v4255 = vpop.f32.mrb[0].mxu0
        %4256 = vmatprep.mubr.f32.mxu0 %v3996
        %4257 = vmatmul.mubr.f32.gmra.mrb[0].mxu0 %v3994
        %v4258 = vpop.f32.mrb[0].mxu0
        %v4259 = vadd.f32 0.0, %v4258
        %v4260 = vpop.f32.mrb[0].mxu0
        %4261 = vmatprep.mubr.f32.mxu0 %v4004
        %4262 = vmatmul.mubr.f32.gmra.mrb[0].mxu0 %v4002
        %v4263 = vpop.f32.mrb[0].mxu0
        %v4264 = vadd.f32 0.0, %v4263
        %v4265 = vpop.f32.mrb[0].mxu0
        %4266 = vmatprep.mubr.f32.mxu0 %v4012
        %4267 = vmatmul.mubr.f32.gmra.mrb[0].mxu0 %v4010
        %v4268 = vpop.f32.mrb[0].mxu0
        %v4269 = vadd.f32 0.0, %v4268
        %v4270 = vpop.f32.mrb[0].mxu0
        %4271 = vmatprep.mubr.f32.mxu0 %v4020
        %4272 = vmatmul.mubr.f32.gmra.mrb[0].mxu0 %v4018
        %v4273 = vpop.f32.mrb[0].mxu0
        %v4274 = vadd.f32 0.0, %v4273
        %v4275 = vpop.f32.mrb[0].mxu0
        %4276 = vmatprep.mubr.f32.mxu0 %v4028
        %4277 = vmatmul.mubr.f32.gmra.mrb[0].mxu0 %v4026
        %v4278 = vpop.f32.mrb[0].mxu0
        %v4279 = vadd.f32 0.0, %v4278
        %v4280 = vpop.f32.mrb[0].mxu0
        %4281 = vmatprep.mubr.f32.mxu0 %v4036
        %4282 = vmatmul.mubr.f32.gmra.mrb[0].mxu0 %v4034
        %v4283 = vpop.f32.mrb[0].mxu0
        %v4284 = vadd.f32 0.0, %v4283
        %v4285 = vpop.f32.mrb[0].mxu0
        %4286 = vmatprep.mubr.f32.mxu0 %v4044
        %4287 = vmatmul.mubr.f32.gmra.mrb[0].mxu0 %v4042
        %v4288 = vpop.f32.mrb[0].mxu0
        %v4289 = vadd.f32 0.0, %v4288
        %v4290 = vpop.f32.mrb[0].mxu0
        %4291 = vmatprep.mubr.f32.mxu0 %v4052
        %4292 = vmatmul.mubr.f32.gmra.mrb[0].mxu0 %v4050
        %v4293 = vpop.f32.mrb[0].mxu0
        %v4294 = vadd.f32 0.0, %v4293
        %v4295 = vpop.f32.mrb[0].mxu0
        %4296 = vmatprep.mubr.f32.mxu0 %v4060
        %4297 = vmatmul.mubr.f32.gmra.mrb[0].mxu0 %v4058
        %v4298 = vpop.f32.mrb[0].mxu0
        %v4299 = vadd.f32 0.0, %v4298
        %v4300 = vpop.f32.mrb[0].mxu0
        %4301 = vmatprep.mubr.f32.mxu0 %v4068
        %4302 = vmatmul.mubr.f32.gmra.mrb[0].mxu0 %v4066
        %v4303 = vpop.f32.mrb[0].mxu0
        %v4304 = vadd.f32 0.0, %v4303
        %v4305 = vpop.f32.mrb[0].mxu0
        %4306 = vmatprep.mubr.f32.mxu0 %v4076
        %4307 = vmatmul.mubr.f32.gmra.mrb[0].mxu0 %v4074
        %v4308 = vpop.f32.mrb[0].mxu0
        %v4309 = vadd.f32 0.0, %v4308
        %v4310 = vpop.f32.mrb[0].mxu0
        %4311 = vmatprep.mubr.f32.mxu0 %v4084
        %4312 = vmatmul.mubr.f32.gmra.mrb[0].mxu0 %v4082
        %v4313 = vpop.f32.mrb[0].mxu0
        %v4314 = vadd.f32 0.0, %v4313
        %v4315 = vpop.f32.mrb[0].mxu0
        %4316 = vmatprep.mubr.f32.mxu0 %v4092
        %4317 = vmatmul.mubr.f32.gmra.mrb[0].mxu0 %v4090
        %v4318 = vpop.f32.mrb[0].mxu0
        %v4319 = vadd.f32 0.0, %v4318
        %v4320 = vpop.f32.mrb[0].mxu0
        %4321 = vdwg.mxu0
        %4322 = vmatprep.subr.mxu0 %v979
        %4323 = vmatpush1.xpose.msra.mxu0 %v976
        %4324 = vmatprep.subr.mxu0 %v987
        %4325 = vmatpush1.xpose.msra.mxu0 %v985
        %4326 = vmatprep.subr.mxu0 1.0
        %4327 = vmatpush1.xpose.msra.mxu0 1.0
        %4328 = vmatprep.subr.mxu0 0.0
        %4329 = vmatpush1.xpose.msra.mxu0 0.0
        %4330 = vmatprep.subr.mxu0 0.0
        %4331 = vmatpush1.xpose.msra.mxu0 0.0
        %4332 = vmatprep.subr.mxu0 0.0
        %4333 = vmatpush1.xpose.msra.mxu0 0.0
        %4334 = vmatprep.subr.mxu0 0.0
        %4335 = vmatpush1.xpose.msra.mxu0 0.0
        %4336 = vmatprep.subr.mxu0 0.0
        %4337 = vmatpush1.xpose.msra.mxu0 0.0
        %4338 = vmatprep.subr.mxu0 0.0
        %4339 = vmatpush1.xpose.msra.mxu0 0.0
        %4340 = vmatprep.subr.mxu0 0.0
        %4341 = vmatpush1.xpose.msra.mxu0 0.0
        %4342 = vmatprep.subr.mxu0 0.0
        %4343 = vmatpush1.xpose.msra.mxu0 0.0
        %4344 = vmatprep.subr.mxu0 0.0
        %4345 = vmatpush1.xpose.msra.mxu0 0.0
        %4346 = vmatprep.subr.mxu0 0.0
        %4347 = vmatpush1.xpose.msra.mxu0 0.0
        %4348 = vmatprep.subr.mxu0 0.0
        %4349 = vmatpush1.xpose.msra.mxu0 0.0
        %4350 = vmatprep.subr.mxu0 0.0
        %4351 = vmatpush1.xpose.msra.mxu0 0.0
        %4352 = vmatprep.subr.mxu0 0.0
        %4353 = vmatpush1.xpose.msra.mxu0 0.0
        %4354 = vmatprep.subr.mxu0 0.0
        %4355 = vmatpush1.xpose.msra.mxu0 0.0
        %4356 = vmatprep.subr.mxu0 0.0
        %4357 = vmatpush1.xpose.msra.mxu0 0.0
        %4358 = vmatprep.subr.mxu0 0.0
        %4359 = vmatpush1.xpose.msra.mxu0 0.0
        %4360 = vmatprep.subr.mxu0 0.0
        %4361 = vmatpush1.xpose.msra.mxu0 0.0
        %4362 = vmatprep.subr.mxu0 0.0
        %4363 = vmatpush1.xpose.msra.mxu0 0.0
        %4364 = vmatprep.subr.mxu0 0.0
        %4365 = vmatpush1.xpose.msra.mxu0 0.0
        %4366 = vmatprep.subr.mxu0 0.0
        %4367 = vmatpush1.xpose.msra.mxu0 0.0
        %4368 = vmatprep.subr.mxu0 0.0
        %4369 = vmatpush1.xpose.msra.mxu0 0.0
        %4370 = vmatprep.subr.mxu0 0.0
        %4371 = vmatpush1.xpose.msra.mxu0 0.0
        %4372 = vmatprep.subr.mxu0 0.0
        %4373 = vmatpush1.xpose.msra.mxu0 0.0
        %4374 = vmatprep.subr.mxu0 0.0
        %4375 = vmatpush1.xpose.msra.mxu0 0.0
        %4376 = vmatprep.subr.mxu0 0.0
        %4377 = vmatpush1.xpose.msra.mxu0 0.0
        %4378 = vmatprep.subr.mxu0 0.0
        %4379 = vmatpush1.xpose.msra.mxu0 0.0
        %4380 = vmatprep.subr.mxu0 0.0
        %4381 = vmatpush1.xpose.msra.mxu0 0.0
        %4382 = vmatprep.subr.mxu0 0.0
        %4383 = vmatpush1.xpose.msra.mxu0 0.0
        %4384 = vmatprep.subr.mxu0 0.0
        %4385 = vmatpush1.xpose.msra.mxu0 0.0
        %4386 = vmatprep.mubr.f32.mxu0 %v3848
        %4387 = vmatmul.mubr.f32.gmra.mrb[0].mxu0 %v3846
        %v4388 = vpop.f32.mrb[0].mxu0
        %v4389 = vadd.f32 %v4164, %v4388
        %v4390 = vpop.f32.mrb[0].mxu0
        %4391 = vmatprep.mubr.f32.mxu0 %v3856
        %4392 = vmatmul.mubr.f32.gmra.mrb[0].mxu0 %v3854
        %v4393 = vpop.f32.mrb[0].mxu0
        %v4394 = vadd.f32 %v4169, %v4393
        %v4395 = vpop.f32.mrb[0].mxu0
        %4396 = vmatprep.mubr.f32.mxu0 %v3864
        %4397 = vmatmul.mubr.f32.gmra.mrb[0].mxu0 %v3862
        %v4398 = vpop.f32.mrb[0].mxu0
        %v4399 = vadd.f32 %v4174, %v4398
        %v4400 = vpop.f32.mrb[0].mxu0
        %4401 = vmatprep.mubr.f32.mxu0 %v3872
        %4402 = vmatmul.mubr.f32.gmra.mrb[0].mxu0 %v3870
        %v4403 = vpop.f32.mrb[0].mxu0
        %v4404 = vadd.f32 %v4179, %v4403
        %v4405 = vpop.f32.mrb[0].mxu0
        %4406 = vmatprep.mubr.f32.mxu0 %v3880
        %4407 = vmatmul.mubr.f32.gmra.mrb[0].mxu0 %v3878
        %v4408 = vpop.f32.mrb[0].mxu0
        %v4409 = vadd.f32 %v4184, %v4408
        %v4410 = vpop.f32.mrb[0].mxu0
        %4411 = vmatprep.mubr.f32.mxu0 %v3888
        %4412 = vmatmul.mubr.f32.gmra.mrb[0].mxu0 %v3886
        %v4413 = vpop.f32.mrb[0].mxu0
        %v4414 = vadd.f32 %v4189, %v4413
        %v4415 = vpop.f32.mrb[0].mxu0
        %4416 = vmatprep.mubr.f32.mxu0 %v3896
        %4417 = vmatmul.mubr.f32.gmra.mrb[0].mxu0 %v3894
        %v4418 = vpop.f32.mrb[0].mxu0
        %v4419 = vadd.f32 %v4194, %v4418
        %v4420 = vpop.f32.mrb[0].mxu0
        %4421 = vmatprep.mubr.f32.mxu0 %v3904
        %4422 = vmatmul.mubr.f32.gmra.mrb[0].mxu0 %v3902
        %v4423 = vpop.f32.mrb[0].mxu0
        %v4424 = vadd.f32 %v4199, %v4423
        %v4425 = vpop.f32.mrb[0].mxu0
        %4426 = vmatprep.mubr.f32.mxu0 %v3912
        %4427 = vmatmul.mubr.f32.gmra.mrb[0].mxu0 %v3910
        %v4428 = vpop.f32.mrb[0].mxu0
        %v4429 = vadd.f32 %v4204, %v4428
        %v4430 = vpop.f32.mrb[0].mxu0
        %4431 = vmatprep.mubr.f32.mxu0 %v3920
        %4432 = vmatmul.mubr.f32.gmra.mrb[0].mxu0 %v3918
        %v4433 = vpop.f32.mrb[0].mxu0
        %v4434 = vadd.f32 %v4209, %v4433
        %v4435 = vpop.f32.mrb[0].mxu0
        %4436 = vmatprep.mubr.f32.mxu0 %v3928
        %4437 = vmatmul.mubr.f32.gmra.mrb[0].mxu0 %v3926
        %v4438 = vpop.f32.mrb[0].mxu0
        %v4439 = vadd.f32 %v4214, %v4438
        %v4440 = vpop.f32.mrb[0].mxu0
        %4441 = vmatprep.mubr.f32.mxu0 %v3936
        %4442 = vmatmul.mubr.f32.gmra.mrb[0].mxu0 %v3934
        %v4443 = vpop.f32.mrb[0].mxu0
        %v4444 = vadd.f32 %v4219, %v4443
        %v4445 = vpop.f32.mrb[0].mxu0
        %4446 = vmatprep.mubr.f32.mxu0 %v3944
        %4447 = vmatmul.mubr.f32.gmra.mrb[0].mxu0 %v3942
        %v4448 = vpop.f32.mrb[0].mxu0
        %v4449 = vadd.f32 %v4224, %v4448
        %v4450 = vpop.f32.mrb[0].mxu0
        %4451 = vmatprep.mubr.f32.mxu0 %v3952
        %4452 = vmatmul.mubr.f32.gmra.mrb[0].mxu0 %v3950
        %v4453 = vpop.f32.mrb[0].mxu0
        %v4454 = vadd.f32 %v4229, %v4453
        %v4455 = vpop.f32.mrb[0].mxu0
        %4456 = vmatprep.mubr.f32.mxu0 %v3960
        %4457 = vmatmul.mubr.f32.gmra.mrb[0].mxu0 %v3958
        %v4458 = vpop.f32.mrb[0].mxu0
        %v4459 = vadd.f32 %v4234, %v4458
        %v4460 = vpop.f32.mrb[0].mxu0
        %4461 = vmatprep.mubr.f32.mxu0 %v3968
        %4462 = vmatmul.mubr.f32.gmra.mrb[0].mxu0 %v3966
        %v4463 = vpop.f32.mrb[0].mxu0
        %v4464 = vadd.f32 %v4239, %v4463
        %v4465 = vpop.f32.mrb[0].mxu0
        %4466 = vmatprep.mubr.f32.mxu0 %v3976
        %4467 = vmatmul.mubr.f32.gmra.mrb[0].mxu0 %v3974
        %v4468 = vpop.f32.mrb[0].mxu0
        %v4469 = vadd.f32 %v4244, %v4468
        %v4470 = vpop.f32.mrb[0].mxu0
        %4471 = vmatprep.mubr.f32.mxu0 %v3984
        %4472 = vmatmul.mubr.f32.gmra.mrb[0].mxu0 %v3982
        %v4473 = vpop.f32.mrb[0].mxu0
        %v4474 = vadd.f32 %v4249, %v4473
        %v4475 = vpop.f32.mrb[0].mxu0
        %4476 = vmatprep.mubr.f32.mxu0 %v3992
        %4477 = vmatmul.mubr.f32.gmra.mrb[0].mxu0 %v3990
        %v4478 = vpop.f32.mrb[0].mxu0
        %v4479 = vadd.f32 %v4254, %v4478
        %v4480 = vpop.f32.mrb[0].mxu0
        %4481 = vmatprep.mubr.f32.mxu0 %v4000
        %4482 = vmatmul.mubr.f32.gmra.mrb[0].mxu0 %v3998
        %v4483 = vpop.f32.mrb[0].mxu0
        %v4484 = vadd.f32 %v4259, %v4483
        %v4485 = vpop.f32.mrb[0].mxu0
        %4486 = vmatprep.mubr.f32.mxu0 %v4008
        %4487 = vmatmul.mubr.f32.gmra.mrb[0].mxu0 %v4006
        %v4488 = vpop.f32.mrb[0].mxu0
        %v4489 = vadd.f32 %v4264, %v4488
        %v4490 = vpop.f32.mrb[0].mxu0
        %4491 = vmatprep.mubr.f32.mxu0 %v4016
        %4492 = vmatmul.mubr.f32.gmra.mrb[0].mxu0 %v4014
        %v4493 = vpop.f32.mrb[0].mxu0
        %v4494 = vadd.f32 %v4269, %v4493
        %v4495 = vpop.f32.mrb[0].mxu0
        %4496 = vmatprep.mubr.f32.mxu0 %v4024
        %4497 = vmatmul.mubr.f32.gmra.mrb[0].mxu0 %v4022
        %v4498 = vpop.f32.mrb[0].mxu0
        %v4499 = vadd.f32 %v4274, %v4498
        %v4500 = vpop.f32.mrb[0].mxu0
        %4501 = vmatprep.mubr.f32.mxu0 %v4032
        %4502 = vmatmul.mubr.f32.gmra.mrb[0].mxu0 %v4030
        %v4503 = vpop.f32.mrb[0].mxu0
        %v4504 = vadd.f32 %v4279, %v4503
        %v4505 = vpop.f32.mrb[0].mxu0
        %4506 = vmatprep.mubr.f32.mxu0 %v4040
        %4507 = vmatmul.mubr.f32.gmra.mrb[0].mxu0 %v4038
        %v4508 = vpop.f32.mrb[0].mxu0
        %v4509 = vadd.f32 %v4284, %v4508
        %v4510 = vpop.f32.mrb[0].mxu0
        %4511 = vmatprep.mubr.f32.mxu0 %v4048
        %4512 = vmatmul.mubr.f32.gmra.mrb[0].mxu0 %v4046
        %v4513 = vpop.f32.mrb[0].mxu0
        %v4514 = vadd.f32 %v4289, %v4513
        %v4515 = vpop.f32.mrb[0].mxu0
        %4516 = vmatprep.mubr.f32.mxu0 %v4056
        %4517 = vmatmul.mubr.f32.gmra.mrb[0].mxu0 %v4054
        %v4518 = vpop.f32.mrb[0].mxu0
        %v4519 = vadd.f32 %v4294, %v4518
        %v4520 = vpop.f32.mrb[0].mxu0
        %4521 = vmatprep.mubr.f32.mxu0 %v4064
        %4522 = vmatmul.mubr.f32.gmra.mrb[0].mxu0 %v4062
        %v4523 = vpop.f32.mrb[0].mxu0
        %v4524 = vadd.f32 %v4299, %v4523
        %v4525 = vpop.f32.mrb[0].mxu0
        %4526 = vmatprep.mubr.f32.mxu0 %v4072
        %4527 = vmatmul.mubr.f32.gmra.mrb[0].mxu0 %v4070
        %v4528 = vpop.f32.mrb[0].mxu0
        %v4529 = vadd.f32 %v4304, %v4528
        %v4530 = vpop.f32.mrb[0].mxu0
        %4531 = vmatprep.mubr.f32.mxu0 %v4080
        %4532 = vmatmul.mubr.f32.gmra.mrb[0].mxu0 %v4078
        %v4533 = vpop.f32.mrb[0].mxu0
        %v4534 = vadd.f32 %v4309, %v4533
        %v4535 = vpop.f32.mrb[0].mxu0
        %4536 = vmatprep.mubr.f32.mxu0 %v4088
        %4537 = vmatmul.mubr.f32.gmra.mrb[0].mxu0 %v4086
        %v4538 = vpop.f32.mrb[0].mxu0
        %v4539 = vadd.f32 %v4314, %v4538
        %v4540 = vpop.f32.mrb[0].mxu0
        %4541 = vmatprep.mubr.f32.mxu0 %v4096
        %4542 = vmatmul.mubr.f32.gmra.mrb[0].mxu0 %v4094
        %v4543 = vpop.f32.mrb[0].mxu0
        %v4544 = vadd.f32 %v4319, %v4543
        %v4545 = vpop.f32.mrb[0].mxu0
        %4546 = vdwg.mxu0
        %v4547 = vrcp.pop %v4389
        %v4548 = vrcp.pop %v4394
        %v4549 = vrcp.pop %v4399
        %v4550 = vrcp.pop %v4404
        %v4551 = vrcp.pop %v4409
        %v4552 = vrcp.pop %v4414
        %v4553 = vrcp.pop %v4419
        %v4554 = vrcp.pop %v4424
        %v4555 = vrcp.pop %v4429
        %v4556 = vrcp.pop %v4434
        %v4557 = vrcp.pop %v4439
        %v4558 = vrcp.pop %v4444
        %v4559 = vrcp.pop %v4449
        %v4560 = vrcp.pop %v4454
        %v4561 = vrcp.pop %v4459
        %v4562 = vrcp.pop %v4464
        %v4563 = vrcp.pop %v4469
        %v4564 = vrcp.pop %v4474
        %v4565 = vrcp.pop %v4479
        %v4566 = vrcp.pop %v4484
        %v4567 = vrcp.pop %v4489
        %v4568 = vrcp.pop %v4494
        %v4569 = vrcp.pop %v4499
        %v4570 = vrcp.pop %v4504
        %v4571 = vrcp.pop %v4509
        %v4572 = vrcp.pop %v4514
        %v4573 = vrcp.pop %v4519
        %v4574 = vrcp.pop %v4524
        %v4575 = vrcp.pop %v4529
        %v4576 = vrcp.pop %v4534
        %v4577 = vrcp.pop %v4539
        %v4578 = vrcp.pop %v4544
        %4580 = vset.pattern.permute.xlu0 16
        %4581 = vperm.xlu0 %4580, %v4547
        %v4582 = vpop.permute.xlu0 %4581
        %4585 = vset.pattern.permute.xlu0 16
        %4586 = vperm.xlu0 %4585, %v4548
        %v4587 = vpop.permute.xlu0 %4586
        %4590 = vset.pattern.permute.xlu0 16
        %4591 = vperm.xlu0 %4590, %v4549
        %v4592 = vpop.permute.xlu0 %4591
        %4595 = vset.pattern.permute.xlu0 16
        %4596 = vperm.xlu0 %4595, %v4550
        %v4597 = vpop.permute.xlu0 %4596
        %4600 = vset.pattern.permute.xlu0 16
        %4601 = vperm.xlu0 %4600, %v4551
        %v4602 = vpop.permute.xlu0 %4601
        %4605 = vset.pattern.permute.xlu0 16
        %4606 = vperm.xlu0 %4605, %v4552
        %v4607 = vpop.permute.xlu0 %4606
        %4610 = vset.pattern.permute.xlu0 16
        %4611 = vperm.xlu0 %4610, %v4553
        %v4612 = vpop.permute.xlu0 %4611
        %4615 = vset.pattern.permute.xlu0 16
        %4616 = vperm.xlu0 %4615, %v4554
        %v4617 = vpop.permute.xlu0 %4616
        %4620 = vset.pattern.permute.xlu0 16
        %4621 = vperm.xlu0 %4620, %v4555
        %v4622 = vpop.permute.xlu0 %4621
        %4625 = vset.pattern.permute.xlu0 16
        %4626 = vperm.xlu0 %4625, %v4556
        %v4627 = vpop.permute.xlu0 %4626
        %4630 = vset.pattern.permute.xlu0 16
        %4631 = vperm.xlu0 %4630, %v4557
        %v4632 = vpop.permute.xlu0 %4631
        %4635 = vset.pattern.permute.xlu0 16
        %4636 = vperm.xlu0 %4635, %v4558
        %v4637 = vpop.permute.xlu0 %4636
        %4640 = vset.pattern.permute.xlu0 16
        %4641 = vperm.xlu0 %4640, %v4559
        %v4642 = vpop.permute.xlu0 %4641
        %4645 = vset.pattern.permute.xlu0 16
        %4646 = vperm.xlu0 %4645, %v4560
        %v4647 = vpop.permute.xlu0 %4646
        %4650 = vset.pattern.permute.xlu0 16
        %4651 = vperm.xlu0 %4650, %v4561
        %v4652 = vpop.permute.xlu0 %4651
        %4655 = vset.pattern.permute.xlu0 16
        %4656 = vperm.xlu0 %4655, %v4562
        %v4657 = vpop.permute.xlu0 %4656
        %4660 = vset.pattern.permute.xlu0 16
        %4661 = vperm.xlu0 %4660, %v4563
        %v4662 = vpop.permute.xlu0 %4661
        %4665 = vset.pattern.permute.xlu0 16
        %4666 = vperm.xlu0 %4665, %v4564
        %v4667 = vpop.permute.xlu0 %4666
        %4670 = vset.pattern.permute.xlu0 16
        %4671 = vperm.xlu0 %4670, %v4565
        %v4672 = vpop.permute.xlu0 %4671
        %4675 = vset.pattern.permute.xlu0 16
        %4676 = vperm.xlu0 %4675, %v4566
        %v4677 = vpop.permute.xlu0 %4676
        %4680 = vset.pattern.permute.xlu0 16
        %4681 = vperm.xlu0 %4680, %v4567
        %v4682 = vpop.permute.xlu0 %4681
        %4685 = vset.pattern.permute.xlu0 16
        %4686 = vperm.xlu0 %4685, %v4568
        %v4687 = vpop.permute.xlu0 %4686
        %4690 = vset.pattern.permute.xlu0 16
        %4691 = vperm.xlu0 %4690, %v4569
        %v4692 = vpop.permute.xlu0 %4691
        %4695 = vset.pattern.permute.xlu0 16
        %4696 = vperm.xlu0 %4695, %v4570
        %v4697 = vpop.permute.xlu0 %4696
        %4700 = vset.pattern.permute.xlu0 16
        %4701 = vperm.xlu0 %4700, %v4571
        %v4702 = vpop.permute.xlu0 %4701
        %4705 = vset.pattern.permute.xlu0 16
        %4706 = vperm.xlu0 %4705, %v4572
        %v4707 = vpop.permute.xlu0 %4706
        %4710 = vset.pattern.permute.xlu0 16
        %4711 = vperm.xlu0 %4710, %v4573
        %v4712 = vpop.permute.xlu0 %4711
        %4715 = vset.pattern.permute.xlu0 16
        %4716 = vperm.xlu0 %4715, %v4574
        %v4717 = vpop.permute.xlu0 %4716
        %4720 = vset.pattern.permute.xlu0 16
        %4721 = vperm.xlu0 %4720, %v4575
        %v4722 = vpop.permute.xlu0 %4721
        %4725 = vset.pattern.permute.xlu0 16
        %4726 = vperm.xlu0 %4725, %v4576
        %v4727 = vpop.permute.xlu0 %4726
        %4730 = vset.pattern.permute.xlu0 16
        %4731 = vperm.xlu0 %4730, %v4577
        %v4732 = vpop.permute.xlu0 %4731
        %4735 = vset.pattern.permute.xlu0 16
        %4736 = vperm.xlu0 %4735, %v4578
        %v4737 = vpop.permute.xlu0 %4736
        %v4739 = vmul.f32 %v4389, %v4582
        %v4740 = vmul.f32 %v4394, %v4587
        %v4741 = vmul.f32 %v4399, %v4592
        %v4742 = vmul.f32 %v4404, %v4597
        %v4743 = vmul.f32 %v4409, %v4602
        %v4744 = vmul.f32 %v4414, %v4607
        %v4745 = vmul.f32 %v4419, %v4612
        %v4746 = vmul.f32 %v4424, %v4617
        %v4747 = vmul.f32 %v4429, %v4622
        %v4748 = vmul.f32 %v4434, %v4627
        %v4749 = vmul.f32 %v4439, %v4632
        %v4750 = vmul.f32 %v4444, %v4637
        %v4751 = vmul.f32 %v4449, %v4642
        %v4752 = vmul.f32 %v4454, %v4647
        %v4753 = vmul.f32 %v4459, %v4652
        %v4754 = vmul.f32 %v4464, %v4657
        %v4755 = vmul.f32 %v4469, %v4662
        %v4756 = vmul.f32 %v4474, %v4667
        %v4757 = vmul.f32 %v4479, %v4672
        %v4758 = vmul.f32 %v4484, %v4677
        %v4759 = vmul.f32 %v4489, %v4682
        %v4760 = vmul.f32 %v4494, %v4687
        %v4761 = vmul.f32 %v4499, %v4692
        %v4762 = vmul.f32 %v4504, %v4697
        %v4763 = vmul.f32 %v4509, %v4702
        %v4764 = vmul.f32 %v4514, %v4707
        %v4765 = vmul.f32 %v4519, %v4712
        %v4766 = vmul.f32 %v4524, %v4717
        %v4767 = vmul.f32 %v4529, %v4722
        %v4768 = vmul.f32 %v4534, %v4727
        %v4769 = vmul.f32 %v4539, %v4732
        %v4770 = vmul.f32 %v4544, %v4737
        %v4771 = vmul.f32 %v2838, %v4739
        %v4772 = vmul.f32 %v2838, %v4740
        %v4773 = vmul.f32 %v2838, %v4741
        %v4774 = vmul.f32 %v2838, %v4742
        %v4775 = vmul.f32 %v2838, %v4743
        %v4776 = vmul.f32 %v2838, %v4744
        %v4777 = vmul.f32 %v2838, %v4745
        %v4778 = vmul.f32 %v2838, %v4746
        %v4779 = vmul.f32 %v2838, %v4747
        %v4780 = vmul.f32 %v2838, %v4748
        %v4781 = vmul.f32 %v2838, %v4749
        %v4782 = vmul.f32 %v2838, %v4750
        %v4783 = vmul.f32 %v2838, %v4751
        %v4784 = vmul.f32 %v2838, %v4752
        %v4785 = vmul.f32 %v2838, %v4753
        %v4786 = vmul.f32 %v2838, %v4754
        %v4787 = vmul.f32 %v2838, %v4755
        %v4788 = vmul.f32 %v2838, %v4756
        %v4789 = vmul.f32 %v2838, %v4757
        %v4790 = vmul.f32 %v2838, %v4758
        %v4791 = vmul.f32 %v2838, %v4759
        %v4792 = vmul.f32 %v2838, %v4760
        %v4793 = vmul.f32 %v2838, %v4761
        %v4794 = vmul.f32 %v2838, %v4762
        %v4795 = vmul.f32 %v2838, %v4763
        %v4796 = vmul.f32 %v2838, %v4764
        %v4797 = vmul.f32 %v2838, %v4765
        %v4798 = vmul.f32 %v2838, %v4766
        %v4799 = vmul.f32 %v2838, %v4767
        %v4800 = vmul.f32 %v2838, %v4768
        %v4801 = vmul.f32 %v2838, %v4769
        %v4802 = vmul.f32 %v2838, %v4770
        %4803 = vxpose.xlu0.b32.start [1/16] %v4771, 128
        %4804 = vxpose.xlu0.b32.cont [2/16] %v4772, 128
        %4805 = vxpose.xlu0.b32.cont [3/16] %v4773, 128
        %4806 = vxpose.xlu0.b32.cont [4/16] %v4774, 128
        %4807 = vxpose.xlu0.b32.cont [5/16] %v4775, 128
        %4808 = vxpose.xlu0.b32.cont [6/16] %v4776, 128
        %4809 = vxpose.xlu0.b32.cont [7/16] %v4777, 128
        %4810 = vxpose.xlu0.b32.cont [8/16] %v4778, 128
        %4811 = vxpose.xlu0.b32.cont [9/16] %v4779, 128
        %4812 = vxpose.xlu0.b32.cont [10/16] %v4780, 128
        %4813 = vxpose.xlu0.b32.cont [11/16] %v4781, 128
        %4814 = vxpose.xlu0.b32.cont [12/16] %v4782, 128
        %4815 = vxpose.xlu0.b32.cont [13/16] %v4783, 128
        %4816 = vxpose.xlu0.b32.cont [14/16] %v4784, 128
        %4817 = vxpose.xlu0.b32.cont [15/16] %v4785, 128
        %4818 = vxpose.xlu0.b32.end [16/16] %v4786, 128
        %v4819 = vpop.trf.xlu0
        %v4820 = vpop.trf.xlu0
        %v4821 = vpop.trf.xlu0
        %v4822 = vpop.trf.xlu0
        %v4823 = vpop.trf.xlu0
        %v4824 = vpop.trf.xlu0
        %v4825 = vpop.trf.xlu0
        %v4826 = vpop.trf.xlu0
        %v4827 = vpop.trf.xlu0
        %v4828 = vpop.trf.xlu0
        %v4829 = vpop.trf.xlu0
        %v4830 = vpop.trf.xlu0
        %v4831 = vpop.trf.xlu0
        %v4832 = vpop.trf.xlu0
        %v4833 = vpop.trf.xlu0
        %v4834 = vpop.trf.xlu0
        %4835 = vxpose.xlu0.b32.start [1/16] %v4787, 128
        %4836 = vxpose.xlu0.b32.cont [2/16] %v4788, 128
        %4837 = vxpose.xlu0.b32.cont [3/16] %v4789, 128
        %4838 = vxpose.xlu0.b32.cont [4/16] %v4790, 128
        %4839 = vxpose.xlu0.b32.cont [5/16] %v4791, 128
        %4840 = vxpose.xlu0.b32.cont [6/16] %v4792, 128
        %4841 = vxpose.xlu0.b32.cont [7/16] %v4793, 128
        %4842 = vxpose.xlu0.b32.cont [8/16] %v4794, 128
        %4843 = vxpose.xlu0.b32.cont [9/16] %v4795, 128
        %4844 = vxpose.xlu0.b32.cont [10/16] %v4796, 128
        %4845 = vxpose.xlu0.b32.cont [11/16] %v4797, 128
        %4846 = vxpose.xlu0.b32.cont [12/16] %v4798, 128
        %4847 = vxpose.xlu0.b32.cont [13/16] %v4799, 128
        %4848 = vxpose.xlu0.b32.cont [14/16] %v4800, 128
        %4849 = vxpose.xlu0.b32.cont [15/16] %v4801, 128
        %4850 = vxpose.xlu0.b32.end [16/16] %v4802, 128
        %v4851 = vpop.trf.xlu0
        %v4852 = vpop.trf.xlu0
        %v4853 = vpop.trf.xlu0
        %v4854 = vpop.trf.xlu0
        %v4855 = vpop.trf.xlu0
        %v4856 = vpop.trf.xlu0
        %v4857 = vpop.trf.xlu0
        %v4858 = vpop.trf.xlu0
        %v4859 = vpop.trf.xlu0
        %v4860 = vpop.trf.xlu0
        %v4861 = vpop.trf.xlu0
        %v4862 = vpop.trf.xlu0
        %v4863 = vpop.trf.xlu0
        %v4864 = vpop.trf.xlu0
        %v4865 = vpop.trf.xlu0
        %v4866 = vpop.trf.xlu0
        %v4867 = vadd.f32 %v4819, %v638
        %v4868 = vadd.f32 %v4851, %v639
        %v4869 = vadd.f32 %v4820, %v642
        %v4870 = vadd.f32 %v4852, %v643
        %4871 = vst [vmem:[%s272 + $0x10] sm:$0xff] %v4867
        %4872 = vst [vmem:[%s272 + $0x18] sm:$0xff] %v4868
        %4873 = vst [vmem:[%s272 + $0x30] sm:$0xff] %v4869
        %4874 = vst [vmem:[%s272 + $0x38] sm:$0xff] %v4870
        %v4875 = vld [vmem:[%s272] sm:$0xff]
        %v4876 = vld [vmem:[%s272 + $0x8] sm:$0xff]
        %v4877 = vld [vmem:[%s272 + $0x10] sm:$0xff]
        %v4878 = vld [vmem:[%s272 + $0x18] sm:$0xff]
        %v4879 = vld [vmem:[%s272 + $0x20] sm:$0xff]
        %v4880 = vld [vmem:[%s272 + $0x28] sm:$0xff]
        %v4881 = vld [vmem:[%s272 + $0x30] sm:$0xff]
        %v4882 = vld [vmem:[%s272 + $0x38] sm:$0xff]
        %v4883 = vld [vmem:[%s4] sm:$0x7f]
        %v4884 = vld [vmem:[%s4 + $0x8] sm:$0x7f]
        %v4885 = vld [vmem:[%s4 + $0x10] sm:$0x7f]
        %v4886 = vld [vmem:[%s4 + $0x18] sm:$0x7f]
        %v4887 = vld [vmem:[%s4] sm:$0x80]
        %v4888 = vld [vmem:[%s4 + $0x8] sm:$0x80]
        %v4889 = vld [vmem:[%s4 + $0x10] sm:$0x80]
        %v4890 = vld [vmem:[%s4 + $0x18] sm:$0x80]
        %v4891 = vld [vmem:[%s4 + $0x20] sm:$0x3f]
        %v4892 = vld [vmem:[%s4 + $0x28] sm:$0x3f]
        %v4893 = vld [vmem:[%s4 + $0x30] sm:$0x3f]
        %v4894 = vld [vmem:[%s4 + $0x38] sm:$0x3f]
        %v4895 = vld [vmem:[%s4 + $0x20] sm:$0xc0]
        %v4896 = vld [vmem:[%s4 + $0x28] sm:$0xc0]
        %v4897 = vld [vmem:[%s4 + $0x30] sm:$0xc0]
        %v4898 = vld [vmem:[%s4 + $0x38] sm:$0xc0]
        %v4899 = vld [vmem:[%s4 + $0x40] sm:$0x1f]
        %v4900 = vld [vmem:[%s4 + $0x48] sm:$0x1f]
        %v4901 = vld [vmem:[%s4 + $0x50] sm:$0x1f]
        %v4902 = vld [vmem:[%s4 + $0x58] sm:$0x1f]
        %4903 = vrot.lane.b32.xlu0 %v4875, 3
        %v4904 = vpop.permute.xlu0 %4903
        %4905 = vrot.lane.b32.xlu0 %v4879, 3
        %v4906 = vpop.permute.xlu0 %4905
        %4907 = vrot.lane.b32.xlu0 %v4876, 3
        %v4908 = vpop.permute.xlu0 %4907
        %4909 = vrot.lane.b32.xlu0 %v4880, 3
        %v4910 = vpop.permute.xlu0 %4909
        %4911 = vrot.lane.b32.xlu0 %v4877, 3
        %v4912 = vpop.permute.xlu0 %4911
        %4913 = vrot.lane.b32.xlu0 %v4881, 3
        %v4914 = vpop.permute.xlu0 %4913
        %4915 = vrot.lane.b32.xlu0 %v4878, 3
        %v4916 = vpop.permute.xlu0 %4915
        %4917 = vrot.lane.b32.xlu0 %v4882, 3
        %v4918 = vpop.permute.xlu0 %4917
        %v4919 = vlaneseq
        %v4920 = vand.u32 %v4919, 127
        %vm4921 = vcmp.lt.s32.totalorder %v4920, 3
        %v4922 = vsel %vm4921, %v4912, %v4916
        %v4923 = vsel %vm4921, %v4914, %v4918
        %v4924 = vsel %vm4921, %v4908, %v4912
        %v4925 = vsel %vm4921, %v4910, %v4914
        %v4926 = vsel %vm4921, %v4904, %v4908
        %v4927 = vsel %vm4921, %v4906, %v4910
        %v4928 = vsel %vm4921, %v4916, %v4904
        %v4929 = vsel %vm4921, %v4918, %v4906
        %v4930 = vlaneseq
        %v4931 = vshrl.u32 %v4930, 7
        %v4932 = vsub.s32 0, %v4931
        %v4933 = vrot.slane %v4883, %v4932
        %v4934 = vlaneseq
        %v4935 = vshrl.u32 %v4934, 7
        %v4936 = vsub.s32 0, %v4935
        %v4937 = vrot.slane %v4884, %v4936
        %v4938 = vlaneseq
        %v4939 = vshrl.u32 %v4938, 7
        %v4940 = vsub.s32 0, %v4939
        %v4941 = vrot.slane %v4885, %v4940
        %v4942 = vlaneseq
        %v4943 = vshrl.u32 %v4942, 7
        %v4944 = vsub.s32 0, %v4943
        %v4945 = vrot.slane %v4886, %v4944
        %v4946 = vmul.f32 %v4928, %v4933
        %v4947 = vmul.f32 %v4926, %v4937
        %v4948 = vmul.f32 %v4924, %v4941
        %v4949 = vmul.f32 %v4922, %v4945
        %v4950 = vmul.f32 %v4929, %v4933
        %v4951 = vmul.f32 %v4927, %v4937
        %v4952 = vmul.f32 %v4925, %v4941
        %v4953 = vmul.f32 %v4923, %v4945
        %4954 = vrot.lane.b32.xlu0 %v4875, 2
        %v4955 = vpop.permute.xlu0 %4954
        %4956 = vrot.lane.b32.xlu0 %v4879, 2
        %v4957 = vpop.permute.xlu0 %4956
        %4958 = vrot.lane.b32.xlu0 %v4876, 2
        %v4959 = vpop.permute.xlu0 %4958
        %4960 = vrot.lane.b32.xlu0 %v4880, 2
        %v4961 = vpop.permute.xlu0 %4960
        %4962 = vrot.lane.b32.xlu0 %v4877, 2
        %v4963 = vpop.permute.xlu0 %4962
        %4964 = vrot.lane.b32.xlu0 %v4881, 2
        %v4965 = vpop.permute.xlu0 %4964
        %4966 = vrot.lane.b32.xlu0 %v4878, 2
        %v4967 = vpop.permute.xlu0 %4966
        %4968 = vrot.lane.b32.xlu0 %v4882, 2
        %v4969 = vpop.permute.xlu0 %4968
        %vm4970 = vcmp.lt.s32.totalorder %v4920, 2
        %v4971 = vsel %vm4970, %v4963, %v4967
        %v4972 = vsel %vm4970, %v4965, %v4969
        %v4973 = vsel %vm4970, %v4959, %v4963
        %v4974 = vsel %vm4970, %v4961, %v4965
        %v4975 = vsel %vm4970, %v4955, %v4959
        %v4976 = vsel %vm4970, %v4957, %v4961
        %v4977 = vsel %vm4970, %v4967, %v4955
        %v4978 = vsel %vm4970, %v4969, %v4957
        %v4979 = vlaneseq
        %v4980 = vshrl.u32 %v4979, 7
        %v4981 = vsub.s32 1, %v4980
        %v4982 = vrot.slane %v4883, %v4981
        %v4983 = vlaneseq
        %v4984 = vshrl.u32 %v4983, 7
        %v4985 = vsub.s32 1, %v4984
        %v4986 = vrot.slane %v4884, %v4985
        %v4987 = vlaneseq
        %v4988 = vshrl.u32 %v4987, 7
        %v4989 = vsub.s32 1, %v4988
        %v4990 = vrot.slane %v4885, %v4989
        %v4991 = vlaneseq
        %v4992 = vshrl.u32 %v4991, 7
        %v4993 = vsub.s32 1, %v4992
        %v4994 = vrot.slane %v4886, %v4993
        %v4995 = vmul.f32 %v4977, %v4982
        %v4996 = vmul.f32 %v4975, %v4986
        %v4997 = vmul.f32 %v4973, %v4990
        %v4998 = vmul.f32 %v4971, %v4994
        %v4999 = vmul.f32 %v4978, %v4982
        %v5000 = vmul.f32 %v4976, %v4986
        %v5001 = vmul.f32 %v4974, %v4990
        %v5002 = vmul.f32 %v4972, %v4994
        %5003 = vrot.lane.b32.xlu0 %v4875, 1
        %v5004 = vpop.permute.xlu0 %5003
        %5005 = vrot.lane.b32.xlu0 %v4879, 1
        %v5006 = vpop.permute.xlu0 %5005
        %5007 = vrot.lane.b32.xlu0 %v4876, 1
        %v5008 = vpop.permute.xlu0 %5007
        %5009 = vrot.lane.b32.xlu0 %v4880, 1
        %v5010 = vpop.permute.xlu0 %5009
        %5011 = vrot.lane.b32.xlu0 %v4877, 1
        %v5012 = vpop.permute.xlu0 %5011
        %5013 = vrot.lane.b32.xlu0 %v4881, 1
        %v5014 = vpop.permute.xlu0 %5013
        %5015 = vrot.lane.b32.xlu0 %v4878, 1
        %v5016 = vpop.permute.xlu0 %5015
        %5017 = vrot.lane.b32.xlu0 %v4882, 1
        %v5018 = vpop.permute.xlu0 %5017
        %vm5019 = vcmp.lt.s32.totalorder %v4920, 1
        %v5020 = vsel %vm5019, %v5012, %v5016
        %v5021 = vsel %vm5019, %v5014, %v5018
        %v5022 = vsel %vm5019, %v5008, %v5012
        %v5023 = vsel %vm5019, %v5010, %v5014
        %v5024 = vsel %vm5019, %v5004, %v5008
        %v5025 = vsel %vm5019, %v5006, %v5010
        %v5026 = vsel %vm5019, %v5016, %v5004
        %v5027 = vsel %vm5019, %v5018, %v5006
        %v5028 = vlaneseq
        %v5029 = vshrl.u32 %v5028, 7
        %v5030 = vsub.s32 2, %v5029
        %v5031 = vrot.slane %v4883, %v5030
        %v5032 = vlaneseq
        %v5033 = vshrl.u32 %v5032, 7
        %v5034 = vsub.s32 2, %v5033
        %v5035 = vrot.slane %v4884, %v5034
        %v5036 = vlaneseq
        %v5037 = vshrl.u32 %v5036, 7
        %v5038 = vsub.s32 2, %v5037
        %v5039 = vrot.slane %v4885, %v5038
        %v5040 = vlaneseq
        %v5041 = vshrl.u32 %v5040, 7
        %v5042 = vsub.s32 2, %v5041
        %v5043 = vrot.slane %v4886, %v5042
        %v5044 = vmul.f32 %v5026, %v5031
        %v5045 = vmul.f32 %v5024, %v5035
        %v5046 = vmul.f32 %v5022, %v5039
        %v5047 = vmul.f32 %v5020, %v5043
        %v5048 = vmul.f32 %v5027, %v5031
        %v5049 = vmul.f32 %v5025, %v5035
        %v5050 = vmul.f32 %v5023, %v5039
        %v5051 = vmul.f32 %v5021, %v5043
        %v5052 = vlaneseq
        %v5053 = vshrl.u32 %v5052, 7
        %v5054 = vsub.s32 3, %v5053
        %v5055 = vrot.slane %v4883, %v5054
        %v5056 = vlaneseq
        %v5057 = vshrl.u32 %v5056, 7
        %v5058 = vsub.s32 3, %v5057
        %v5059 = vrot.slane %v4884, %v5058
        %v5060 = vlaneseq
        %v5061 = vshrl.u32 %v5060, 7
        %v5062 = vsub.s32 3, %v5061
        %v5063 = vrot.slane %v4885, %v5062
        %v5064 = vlaneseq
        %v5065 = vshrl.u32 %v5064, 7
        %v5066 = vsub.s32 3, %v5065
        %v5067 = vrot.slane %v4886, %v5066
        %v5068 = vmul.f32 %v4875, %v5055
        %v5069 = vmul.f32 %v4876, %v5059
        %v5070 = vmul.f32 %v4877, %v5063
        %v5071 = vmul.f32 %v4878, %v5067
        %v5072 = vmul.f32 %v4879, %v5055
        %v5073 = vmul.f32 %v4880, %v5059
        %v5074 = vmul.f32 %v4881, %v5063
        %v5075 = vmul.f32 %v4882, %v5067
        %5076 = vrot.lane.b32.xlu0 %v4875, 127
        %v5077 = vpop.permute.xlu0 %5076
        %5078 = vrot.lane.b32.xlu0 %v4879, 127
        %v5079 = vpop.permute.xlu0 %5078
        %5080 = vrot.lane.b32.xlu0 %v4876, 127
        %v5081 = vpop.permute.xlu0 %5080
        %5082 = vrot.lane.b32.xlu0 %v4880, 127
        %v5083 = vpop.permute.xlu0 %5082
        %5084 = vrot.lane.b32.xlu0 %v4877, 127
        %v5085 = vpop.permute.xlu0 %5084
        %5086 = vrot.lane.b32.xlu0 %v4881, 127
        %v5087 = vpop.permute.xlu0 %5086
        %5088 = vrot.lane.b32.xlu0 %v4878, 127
        %v5089 = vpop.permute.xlu0 %5088
        %5090 = vrot.lane.b32.xlu0 %v4882, 127
        %v5091 = vpop.permute.xlu0 %5090
        %vm5092 = vcmp.lt.s32.totalorder %v4920, 127
        %v5093 = vsel %vm5092, %v5085, %v5089
        %v5094 = vsel %vm5092, %v5087, %v5091
        %v5095 = vsel %vm5092, %v5081, %v5085
        %v5096 = vsel %vm5092, %v5083, %v5087
        %v5097 = vsel %vm5092, %v5077, %v5081
        %v5098 = vsel %vm5092, %v5079, %v5083
        %v5099 = vsel %vm5092, %v5089, %v5077
        %v5100 = vsel %vm5092, %v5091, %v5079
        %v5101 = vlaneseq
        %v5102 = vshrl.u32 %v5101, 7
        %v5103 = vsub.s32 4, %v5102
        %v5104 = vrot.slane %v4883, %v5103
        %v5105 = vlaneseq
        %v5106 = vshrl.u32 %v5105, 7
        %v5107 = vsub.s32 4, %v5106
        %v5108 = vrot.slane %v4884, %v5107
        %v5109 = vlaneseq
        %v5110 = vshrl.u32 %v5109, 7
        %v5111 = vsub.s32 4, %v5110
        %v5112 = vrot.slane %v4885, %v5111
        %v5113 = vlaneseq
        %v5114 = vshrl.u32 %v5113, 7
        %v5115 = vsub.s32 4, %v5114
        %v5116 = vrot.slane %v4886, %v5115
        %v5117 = vmul.f32 %v5097, %v5104
        %v5118 = vmul.f32 %v5095, %v5108
        %v5119 = vmul.f32 %v5093, %v5112
        %v5120 = vmul.f32 %v5099, %v5116
        %v5121 = vmul.f32 %v5098, %v5104
        %v5122 = vmul.f32 %v5096, %v5108
        %v5123 = vmul.f32 %v5094, %v5112
        %v5124 = vmul.f32 %v5100, %v5116
        %5125 = vrot.lane.b32.xlu0 %v4875, 126
        %v5126 = vpop.permute.xlu0 %5125
        %5127 = vrot.lane.b32.xlu0 %v4879, 126
        %v5128 = vpop.permute.xlu0 %5127
        %5129 = vrot.lane.b32.xlu0 %v4876, 126
        %v5130 = vpop.permute.xlu0 %5129
        %5131 = vrot.lane.b32.xlu0 %v4880, 126
        %v5132 = vpop.permute.xlu0 %5131
        %5133 = vrot.lane.b32.xlu0 %v4877, 126
        %v5134 = vpop.permute.xlu0 %5133
        %5135 = vrot.lane.b32.xlu0 %v4881, 126
        %v5136 = vpop.permute.xlu0 %5135
        %5137 = vrot.lane.b32.xlu0 %v4878, 126
        %v5138 = vpop.permute.xlu0 %5137
        %5139 = vrot.lane.b32.xlu0 %v4882, 126
        %v5140 = vpop.permute.xlu0 %5139
        %vm5141 = vcmp.lt.s32.totalorder %v4920, 126
        %v5142 = vsel %vm5141, %v5134, %v5138
        %v5143 = vsel %vm5141, %v5136, %v5140
        %v5144 = vsel %vm5141, %v5130, %v5134
        %v5145 = vsel %vm5141, %v5132, %v5136
        %v5146 = vsel %vm5141, %v5126, %v5130
        %v5147 = vsel %vm5141, %v5128, %v5132
        %v5148 = vsel %vm5141, %v5138, %v5126
        %v5149 = vsel %vm5141, %v5140, %v5128
        %v5150 = vlaneseq
        %v5151 = vshrl.u32 %v5150, 7
        %v5152 = vsub.s32 5, %v5151
        %v5153 = vrot.slane %v4883, %v5152
        %v5154 = vlaneseq
        %v5155 = vshrl.u32 %v5154, 7
        %v5156 = vsub.s32 5, %v5155
        %v5157 = vrot.slane %v4884, %v5156
        %v5158 = vlaneseq
        %v5159 = vshrl.u32 %v5158, 7
        %v5160 = vsub.s32 5, %v5159
        %v5161 = vrot.slane %v4885, %v5160
        %v5162 = vlaneseq
        %v5163 = vshrl.u32 %v5162, 7
        %v5164 = vsub.s32 5, %v5163
        %v5165 = vrot.slane %v4886, %v5164
        %v5166 = vmul.f32 %v5146, %v5153
        %v5167 = vmul.f32 %v5144, %v5157
        %v5168 = vmul.f32 %v5142, %v5161
        %v5169 = vmul.f32 %v5148, %v5165
        %v5170 = vmul.f32 %v5147, %v5153
        %v5171 = vmul.f32 %v5145, %v5157
        %v5172 = vmul.f32 %v5143, %v5161
        %v5173 = vmul.f32 %v5149, %v5165
        %5174 = vrot.lane.b32.xlu0 %v4875, 125
        %v5175 = vpop.permute.xlu0 %5174
        %5176 = vrot.lane.b32.xlu0 %v4879, 125
        %v5177 = vpop.permute.xlu0 %5176
        %5178 = vrot.lane.b32.xlu0 %v4876, 125
        %v5179 = vpop.permute.xlu0 %5178
        %5180 = vrot.lane.b32.xlu0 %v4880, 125
        %v5181 = vpop.permute.xlu0 %5180
        %5182 = vrot.lane.b32.xlu0 %v4877, 125
        %v5183 = vpop.permute.xlu0 %5182
        %5184 = vrot.lane.b32.xlu0 %v4881, 125
        %v5185 = vpop.permute.xlu0 %5184
        %5186 = vrot.lane.b32.xlu0 %v4878, 125
        %v5187 = vpop.permute.xlu0 %5186
        %5188 = vrot.lane.b32.xlu0 %v4882, 125
        %v5189 = vpop.permute.xlu0 %5188
        %vm5190 = vcmp.lt.s32.totalorder %v4920, 125
        %v5191 = vsel %vm5190, %v5183, %v5187
        %v5192 = vsel %vm5190, %v5185, %v5189
        %v5193 = vsel %vm5190, %v5179, %v5183
        %v5194 = vsel %vm5190, %v5181, %v5185
        %v5195 = vsel %vm5190, %v5175, %v5179
        %v5196 = vsel %vm5190, %v5177, %v5181
        %v5197 = vsel %vm5190, %v5187, %v5175
        %v5198 = vsel %vm5190, %v5189, %v5177
        %v5199 = vlaneseq
        %v5200 = vshrl.u32 %v5199, 7
        %v5201 = vsub.s32 6, %v5200
        %v5202 = vrot.slane %v4883, %v5201
        %v5203 = vlaneseq
        %v5204 = vshrl.u32 %v5203, 7
        %v5205 = vsub.s32 6, %v5204
        %v5206 = vrot.slane %v4884, %v5205
        %v5207 = vlaneseq
        %v5208 = vshrl.u32 %v5207, 7
        %v5209 = vsub.s32 6, %v5208
        %v5210 = vrot.slane %v4885, %v5209
        %v5211 = vlaneseq
        %v5212 = vshrl.u32 %v5211, 7
        %v5213 = vsub.s32 6, %v5212
        %v5214 = vrot.slane %v4886, %v5213
        %v5215 = vmul.f32 %v5195, %v5202
        %v5216 = vmul.f32 %v5193, %v5206
        %v5217 = vmul.f32 %v5191, %v5210
        %v5218 = vmul.f32 %v5197, %v5214
        %v5219 = vmul.f32 %v5196, %v5202
        %v5220 = vmul.f32 %v5194, %v5206
        %v5221 = vmul.f32 %v5192, %v5210
        %v5222 = vmul.f32 %v5198, %v5214
        %v5223 = vld [vmem:[%s3] sm:$0xff]
        %v5224 = vld [vmem:[%s3 + $0x8] sm:$0xff]
        %v5225 = vld [vmem:[%s3 + $0x10] sm:$0xff]
        %v5226 = vld [vmem:[%s3 + $0x18] sm:$0xff]
        %v5227 = vld [vmem:[%s3 + $0x20] sm:$0xff]
        %v5228 = vld [vmem:[%s3 + $0x28] sm:$0xff]
        %v5229 = vld [vmem:[%s3 + $0x30] sm:$0x1]
        %vm5230 = vcmask 916480
        %v5232 = vsel %vm5230, %v5223, 0
        %v5235 = vsel %vm5230, %v5224, 0
        %v5238 = vsel %vm5230, %v5225, 0
        %v5241 = vsel %vm5230, %v5226, 0
        %v5244 = vsel %vm5230, %v5227, 0
        %v5247 = vsel %vm5230, %v5228, 0
        %v5250 = vsel %vm5230, %v5229, 0
        %5252 = vmatprep.subr.mxu0 %v4947
        %5253 = vmatpush1.msra.mxu0 %v4946
        %5254 = vmatprep.subr.mxu0 %v4951
        %5255 = vmatpush1.msra.mxu0 %v4950
        %5256 = vmatprep.subr.mxu0 %v4996
        %5257 = vmatpush1.msra.mxu0 %v4995
        %5258 = vmatprep.subr.mxu0 %v5000
        %5259 = vmatpush1.msra.mxu0 %v4999
        %5260 = vmatprep.subr.mxu0 %v5045
        %5261 = vmatpush1.msra.mxu0 %v5044
        %5262 = vmatprep.subr.mxu0 %v5049
        %5263 = vmatpush1.msra.mxu0 %v5048
        %5264 = vmatprep.subr.mxu0 %v5069
        %5265 = vmatpush1.msra.mxu0 %v5068
        %5266 = vmatprep.subr.mxu0 %v5073
        %5267 = vmatpush1.msra.mxu0 %v5072
        %5268 = vmatprep.subr.mxu0 %v5118
        %5269 = vmatpush1.msra.mxu0 %v5117
        %5270 = vmatprep.subr.mxu0 %v5122
        %5271 = vmatpush1.msra.mxu0 %v5121
        %5272 = vmatprep.subr.mxu0 %v5167
        %5273 = vmatpush1.msra.mxu0 %v5166
        %5274 = vmatprep.subr.mxu0 %v5171
        %5275 = vmatpush1.msra.mxu0 %v5170
        %5276 = vmatprep.subr.mxu0 %v5216
        %5277 = vmatpush1.msra.mxu0 %v5215
        %5278 = vmatprep.subr.mxu0 %v5220
        %5279 = vmatpush1.msra.mxu0 %v5219
        %5280 = vmatprep.subr.mxu0 0.0
        %5281 = vmatpush1.msra.mxu0 0.0
        %5282 = vmatprep.subr.mxu0 0.0
        %5283 = vmatpush1.msra.mxu0 0.0
        %5284 = vmatprep.subr.mxu0 0.0
        %5285 = vmatpush1.msra.mxu0 0.0
        %5286 = vmatprep.subr.mxu0 0.0
        %5287 = vmatpush1.msra.mxu0 0.0
        %5288 = vmatprep.subr.mxu0 0.0
        %5289 = vmatpush1.msra.mxu0 0.0
        %5290 = vmatprep.subr.mxu0 0.0
        %5291 = vmatpush1.msra.mxu0 0.0
        %5292 = vmatprep.subr.mxu0 0.0
        %5293 = vmatpush1.msra.mxu0 0.0
        %5294 = vmatprep.subr.mxu0 0.0
        %5295 = vmatpush1.msra.mxu0 0.0
        %5296 = vmatprep.subr.mxu0 0.0
        %5297 = vmatpush1.msra.mxu0 0.0
        %5298 = vmatprep.subr.mxu0 0.0
        %5299 = vmatpush1.msra.mxu0 0.0
        %5300 = vmatprep.subr.mxu0 0.0
        %5301 = vmatpush1.msra.mxu0 0.0
        %5302 = vmatprep.subr.mxu0 0.0
        %5303 = vmatpush1.msra.mxu0 0.0
        %5304 = vmatprep.subr.mxu0 0.0
        %5305 = vmatpush1.msra.mxu0 0.0
        %5306 = vmatprep.subr.mxu0 0.0
        %5307 = vmatpush1.msra.mxu0 0.0
        %5308 = vmatprep.subr.mxu0 0.0
        %5309 = vmatpush1.msra.mxu0 0.0
        %5310 = vmatprep.subr.mxu0 0.0
        %5311 = vmatpush1.msra.mxu0 0.0
        %5312 = vmatprep.subr.mxu0 0.0
        %5313 = vmatpush1.msra.mxu0 0.0
        %5314 = vmatprep.subr.mxu0 0.0
        %5315 = vmatpush1.msra.mxu0 0.0
        %5316 = vmatprep.mubr.f32.mxu0 0.0
        %5317 = vmatmul.mubr.f32.gmra.mrb[0].mxu0 %v5232
        %v5318 = vpop.f32.mrb[0].mxu0
        %v5319 = vadd.f32 0.0, %v5318
        %v5320 = vpop.f32.mrb[0].mxu0
        %v5321 = vadd.f32 0.0, %v5320
        %5322 = vmatprep.mubr.f32.mxu0 0.0
        %5323 = vmatmul.mubr.f32.gmra.mrb[0].mxu0 %v5235
        %v5324 = vpop.f32.mrb[0].mxu0
        %v5325 = vadd.f32 0.0, %v5324
        %v5326 = vpop.f32.mrb[0].mxu0
        %v5327 = vadd.f32 0.0, %v5326
        %5328 = vmatprep.mubr.f32.mxu0 0.0
        %5329 = vmatmul.mubr.f32.gmra.mrb[0].mxu0 %v5238
        %v5330 = vpop.f32.mrb[0].mxu0
        %v5331 = vadd.f32 0.0, %v5330
        %v5332 = vpop.f32.mrb[0].mxu0
        %v5333 = vadd.f32 0.0, %v5332
        %5334 = vmatprep.mubr.f32.mxu0 0.0
        %5335 = vmatmul.mubr.f32.gmra.mrb[0].mxu0 %v5241
        %v5336 = vpop.f32.mrb[0].mxu0
        %v5337 = vadd.f32 0.0, %v5336
        %v5338 = vpop.f32.mrb[0].mxu0
        %v5339 = vadd.f32 0.0, %v5338
        %5340 = vmatprep.mubr.f32.mxu0 0.0
        %5341 = vmatmul.mubr.f32.gmra.mrb[0].mxu0 %v5244
        %v5342 = vpop.f32.mrb[0].mxu0
        %v5343 = vadd.f32 0.0, %v5342
        %v5344 = vpop.f32.mrb[0].mxu0
        %v5345 = vadd.f32 0.0, %v5344
        %5346 = vmatprep.mubr.f32.mxu0 0.0
        %5347 = vmatmul.mubr.f32.gmra.mrb[0].mxu0 %v5247
        %v5348 = vpop.f32.mrb[0].mxu0
        %v5349 = vadd.f32 0.0, %v5348
        %v5350 = vpop.f32.mrb[0].mxu0
        %v5351 = vadd.f32 0.0, %v5350
        %5352 = vmatprep.mubr.f32.mxu0 0.0
        %5353 = vmatmul.mubr.f32.gmra.mrb[0].mxu0 %v5250
        %v5354 = vpop.f32.mrb[0].mxu0
        %v5355 = vadd.f32 0.0, %v5354
        %v5356 = vpop.f32.mrb[0].mxu0
        %v5357 = vadd.f32 0.0, %v5356
        %5358 = vdwg.mxu0
        %5359 = vmatprep.subr.mxu0 %v4949
        %5360 = vmatpush1.msra.mxu0 %v4948
        %5361 = vmatprep.subr.mxu0 %v4953
        %5362 = vmatpush1.msra.mxu0 %v4952
        %5363 = vmatprep.subr.mxu0 %v4998
        %5364 = vmatpush1.msra.mxu0 %v4997
        %5365 = vmatprep.subr.mxu0 %v5002
        %5366 = vmatpush1.msra.mxu0 %v5001
        %5367 = vmatprep.subr.mxu0 %v5047
        %5368 = vmatpush1.msra.mxu0 %v5046
        %5369 = vmatprep.subr.mxu0 %v5051
        %5370 = vmatpush1.msra.mxu0 %v5050
        %5371 = vmatprep.subr.mxu0 %v5071
        %5372 = vmatpush1.msra.mxu0 %v5070
        %5373 = vmatprep.subr.mxu0 %v5075
        %5374 = vmatpush1.msra.mxu0 %v5074
        %5375 = vmatprep.subr.mxu0 %v5120
        %5376 = vmatpush1.msra.mxu0 %v5119
        %5377 = vmatprep.subr.mxu0 %v5124
        %5378 = vmatpush1.msra.mxu0 %v5123
        %5379 = vmatprep.subr.mxu0 %v5169
        %5380 = vmatpush1.msra.mxu0 %v5168
        %5381 = vmatprep.subr.mxu0 %v5173
        %5382 = vmatpush1.msra.mxu0 %v5172
        %5383 = vmatprep.subr.mxu0 %v5218
        %5384 = vmatpush1.msra.mxu0 %v5217
        %5385 = vmatprep.subr.mxu0 %v5222
        %5386 = vmatpush1.msra.mxu0 %v5221
        %5387 = vmatprep.subr.mxu0 0.0
        %5388 = vmatpush1.msra.mxu0 0.0
        %5389 = vmatprep.subr.mxu0 0.0
        %5390 = vmatpush1.msra.mxu0 0.0
        %5391 = vmatprep.subr.mxu0 0.0
        %5392 = vmatpush1.msra.mxu0 0.0
        %5393 = vmatprep.subr.mxu0 0.0
        %5394 = vmatpush1.msra.mxu0 0.0
        %5395 = vmatprep.subr.mxu0 0.0
        %5396 = vmatpush1.msra.mxu0 0.0
        %5397 = vmatprep.subr.mxu0 0.0
        %5398 = vmatpush1.msra.mxu0 0.0
        %5399 = vmatprep.subr.mxu0 0.0
        %5400 = vmatpush1.msra.mxu0 0.0
        %5401 = vmatprep.subr.mxu0 0.0
        %5402 = vmatpush1.msra.mxu0 0.0
        %5403 = vmatprep.subr.mxu0 0.0
        %5404 = vmatpush1.msra.mxu0 0.0
        %5405 = vmatprep.subr.mxu0 0.0
        %5406 = vmatpush1.msra.mxu0 0.0
        %5407 = vmatprep.subr.mxu0 0.0
        %5408 = vmatpush1.msra.mxu0 0.0
        %5409 = vmatprep.subr.mxu0 0.0
        %5410 = vmatpush1.msra.mxu0 0.0
        %5411 = vmatprep.subr.mxu0 0.0
        %5412 = vmatpush1.msra.mxu0 0.0
        %5413 = vmatprep.subr.mxu0 0.0
        %5414 = vmatpush1.msra.mxu0 0.0
        %5415 = vmatprep.subr.mxu0 0.0
        %5416 = vmatpush1.msra.mxu0 0.0
        %5417 = vmatprep.subr.mxu0 0.0
        %5418 = vmatpush1.msra.mxu0 0.0
        %5419 = vmatprep.subr.mxu0 0.0
        %5420 = vmatpush1.msra.mxu0 0.0
        %5421 = vmatprep.subr.mxu0 0.0
        %5422 = vmatpush1.msra.mxu0 0.0
        %5423 = vmatprep.mubr.f32.mxu0 0.0
        %5424 = vmatmul.mubr.f32.gmra.mrb[0].mxu0 %v5232
        %v5425 = vpop.f32.mrb[0].mxu0
        %v5426 = vadd.f32 0.0, %v5425
        %v5427 = vpop.f32.mrb[0].mxu0
        %v5428 = vadd.f32 0.0, %v5427
        %5429 = vmatprep.mubr.f32.mxu0 0.0
        %5430 = vmatmul.mubr.f32.gmra.mrb[0].mxu0 %v5235
        %v5431 = vpop.f32.mrb[0].mxu0
        %v5432 = vadd.f32 0.0, %v5431
        %v5433 = vpop.f32.mrb[0].mxu0
        %v5434 = vadd.f32 0.0, %v5433
        %5435 = vmatprep.mubr.f32.mxu0 0.0
        %5436 = vmatmul.mubr.f32.gmra.mrb[0].mxu0 %v5238
        %v5437 = vpop.f32.mrb[0].mxu0
        %v5438 = vadd.f32 0.0, %v5437
        %v5439 = vpop.f32.mrb[0].mxu0
        %v5440 = vadd.f32 0.0, %v5439
        %5441 = vmatprep.mubr.f32.mxu0 0.0
        %5442 = vmatmul.mubr.f32.gmra.mrb[0].mxu0 %v5241
        %v5443 = vpop.f32.mrb[0].mxu0
        %v5444 = vadd.f32 0.0, %v5443
        %v5445 = vpop.f32.mrb[0].mxu0
        %v5446 = vadd.f32 0.0, %v5445
        %5447 = vmatprep.mubr.f32.mxu0 0.0
        %5448 = vmatmul.mubr.f32.gmra.mrb[0].mxu0 %v5244
        %v5449 = vpop.f32.mrb[0].mxu0
        %v5450 = vadd.f32 0.0, %v5449
        %v5451 = vpop.f32.mrb[0].mxu0
        %v5452 = vadd.f32 0.0, %v5451
        %5453 = vmatprep.mubr.f32.mxu0 0.0
        %5454 = vmatmul.mubr.f32.gmra.mrb[0].mxu0 %v5247
        %v5455 = vpop.f32.mrb[0].mxu0
        %v5456 = vadd.f32 0.0, %v5455
        %v5457 = vpop.f32.mrb[0].mxu0
        %v5458 = vadd.f32 0.0, %v5457
        %5459 = vmatprep.mubr.f32.mxu0 0.0
        %5460 = vmatmul.mubr.f32.gmra.mrb[0].mxu0 %v5250
        %v5461 = vpop.f32.mrb[0].mxu0
        %v5462 = vadd.f32 0.0, %v5461
        %v5463 = vpop.f32.mrb[0].mxu0
        %v5464 = vadd.f32 0.0, %v5463
        %5465 = vdwg.mxu0
        %5466 = vrot.lane.b32.xlu0 %v5319, 24
        %v5467 = vpop.permute.xlu0 %5466
        %5468 = vrot.lane.b32.xlu0 %v5321, 24
        %v5469 = vpop.permute.xlu0 %5468
        %5470 = vrot.lane.b32.xlu0 %v5426, 24
        %v5471 = vpop.permute.xlu0 %5470
        %5472 = vrot.lane.b32.xlu0 %v5428, 24
        %v5473 = vpop.permute.xlu0 %5472
        %vm5474 = vcmp.lt.s32.totalorder %v4920, 24
        %v5475 = vsel %vm5474, %v5471, %v5473
        %v5476 = vsel %vm5474, %v5469, %v5471
        %v5477 = vsel %vm5474, %v5467, %v5469
        %v5478 = vsel %vm5474, %v5473, %v5467
        %v5479 = vlaneseq
        %v5480 = vshrl.u32 %v5479, 7
        %v5481 = vsub.s32 7, %v5480
        %v5482 = vrot.slane %v4887, %v5481
        %v5483 = vlaneseq
        %v5484 = vshrl.u32 %v5483, 7
        %v5485 = vsub.s32 7, %v5484
        %v5486 = vrot.slane %v4888, %v5485
        %v5487 = vlaneseq
        %v5488 = vshrl.u32 %v5487, 7
        %v5489 = vsub.s32 7, %v5488
        %v5490 = vrot.slane %v4889, %v5489
        %v5491 = vlaneseq
        %v5492 = vshrl.u32 %v5491, 7
        %v5493 = vsub.s32 7, %v5492
        %v5494 = vrot.slane %v4890, %v5493
        %v5495 = vmul.f32 %v5478, %v5482
        %v5496 = vmul.f32 %v5477, %v5486
        %v5497 = vmul.f32 %v5476, %v5490
        %v5498 = vmul.f32 %v5475, %v5494
        %v5499 = vadd.f32 %v5495, 0.0
        %v5500 = vadd.f32 %v5496, 0.0
        %v5501 = vadd.f32 %v5497, 0.0
        %v5502 = vadd.f32 %v5498, 0.0
        %v5511 = vrot.slane %v5319, 7
        %v5512 = vrot.slane %v5325, 7
        %v5513 = vsel %vm657, %v5511, %v5512
        %v5514 = vrot.slane %v5321, 7
        %v5515 = vrot.slane %v5327, 7
        %v5516 = vsel %vm657, %v5514, %v5515
        %v5517 = vrot.slane %v5426, 7
        %v5518 = vrot.slane %v5432, 7
        %v5519 = vsel %vm657, %v5517, %v5518
        %v5520 = vrot.slane %v5428, 7
        %v5521 = vrot.slane %v5434, 7
        %v5522 = vsel %vm657, %v5520, %v5521
        %5527 = vrot.lane.b32.xlu0 %v5513, 16
        %v5528 = vpop.permute.xlu0 %5527
        %5529 = vrot.lane.b32.xlu0 %v5516, 16
        %v5530 = vpop.permute.xlu0 %5529
        %5531 = vrot.lane.b32.xlu0 %v5519, 16
        %v5532 = vpop.permute.xlu0 %5531
        %5533 = vrot.lane.b32.xlu0 %v5522, 16
        %v5534 = vpop.permute.xlu0 %5533
        %vm5535 = vcmp.lt.s32.totalorder %v4920, 16
        %v5536 = vsel %vm5535, %v5532, %v5534
        %v5537 = vsel %vm5535, %v5530, %v5532
        %v5538 = vsel %vm5535, %v5528, %v5530
        %v5539 = vsel %vm5535, %v5534, %v5528
        %v5540 = vlaneseq
        %v5541 = vshrl.u32 %v5540, 7
        %v5542 = vsub.s32 0, %v5541
        %v5543 = vrot.slane %v4891, %v5542
        %v5544 = vlaneseq
        %v5545 = vshrl.u32 %v5544, 7
        %v5546 = vsub.s32 0, %v5545
        %v5547 = vrot.slane %v4892, %v5546
        %v5548 = vlaneseq
        %v5549 = vshrl.u32 %v5548, 7
        %v5550 = vsub.s32 0, %v5549
        %v5551 = vrot.slane %v4893, %v5550
        %v5552 = vlaneseq
        %v5553 = vshrl.u32 %v5552, 7
        %v5554 = vsub.s32 0, %v5553
        %v5555 = vrot.slane %v4894, %v5554
        %v5556 = vmul.f32 %v5539, %v5543
        %v5557 = vmul.f32 %v5538, %v5547
        %v5558 = vmul.f32 %v5537, %v5551
        %v5559 = vmul.f32 %v5536, %v5555
        %v5560 = vadd.f32 %v5499, %v5556
        %v5561 = vadd.f32 %v5500, %v5557
        %v5562 = vadd.f32 %v5501, %v5558
        %v5563 = vadd.f32 %v5502, %v5559
        %v5568 = vrot.slane %v5325, 6
        %v5569 = vrot.slane %v5331, 6
        %v5570 = vsel %vm1097, %v5568, %v5569
        %v5571 = vrot.slane %v5327, 6
        %v5572 = vrot.slane %v5333, 6
        %v5573 = vsel %vm1097, %v5571, %v5572
        %v5574 = vrot.slane %v5432, 6
        %v5575 = vrot.slane %v5438, 6
        %v5576 = vsel %vm1097, %v5574, %v5575
        %v5577 = vrot.slane %v5434, 6
        %v5578 = vrot.slane %v5440, 6
        %v5579 = vsel %vm1097, %v5577, %v5578
        %5584 = vrot.lane.b32.xlu0 %v5570, 8
        %v5585 = vpop.permute.xlu0 %5584
        %5586 = vrot.lane.b32.xlu0 %v5573, 8
        %v5587 = vpop.permute.xlu0 %5586
        %5588 = vrot.lane.b32.xlu0 %v5576, 8
        %v5589 = vpop.permute.xlu0 %5588
        %5590 = vrot.lane.b32.xlu0 %v5579, 8
        %v5591 = vpop.permute.xlu0 %5590
        %vm5592 = vcmp.lt.s32.totalorder %v4920, 8
        %v5593 = vsel %vm5592, %v5589, %v5591
        %v5594 = vsel %vm5592, %v5587, %v5589
        %v5595 = vsel %vm5592, %v5585, %v5587
        %v5596 = vsel %vm5592, %v5591, %v5585
        %v5597 = vlaneseq
        %v5598 = vshrl.u32 %v5597, 7
        %v5599 = vsub.s32 1, %v5598
        %v5600 = vrot.slane %v4891, %v5599
        %v5601 = vlaneseq
        %v5602 = vshrl.u32 %v5601, 7
        %v5603 = vsub.s32 1, %v5602
        %v5604 = vrot.slane %v4892, %v5603
        %v5605 = vlaneseq
        %v5606 = vshrl.u32 %v5605, 7
        %v5607 = vsub.s32 1, %v5606
        %v5608 = vrot.slane %v4893, %v5607
        %v5609 = vlaneseq
        %v5610 = vshrl.u32 %v5609, 7
        %v5611 = vsub.s32 1, %v5610
        %v5612 = vrot.slane %v4894, %v5611
        %v5613 = vmul.f32 %v5596, %v5600
        %v5614 = vmul.f32 %v5595, %v5604
        %v5615 = vmul.f32 %v5594, %v5608
        %v5616 = vmul.f32 %v5593, %v5612
        %v5617 = vadd.f32 %v5560, %v5613
        %v5618 = vadd.f32 %v5561, %v5614
        %v5619 = vadd.f32 %v5562, %v5615
        %v5620 = vadd.f32 %v5563, %v5616
        %v5621 = vlaneseq
        %v5622 = vshrl.u32 %v5621, 7
        %v5623 = vsub.s32 2, %v5622
        %v5624 = vrot.slane %v4891, %v5623
        %v5625 = vlaneseq
        %v5626 = vshrl.u32 %v5625, 7
        %v5627 = vsub.s32 2, %v5626
        %v5628 = vrot.slane %v4892, %v5627
        %v5629 = vlaneseq
        %v5630 = vshrl.u32 %v5629, 7
        %v5631 = vsub.s32 2, %v5630
        %v5632 = vrot.slane %v4893, %v5631
        %v5633 = vlaneseq
        %v5634 = vshrl.u32 %v5633, 7
        %v5635 = vsub.s32 2, %v5634
        %v5636 = vrot.slane %v4894, %v5635
        %v5637 = vmul.f32 %v5331, %v5624
        %v5638 = vmul.f32 %v5333, %v5628
        %v5639 = vmul.f32 %v5438, %v5632
        %v5640 = vmul.f32 %v5440, %v5636
        %v5641 = vmul.f32 %v5337, %v5624
        %v5642 = vmul.f32 %v5339, %v5628
        %v5643 = vmul.f32 %v5444, %v5632
        %v5644 = vmul.f32 %v5446, %v5636
        %vm5653 = vcmask 1042432
        %v5654 = vrot.slane %v5637, 5
        %v5655 = vrot.slane %v5641, 5
        %v5656 = vsel %vm5653, %v5654, %v5655
        %v5657 = vrot.slane %v5638, 5
        %v5658 = vrot.slane %v5642, 5
        %v5659 = vsel %vm5653, %v5657, %v5658
        %v5660 = vrot.slane %v5639, 5
        %v5661 = vrot.slane %v5643, 5
        %v5662 = vsel %vm5653, %v5660, %v5661
        %v5663 = vrot.slane %v5640, 5
        %v5664 = vrot.slane %v5644, 5
        %v5665 = vsel %vm5653, %v5663, %v5664
        %v5670 = vadd.f32 %v5617, %v5656
        %v5671 = vadd.f32 %v5618, %v5659
        %v5672 = vadd.f32 %v5619, %v5662
        %v5673 = vadd.f32 %v5620, %v5665
        %v5682 = vrot.slane %v5337, 4
        %v5683 = vrot.slane %v5343, 4
        %v5684 = vsel %vm967, %v5682, %v5683
        %v5685 = vrot.slane %v5339, 4
        %v5686 = vrot.slane %v5345, 4
        %v5687 = vsel %vm967, %v5685, %v5686
        %v5688 = vrot.slane %v5444, 4
        %v5689 = vrot.slane %v5450, 4
        %v5690 = vsel %vm967, %v5688, %v5689
        %v5691 = vrot.slane %v5446, 4
        %v5692 = vrot.slane %v5452, 4
        %v5693 = vsel %vm967, %v5691, %v5692
        %5698 = vrot.lane.b32.xlu0 %v5684, 120
        %v5699 = vpop.permute.xlu0 %5698
        %5700 = vrot.lane.b32.xlu0 %v5687, 120
        %v5701 = vpop.permute.xlu0 %5700
        %5702 = vrot.lane.b32.xlu0 %v5690, 120
        %v5703 = vpop.permute.xlu0 %5702
        %5704 = vrot.lane.b32.xlu0 %v5693, 120
        %v5705 = vpop.permute.xlu0 %5704
        %vm5706 = vcmp.lt.s32.totalorder %v4920, 120
        %v5707 = vsel %vm5706, %v5703, %v5705
        %v5708 = vsel %vm5706, %v5701, %v5703
        %v5709 = vsel %vm5706, %v5699, %v5701
        %v5710 = vsel %vm5706, %v5705, %v5699
        %v5711 = vlaneseq
        %v5712 = vshrl.u32 %v5711, 7
        %v5713 = vsub.s32 3, %v5712
        %v5714 = vrot.slane %v4891, %v5713
        %v5715 = vlaneseq
        %v5716 = vshrl.u32 %v5715, 7
        %v5717 = vsub.s32 3, %v5716
        %v5718 = vrot.slane %v4892, %v5717
        %v5719 = vlaneseq
        %v5720 = vshrl.u32 %v5719, 7
        %v5721 = vsub.s32 3, %v5720
        %v5722 = vrot.slane %v4893, %v5721
        %v5723 = vlaneseq
        %v5724 = vshrl.u32 %v5723, 7
        %v5725 = vsub.s32 3, %v5724
        %v5726 = vrot.slane %v4894, %v5725
        %v5727 = vmul.f32 %v5709, %v5714
        %v5728 = vmul.f32 %v5708, %v5718
        %v5729 = vmul.f32 %v5707, %v5722
        %v5730 = vmul.f32 %v5710, %v5726
        %v5731 = vadd.f32 %v5670, %v5727
        %v5732 = vadd.f32 %v5671, %v5728
        %v5733 = vadd.f32 %v5672, %v5729
        %v5734 = vadd.f32 %v5673, %v5730
        %vm5739 = vcmask 1044480
        %v5740 = vrot.slane %v5343, 3
        %v5741 = vrot.slane %v5349, 3
        %v5742 = vsel %vm5739, %v5740, %v5741
        %v5743 = vrot.slane %v5345, 3
        %v5744 = vrot.slane %v5351, 3
        %v5745 = vsel %vm5739, %v5743, %v5744
        %v5746 = vrot.slane %v5450, 3
        %v5747 = vrot.slane %v5456, 3
        %v5748 = vsel %vm5739, %v5746, %v5747
        %v5749 = vrot.slane %v5452, 3
        %v5750 = vrot.slane %v5458, 3
        %v5751 = vsel %vm5739, %v5749, %v5750
        %5756 = vrot.lane.b32.xlu0 %v5742, 112
        %v5757 = vpop.permute.xlu0 %5756
        %5758 = vrot.lane.b32.xlu0 %v5745, 112
        %v5759 = vpop.permute.xlu0 %5758
        %5760 = vrot.lane.b32.xlu0 %v5748, 112
        %v5761 = vpop.permute.xlu0 %5760
        %5762 = vrot.lane.b32.xlu0 %v5751, 112
        %v5763 = vpop.permute.xlu0 %5762
        %vm5764 = vcmp.lt.s32.totalorder %v4920, 112
        %v5765 = vsel %vm5764, %v5761, %v5763
        %v5766 = vsel %vm5764, %v5759, %v5761
        %v5767 = vsel %vm5764, %v5757, %v5759
        %v5768 = vsel %vm5764, %v5763, %v5757
        %v5769 = vlaneseq
        %v5770 = vshrl.u32 %v5769, 7
        %v5771 = vsub.s32 4, %v5770
        %v5772 = vrot.slane %v4891, %v5771
        %v5773 = vlaneseq
        %v5774 = vshrl.u32 %v5773, 7
        %v5775 = vsub.s32 4, %v5774
        %v5776 = vrot.slane %v4892, %v5775
        %v5777 = vlaneseq
        %v5778 = vshrl.u32 %v5777, 7
        %v5779 = vsub.s32 4, %v5778
        %v5780 = vrot.slane %v4893, %v5779
        %v5781 = vlaneseq
        %v5782 = vshrl.u32 %v5781, 7
        %v5783 = vsub.s32 4, %v5782
        %v5784 = vrot.slane %v4894, %v5783
        %v5785 = vmul.f32 %v5767, %v5772
        %v5786 = vmul.f32 %v5766, %v5776
        %v5787 = vmul.f32 %v5765, %v5780
        %v5788 = vmul.f32 %v5768, %v5784
        %v5789 = vadd.f32 %v5731, %v5785
        %v5790 = vadd.f32 %v5732, %v5786
        %v5791 = vadd.f32 %v5733, %v5787
        %v5792 = vadd.f32 %v5734, %v5788
        %vm5797 = vcmask 1045504
        %v5798 = vrot.slane %v5349, 2
        %v5799 = vrot.slane %v5355, 2
        %v5800 = vsel %vm5797, %v5798, %v5799
        %v5801 = vrot.slane %v5351, 2
        %v5802 = vrot.slane %v5357, 2
        %v5803 = vsel %vm5797, %v5801, %v5802
        %v5804 = vrot.slane %v5456, 2
        %v5805 = vrot.slane %v5462, 2
        %v5806 = vsel %vm5797, %v5804, %v5805
        %v5807 = vrot.slane %v5458, 2
        %v5808 = vrot.slane %v5464, 2
        %v5809 = vsel %vm5797, %v5807, %v5808
        %5814 = vrot.lane.b32.xlu0 %v5800, 104
        %v5815 = vpop.permute.xlu0 %5814
        %5816 = vrot.lane.b32.xlu0 %v5803, 104
        %v5817 = vpop.permute.xlu0 %5816
        %5818 = vrot.lane.b32.xlu0 %v5806, 104
        %v5819 = vpop.permute.xlu0 %5818
        %5820 = vrot.lane.b32.xlu0 %v5809, 104
        %v5821 = vpop.permute.xlu0 %5820
        %vm5822 = vcmp.lt.s32.totalorder %v4920, 104
        %v5823 = vsel %vm5822, %v5819, %v5821
        %v5824 = vsel %vm5822, %v5817, %v5819
        %v5825 = vsel %vm5822, %v5815, %v5817
        %v5826 = vsel %vm5822, %v5821, %v5815
        %v5827 = vlaneseq
        %v5828 = vshrl.u32 %v5827, 7
        %v5829 = vsub.s32 5, %v5828
        %v5830 = vrot.slane %v4891, %v5829
        %v5831 = vlaneseq
        %v5832 = vshrl.u32 %v5831, 7
        %v5833 = vsub.s32 5, %v5832
        %v5834 = vrot.slane %v4892, %v5833
        %v5835 = vlaneseq
        %v5836 = vshrl.u32 %v5835, 7
        %v5837 = vsub.s32 5, %v5836
        %v5838 = vrot.slane %v4893, %v5837
        %v5839 = vlaneseq
        %v5840 = vshrl.u32 %v5839, 7
        %v5841 = vsub.s32 5, %v5840
        %v5842 = vrot.slane %v4894, %v5841
        %v5843 = vmul.f32 %v5825, %v5830
        %v5844 = vmul.f32 %v5824, %v5834
        %v5845 = vmul.f32 %v5823, %v5838
        %v5846 = vmul.f32 %v5826, %v5842
        %v5847 = vadd.f32 %v5789, %v5843
        %v5848 = vadd.f32 %v5790, %v5844
        %v5849 = vadd.f32 %v5791, %v5845
        %v5850 = vadd.f32 %v5792, %v5846
        %5851 = vrot.lane.b32.xlu0 %v5847, 64
        %v5852 = vpop.permute.xlu0 %5851
        %5853 = vrot.lane.b32.xlu0 %v5848, 64
        %v5854 = vpop.permute.xlu0 %5853
        %5855 = vrot.lane.b32.xlu0 %v5849, 64
        %v5856 = vpop.permute.xlu0 %5855
        %5857 = vrot.lane.b32.xlu0 %v5850, 64
        %v5858 = vpop.permute.xlu0 %5857
        %vm5859 = vcmp.lt.s32.totalorder %v4920, 64
        %v5860 = vsel %vm5859, %v5856, %v5858
        %v5861 = vsel %vm5859, %v5854, %v5856
        %v5862 = vsel %vm5859, %v5852, %v5854
        %v5863 = vsel %vm5859, %v5858, %v5852
        %v5868 = vrot.slane %v4895, 6
        %v5869 = vrot.slane %v4896, 6
        %v5870 = vrot.slane %v4897, 6
        %v5871 = vrot.slane %v4898, 6
        %v5876 = vmul.f32 %v5860, %v5868
        %v5877 = vmul.f32 %v5863, %v5869
        %v5878 = vmul.f32 %v5862, %v5870
        %v5879 = vmul.f32 %v5861, %v5871
        %v5880 = vadd.f32 %v5876, 0.0
        %v5881 = vadd.f32 %v5877, 0.0
        %v5882 = vadd.f32 %v5878, 0.0
        %v5883 = vadd.f32 %v5879, 0.0
        %v5888 = vrot.slane %v5847, 1
        %v5889 = vrot.slane %v5848, 1
        %v5890 = vrot.slane %v5849, 1
        %v5891 = vrot.slane %v5850, 1
        %v5896 = vrot.slane %v4895, 7
        %v5897 = vrot.slane %v4896, 7
        %v5898 = vrot.slane %v4897, 7
        %v5899 = vrot.slane %v4898, 7
        %v5904 = vmul.f32 %v5891, %v5896
        %v5905 = vmul.f32 %v5888, %v5897
        %v5906 = vmul.f32 %v5889, %v5898
        %v5907 = vmul.f32 %v5890, %v5899
        %v5908 = vadd.f32 %v5880, %v5904
        %v5909 = vadd.f32 %v5881, %v5905
        %v5910 = vadd.f32 %v5882, %v5906
        %v5911 = vadd.f32 %v5883, %v5907
        %v5912 = vrot.slane %v5847, 2
        %v5913 = vrot.slane %v5848, 2
        %v5914 = vrot.slane %v5849, 2
        %v5915 = vrot.slane %v5850, 2
        %5920 = vrot.lane.b32.xlu0 %v5912, 64
        %v5921 = vpop.permute.xlu0 %5920
        %5922 = vrot.lane.b32.xlu0 %v5913, 64
        %v5923 = vpop.permute.xlu0 %5922
        %5924 = vrot.lane.b32.xlu0 %v5914, 64
        %v5925 = vpop.permute.xlu0 %5924
        %5926 = vrot.lane.b32.xlu0 %v5915, 64
        %v5927 = vpop.permute.xlu0 %5926
        %v5928 = vsel %vm5859, %v5925, %v5927
        %v5929 = vsel %vm5859, %v5923, %v5925
        %v5930 = vsel %vm5859, %v5921, %v5923
        %v5931 = vsel %vm5859, %v5927, %v5921
        %v5932 = vmul.f32 %v5931, %v4899
        %v5933 = vmul.f32 %v5930, %v4900
        %v5934 = vmul.f32 %v5929, %v4901
        %v5935 = vmul.f32 %v5928, %v4902
        %v5936 = vadd.f32 %v5908, %v5932
        %v5937 = vadd.f32 %v5909, %v5933
        %v5938 = vadd.f32 %v5910, %v5934
        %v5939 = vadd.f32 %v5911, %v5935
        %v5944 = vrot.slane %v4899, 6
        %v5945 = vrot.slane %v4900, 6
        %v5946 = vrot.slane %v4901, 6
        %v5947 = vrot.slane %v4902, 6
        %v5952 = vmul.f32 %v5847, %v5944
        %v5953 = vmul.f32 %v5848, %v5945
        %v5954 = vmul.f32 %v5849, %v5946
        %v5955 = vmul.f32 %v5850, %v5947
        %v5960 = vrot.slane %v5952, 3
        %v5961 = vrot.slane %v5953, 3
        %v5962 = vrot.slane %v5954, 3
        %v5963 = vrot.slane %v5955, 3
        %v5968 = vadd.f32 %v5936, %v5960
        %v5969 = vadd.f32 %v5937, %v5961
        %v5970 = vadd.f32 %v5938, %v5962
        %v5971 = vadd.f32 %v5939, %v5963
        %v5972 = vrot.slane %v5847, 4
        %v5973 = vrot.slane %v5848, 4
        %v5974 = vrot.slane %v5849, 4
        %v5975 = vrot.slane %v5850, 4
        %5980 = vrot.lane.b32.xlu0 %v5972, 64
        %v5981 = vpop.permute.xlu0 %5980
        %5982 = vrot.lane.b32.xlu0 %v5973, 64
        %v5983 = vpop.permute.xlu0 %5982
        %5984 = vrot.lane.b32.xlu0 %v5974, 64
        %v5985 = vpop.permute.xlu0 %5984
        %5986 = vrot.lane.b32.xlu0 %v5975, 64
        %v5987 = vpop.permute.xlu0 %5986
        %v5988 = vsel %vm5859, %v5985, %v5987
        %v5989 = vsel %vm5859, %v5983, %v5985
        %v5990 = vsel %vm5859, %v5981, %v5983
        %v5991 = vsel %vm5859, %v5987, %v5981
        %v5992 = vrot.slane %v4899, 2
        %v5993 = vrot.slane %v4900, 2
        %v5994 = vrot.slane %v4901, 2
        %v5995 = vrot.slane %v4902, 2
        %v6000 = vmul.f32 %v5990, %v5992
        %v6001 = vmul.f32 %v5989, %v5993
        %v6002 = vmul.f32 %v5988, %v5994
        %v6003 = vmul.f32 %v5991, %v5995
        %v6004 = vadd.f32 %v5968, %v6000
        %v6005 = vadd.f32 %v5969, %v6001
        %v6006 = vadd.f32 %v5970, %v6002
        %v6007 = vadd.f32 %v5971, %v6003
        %v6008 = vrot.slane %v5847, 5
        %v6009 = vrot.slane %v5848, 5
        %v6010 = vrot.slane %v5849, 5
        %v6011 = vrot.slane %v5850, 5
        %v6016 = vrot.slane %v4899, 3
        %v6017 = vrot.slane %v4900, 3
        %v6018 = vrot.slane %v4901, 3
        %v6019 = vrot.slane %v4902, 3
        %v6024 = vmul.f32 %v6009, %v6016
        %v6025 = vmul.f32 %v6010, %v6017
        %v6026 = vmul.f32 %v6011, %v6018
        %v6027 = vmul.f32 %v6008, %v6019
        %v6028 = vadd.f32 %v6004, %v6024
        %v6029 = vadd.f32 %v6005, %v6025
        %v6030 = vadd.f32 %v6006, %v6026
        %v6031 = vadd.f32 %v6007, %v6027
        %v6032 = vrot.slane %v5847, 6
        %v6033 = vrot.slane %v5848, 6
        %v6034 = vrot.slane %v5849, 6
        %v6035 = vrot.slane %v5850, 6
        %6040 = vrot.lane.b32.xlu0 %v6032, 64
        %v6041 = vpop.permute.xlu0 %6040
        %6042 = vrot.lane.b32.xlu0 %v6033, 64
        %v6043 = vpop.permute.xlu0 %6042
        %6044 = vrot.lane.b32.xlu0 %v6034, 64
        %v6045 = vpop.permute.xlu0 %6044
        %6046 = vrot.lane.b32.xlu0 %v6035, 64
        %v6047 = vpop.permute.xlu0 %6046
        %v6048 = vsel %vm5859, %v6045, %v6047
        %v6049 = vsel %vm5859, %v6043, %v6045
        %v6050 = vsel %vm5859, %v6041, %v6043
        %v6051 = vsel %vm5859, %v6047, %v6041
        %v6052 = vrot.slane %v4899, 4
        %v6053 = vrot.slane %v4900, 4
        %v6054 = vrot.slane %v4901, 4
        %v6055 = vrot.slane %v4902, 4
        %v6060 = vmul.f32 %v6049, %v6052
        %v6061 = vmul.f32 %v6048, %v6053
        %v6062 = vmul.f32 %v6051, %v6054
        %v6063 = vmul.f32 %v6050, %v6055
        %v6064 = vadd.f32 %v6028, %v6060
        %v6065 = vadd.f32 %v6029, %v6061
        %v6066 = vadd.f32 %v6030, %v6062
        %v6067 = vadd.f32 %v6031, %v6063
        %v6068 = vstv %s279
        %v6069 = vadd.f32 %v6064, %v6068
        %v6070 = vadd.f32 %v6065, %v6068
        %v6071 = vadd.f32 %v6066, %v6068
        %v6072 = vadd.f32 %v6067, %v6068
        %v6077 = vcombine.low %v6069, %v6070
        %v6078 = vcombine.low %v6071, %v6072
        %v6080 = vunpack.c.l.s4 1966171168
        %v6081 = vunpack.c.0.s8 %v6080
        %v6082 = vlaneseq
        %v6083 = vshrl.u32 %v6082, 7
        %v6084 = vsub.s32 %v6081, %v6083
        %v6085 = vrot.slane %v6077, %v6084
        %v6087 = vunpack.c.l.s4 1966171168
        %v6088 = vunpack.c.0.s8 %v6087
        %v6089 = vlaneseq
        %v6090 = vshrl.u32 %v6089, 7
        %v6091 = vsub.s32 %v6088, %v6090
        %v6092 = vrot.slane %v6078, %v6091
        %v6093 = vcombine.low %v6085, %v6092
        %v6095 = vunpack.c.l.s4 1966171168
        %v6096 = vunpack.c.0.s8 %v6095
        %v6097 = vlaneseq
        %v6098 = vshrl.u32 %v6097, 7
        %v6099 = vsub.s32 %v6096, %v6098
        %v6100 = vrot.slane %v6093, %v6099
        %v6102 = vlaneseq
        %vm6103 = vcmp.ge.s32.totalorder %v6102, 0
        %vm6104 = vcmp.lt.s32.totalorder %v6102, 512
        %vm6105 = vmand %vm6103, %vm6104
        %6106 = vst.msk [vmem:[%s276] sm:$0xf] %vm6105, %v6100
        %p6107 = scmp.lt.s32.totalorder %s19, 1
        %s6108 = scalar_select %p6107, %s19, 1
        %s6109 = smul.addr %s6108, 8
        %s6110 = smul.addr %s6109, 8
        %s6111 = scalar_lea.vmem %s5, %s6110
        %p6112 = scmp.lt.s32.totalorder %s19, 1
        %s6113 = scalar_select %p6112, %s19, 1
        %s6114 = smul.addr %s6113, 4
        %s6115 = scalar_lea.vmem %s6, %s6114
        // Predicated region
        $region45: #{identify_forward.1} parent=39 // pred_check
          %p6116 = pneg %p147
        $region46: #{identify_forward.1} parent=39 // pred_check_branch
          %6118 = sbr.rel (%p6116) target = $region48
        $region47: #{identify_forward.1} parent=39 // pred_region
          _
        $region48: #{identify_forward.1} parent=39 // pred_fallthru
          _
        // Predicated region
        $region49: #{identify_forward.1} parent=39 // pred_check
          %p6119 = pneg %p173
        $region50: #{identify_forward.1} parent=39 // pred_check_branch
          %6121 = sbr.rel (%p6119) target = $region52
        $region51: #{identify_forward.1} parent=39 // pred_region
          _
        $region52: #{identify_forward.1} parent=39 // pred_fallthru
          _
      $region40: #{identify_forward.1} parent=5 // pred_fallthru
        _
      %p6122 = scmp.le.s32.totalorder 2, %s14
      // Predicated region
      $region53: #{identify_forward.1} parent=5 // pred_check
        %p6123 = pneg %p6122
      $region54: #{identify_forward.1} parent=5 // pred_check_branch
        %6125 = sbr.rel (%p6123) target = $region56
      $region55: #{identify_forward.1} parent=5 // pred_region
        %s6126 = ssub.s32 %s14, 2
        // Predicated region
        $region57: #{identify_forward.1} parent=55 // pred_check
          %p6127 = pneg %p153
        $region58: #{identify_forward.1} parent=55 // pred_check_branch
          %6129 = sbr.rel (%p6127) target = $region60
        $region59: #{identify_forward.1} parent=55 // pred_region
          %p6130 = scmp.lt.s32.totalorder %s20, 1
          %s6131 = scalar_select %p6130, %s20, 1
          %s6132 = smul.addr %s6131, 8
          %s6133 = smul.addr %s6132, 8
          %s6134 = scalar_lea.vmem %s5, %s6133
        $region60: #{identify_forward.1} parent=55 // pred_fallthru
          _
        // Predicated region
        $region61: #{identify_forward.1} parent=55 // pred_check
          %p6135 = pneg %p179
        $region62: #{identify_forward.1} parent=55 // pred_check_branch
          %6137 = sbr.rel (%p6135) target = $region64
        $region63: #{identify_forward.1} parent=55 // pred_region
          %p6138 = scmp.lt.s32.totalorder %s20, 1
          %s6139 = scalar_select %p6138, %s20, 1
          %s6140 = smul.addr %s6139, 4
          %s6141 = scalar_lea.vmem %s6, %s6140
        $region64: #{identify_forward.1} parent=55 // pred_fallthru
          _
      $region56: #{identify_forward.1} parent=5 // pred_fallthru
        _
    $region6: #{identify_forward.1} parent=1 // loop_footer
      %s18 = sadd.s32 1, %s14
    $region7: #{identify_forward.1} parent=1 // loop_footer_branch
      %13 = sbr.rel target = $region3
    $region8: #{identify_forward.1} parent=1 // loop_exit
      _
    %6142 = vsyncpa [#allocation3], 1
    %s6143 = scalar_lea.sflag [#allocation3], 1
    %6144 = vsyncpa %s6143, 1

</llo_original>
